<compile_context>
chip_gen: v7x
topology: tpu7x:2x2x1
jax: 0.10.0
libtpu: 0.0.40
codegen_flags: <defaults>
</compile_context>

<pallas_src>
import numpy as np
import jax
import jax.numpy as jnp
from jax import lax
from jax.experimental import pallas as pl
from jax.experimental.pallas import tpu as pltpu

# ----------------------------- model config (small, LLaMA-like) ------------
B, S = 2, 16          # batch, sequence
H = 128               # hidden size
NH, DH = 4, 32        # heads, head_dim
I = 256               # MLP intermediate size
V = 256               # vocab size
L = 2                 # decoder layers
EPS = 1e-6
NEG_INF = -1e9
M = B * S             # tokens per forward


# ----------------------------- fused forward kernel -------------------------

def _fused_forward_kernel(x_ref, kmask_ref, labels_ref, cos_ref, sin_ref,
                          rot_ref, wqkv_ref, wo_ref, wgu_ref, wd_ref,
                          n1_ref, n2_ref, normf_ref, lmhead_ref,
                          loss_ref, x_scr, bias_scr):
    f32 = jnp.float32
    bf16 = jnp.bfloat16
    l = pl.program_id(0)

    def mxdot(a, b):
        # bf16 MXU operands, f32 accumulation.
        return jnp.dot(a.astype(bf16), b.astype(bf16),
                       preferred_element_type=f32)

    def rmsnorm(v, w):
        var = jnp.mean(v * v, axis=-1, keepdims=True)
        return v * lax.rsqrt(var + EPS) * w

    def split_heads(t, nheads):
        # (M, nheads*DH) -> (nheads, M, DH) using only 2-D transpose,
        # sublane-regroup reshape and a batched minor-dims transpose.
        t3 = t.T.reshape(nheads, DH, M)
        return jnp.transpose(t3, (0, 2, 1))

    def merge_heads(t3):
        # (NH, M, DH) -> (M, H), inverse of split_heads.
        return jnp.transpose(t3, (0, 2, 1)).reshape(H, M).T

    # ---- one-time init: activation + combined attention bias (hoisted) ----
    @pl.when(l == 0)
    def _init():
        x_scr[...] = x_ref[...]
        # batch id per global token row (no integer division needed).
        qb_id = lax.broadcasted_iota(jnp.int32, (B, S, M), 0).reshape(M, M)
        row = lax.broadcasted_iota(jnp.int32, (M, M), 0)
        col = lax.broadcasted_iota(jnp.int32, (M, M), 1)
        ok = jnp.logical_and(qb_id == qb_id.T, col <= row)   # causal, same batch
        pad = (kmask_ref[...] - 1.0) * 1e9                    # (1, M): 0 or -1e9
        bias_scr[...] = jnp.where(ok, 0.0, NEG_INF) + pad     # (M, M) f32

    x = x_scr[...]                                            # (M, H) f32

    # ---------------- attention block ----------------
    h_in = rmsnorm(x, n1_ref[...])
    qkv = mxdot(h_in, wqkv_ref[...])                          # (M, 3H); q pre-scaled
    qk = qkv[:, :2 * H]                                       # lane-aligned slices
    v = qkv[:, 2 * H:]
    # fused RoPE on q|k: single K=256 matmul for rotate_half of both.
    qk = qk * cos_ref[...] + mxdot(qk, rot_ref[...]) * sin_ref[...]

    qk3 = split_heads(qk, 2 * NH)                             # (2NH, M, DH)
    q3 = qk3[:NH]
    k3 = qk3[NH:]
    v3 = split_heads(v, NH)                                   # (NH, M, DH)

    s = jnp.einsum('hqd,hkd->hqk', q3.astype(bf16), k3.astype(bf16),
                   preferred_element_type=f32)                # (NH, M, M)
    s = s + bias_scr[...]                                     # f32 mask add
    mmax = jnp.max(s, axis=-1, keepdims=True)
    p = jnp.exp(s - mmax)
    p = p * pl.reciprocal(jnp.sum(p, axis=-1, keepdims=True), approx=True)
    ctx = jnp.einsum('hqk,hkd->hqd', p.astype(bf16), v3.astype(bf16),
                     preferred_element_type=f32)              # (NH, M, DH)
    x = x + mxdot(merge_heads(ctx), wo_ref[...])

    # ---------------- MLP block ----------------
    h2 = rmsnorm(x, n2_ref[...])
    gu = mxdot(h2, wgu_ref[...])                              # (M, 2I)
    g = gu[:, :I]
    u = gu[:, I:]
    x = x + mxdot(g * (1.0 / (1.0 + jnp.exp(-g))) * u, wd_ref[...])
    x_scr[...] = x

    # ---------------- final norm + lm_head + shifted CE ----------------
    @pl.when(l == L - 1)
    def _final():
        xf = rmsnorm(x, normf_ref[...])
        # TODO(synk): for real LLaMA vocab sizes, tile V on a grid axis with an
        #             online logsumexp instead of materializing (M, V) logits.
        logits = mxdot(xf, lmhead_ref[...])                   # (M, V) f32
        labels = labels_ref[...]                              # (M, 1) int32
        lmax = jnp.max(logits, axis=-1, keepdims=True)
        lse = jnp.log(jnp.sum(jnp.exp(logits - lmax), axis=-1,
                              keepdims=True)) + lmax
        colv = lax.broadcasted_iota(jnp.int32, logits.shape, 1)
        tgt = jnp.sum(jnp.where(colv == labels, logits, 0.0),
                      axis=-1, keepdims=True)                 # (M, 1)
        valid = (labels != -100).astype(f32)
        per_tok = (lse - tgt) * valid
        lsum = jnp.sum(per_tok, axis=0, keepdims=True)        # (1, 1)
        cnt = jnp.sum(valid, axis=0, keepdims=True)           # (1, 1)
        loss_ref[...] = lsum / jnp.maximum(cnt, 1.0)


def fused_forward(params, x_emb, kmask, labels_sh, cos2, sin2, rot2):
    const = lambda shape: pl.BlockSpec(shape, lambda l: (0,) * len(shape))
    per_layer = lambda shape: pl.BlockSpec((None,) + shape,
                                           lambda l: (l,) + (0,) * len(shape))
    grid_spec = pltpu.PrefetchScalarGridSpec(
        num_scalar_prefetch=0,
        grid=(L,),
        in_specs=[
            const((M, H)),              # x_emb
            const((1, M)),              # key-padding mask
            const((M, 1)),              # shifted labels
            const((M, 2 * H)),          # cos (q|k)
            const((M, 2 * H)),          # sin (q|k)
            const((2 * H, 2 * H)),      # rotate_half matrix (q|k)
            per_layer((H, 3 * H)),      # wqkv (per layer, streamed)
            per_layer((H, H)),          # wo
            per_layer((H, 2 * I)),      # wgu
            per_layer((I, H)),          # wd
            per_layer((1, H)),          # norm1
            per_layer((1, H)),          # norm2
            const((1, H)),              # final norm
            const((H, V)),              # lm_head
        ],
        out_specs=pl.BlockSpec((1, 1), lambda l: (0, 0)),
        scratch_shapes=[pltpu.VMEM((M, H), jnp.float32),       # residual stream
                        pltpu.VMEM((M, M), jnp.float32)],      # attention bias
    )
    return pl.pallas_call(
        _fused_forward_kernel,
        out_shape=jax.ShapeDtypeStruct((1, 1), jnp.float32),
        grid_spec=grid_spec,
        compiler_params=pltpu.CompilerParams(
            dimension_semantics=("arbitrary",),
            vmem_limit_bytes=8 * 1024 * 1024),
    )(x_emb, kmask, labels_sh, cos2, sin2, rot2,
      params["wqkv"], params["wo"], params["wgu"], params["wd"],
      params["norm1"], params["norm2"], params["norm_f"], params["lm_head"])


# ----------------------------- params / constants ---------------------------

def init_params(key):
    def norm(k, shape, scale=0.02):
        return scale * jax.random.normal(k, shape, dtype=jnp.float32)

    keys = jax.random.split(key, 6)
    wqkv = norm(keys[2], (L, H, 3 * H))
    # Fold the 1/sqrt(DH) softmax scale into the q columns (RoPE commutes).
    wqkv = wqkv.at[:, :, :H].multiply(1.0 / np.sqrt(DH))
    return {
        "embed": norm(keys[0], (V, H)),                                  # f32
        "lm_head": norm(keys[1], (H, V)).astype(jnp.bfloat16),
        "wqkv": wqkv.astype(jnp.bfloat16),                               # q|k|v
        "wo": norm(keys[3], (L, H, H)).astype(jnp.bfloat16),
        "wgu": norm(keys[4], (L, H, 2 * I)).astype(jnp.bfloat16),        # gate|up
        "wd": norm(keys[5], (L, I, H)).astype(jnp.bfloat16),
        "norm1": jnp.ones((L, 1, H), jnp.float32),
        "norm2": jnp.ones((L, 1, H), jnp.float32),
        "norm_f": jnp.ones((1, H), jnp.float32),
    }


def rope_tables():
    pos = jnp.arange(S, dtype=jnp.float32)
    inv_freq = 1.0 / (10000.0 ** (jnp.arange(0, DH, 2, dtype=jnp.float32) / DH))
    freqs = pos[:, None] * inv_freq[None, :]               # (S, DH/2)
    emb = jnp.concatenate([freqs, freqs], axis=-1)         # (S, DH)
    # (M, 2H): rows repeat over batch, columns over the 2*NH head blocks of q|k.
    cos2 = jnp.tile(jnp.cos(emb), (B, 2 * NH))
    sin2 = jnp.tile(jnp.sin(emb), (B, 2 * NH))
    return cos2, sin2


def rotate_half_matrix_2h():
    # (2H, 2H) block-diagonal sign/permutation matrix so that
    # rotate_half([q|k]) == [q|k] @ R in a single K=256 matmul.
    Rm = np.zeros((2 * H, 2 * H), np.float32)
    for h in range(2 * NH):
        base = h * DH
        for j in range(DH // 2):
            Rm[base + DH // 2 + j, base + j] = -1.0
            Rm[base + j, base + DH // 2 + j] = 1.0
    return jnp.asarray(Rm, dtype=jnp.bfloat16)


# ----------------------------- model glue (plain JAX) -----------------------

def llama_causal_lm_loss(params, consts, input_ids, attention_mask, labels):
    cos2, sin2, rot2 = consts
    # embed_tokens (index gather -> plain JAX glue)
    x = jnp.take(params["embed"], input_ids, axis=0).reshape(M, H)
    kmask = attention_mask.astype(jnp.float32).reshape(1, M)
    # HF LlamaForCausalLM shift: predict token t+1 from position t.
    labels_sh = jnp.concatenate(
        [labels[:, 1:], jnp.full((B, 1), -100, labels.dtype)], axis=1
    ).reshape(M, 1).astype(jnp.int32)
    loss = fused_forward(params, x, kmask, labels_sh, cos2, sin2, rot2)
    return loss[0, 0]


# TODO(synk): tokenizer, HF checkpoint load, LoRA wrapping, EncoderProjectors
#             (unused in the loss path) and generate() (beam search / sampling /
#             regex + selfies decode) have no Pallas equivalent; synthetic token
#             ids / labels are used instead.

# ----------------------------- main ------------------------------------------
if __name__ == "__main__":
    key = jax.random.PRNGKey(0)
    k_param, k_ids, k_lab = jax.random.split(key, 3)

    params = init_params(k_param)
    cos2, sin2 = rope_tables()
    rot2 = rotate_half_matrix_2h()
    consts = (cos2, sin2, rot2)

    # synthetic "tokenized" batch (right padding, as in the training path)
    input_ids = jax.random.randint(k_ids, (B, S), 0, V, dtype=jnp.int32)
    attention_mask = jnp.ones((B, S), dtype=jnp.int32)
    attention_mask = attention_mask.at[1, S - 2:].set(0)          # pad tail of row 1
    labels = jax.random.randint(k_lab, (B, S), 0, V, dtype=jnp.int32)
    labels = labels.at[:, :4].set(-100)                            # prompt masked
    labels = labels.at[1, S - 2:].set(-100)                        # pad masked

    loss_fn = jax.jit(llama_causal_lm_loss)
    loss = loss_fn(params, consts, input_ids, attention_mask, labels)
    loss = jax.block_until_ready(loss)
    assert jnp.isfinite(loss)
    print("KERNEL_OK")
</pallas_src>

<mosaic_0001>
module attributes {stable_mosaic.version = 11 : i64} {
  func.func @_fused_forward_kernel(%arg0: i32, %arg1: memref<32x128xf32, #tpu.memory_space<vmem>>, %arg2: memref<1x32xf32, #tpu.memory_space<vmem>>, %arg3: memref<32x1xi32, #tpu.memory_space<vmem>>, %arg4: memref<32x256xf32, #tpu.memory_space<vmem>>, %arg5: memref<32x256xf32, #tpu.memory_space<vmem>>, %arg6: memref<256x256xbf16, #tpu.memory_space<vmem>>, %arg7: memref<1x128x384xbf16, #tpu.memory_space<vmem>>, %arg8: memref<1x128x128xbf16, #tpu.memory_space<vmem>>, %arg9: memref<1x128x512xbf16, #tpu.memory_space<vmem>>, %arg10: memref<1x256x128xbf16, #tpu.memory_space<vmem>>, %arg11: memref<1x1x128xf32, #tpu.memory_space<vmem>>, %arg12: memref<1x1x128xf32, #tpu.memory_space<vmem>>, %arg13: memref<1x128xf32, #tpu.memory_space<vmem>>, %arg14: memref<128x256xbf16, #tpu.memory_space<vmem>>, %arg15: memref<1x1xf32, #tpu.memory_space<vmem>>, %arg16: memref<32x128xf32, #tpu.memory_space<vmem>>, %arg17: memref<32x32xf32, #tpu.memory_space<vmem>>) attributes {dimension_semantics = [#tpu.dimension_semantics<arbitrary>], iteration_bounds = array<i64: 2>, scalar_prefetch = 0 : i64, scratch_operands = 2 : i64, tpu.core_type = #tpu.core_type<tc>, window_params = [{pipeline_mode = #tpu.pipeline_mode<synchronous>, transform_indices = @transform_0, window_bounds = array<i64: 32, 128>}, {pipeline_mode = #tpu.pipeline_mode<synchronous>, transform_indices = @transform_1, window_bounds = array<i64: 1, 32>}, {pipeline_mode = #tpu.pipeline_mode<synchronous>, transform_indices = @transform_2, window_bounds = array<i64: 32, 1>}, {pipeline_mode = #tpu.pipeline_mode<synchronous>, transform_indices = @transform_3, window_bounds = array<i64: 32, 256>}, {pipeline_mode = #tpu.pipeline_mode<synchronous>, transform_indices = @transform_4, window_bounds = array<i64: 32, 256>}, {pipeline_mode = #tpu.pipeline_mode<synchronous>, transform_indices = @transform_5, window_bounds = array<i64: 256, 256>}, {transform_indices = @transform_6, window_bounds = array<i64: 1, 128, 384>}, {transform_indices = @transform_7, window_bounds = array<i64: 1, 128, 128>}, {transform_indices = @transform_8, window_bounds = array<i64: 1, 128, 512>}, {transform_indices = @transform_9, window_bounds = array<i64: 1, 256, 128>}, {transform_indices = @transform_10, window_bounds = array<i64: 1, 1, 128>}, {transform_indices = @transform_11, window_bounds = array<i64: 1, 1, 128>}, {pipeline_mode = #tpu.pipeline_mode<synchronous>, transform_indices = @transform_12, window_bounds = array<i64: 1, 128>}, {pipeline_mode = #tpu.pipeline_mode<synchronous>, transform_indices = @transform_13, window_bounds = array<i64: 128, 256>}, {pipeline_mode = #tpu.pipeline_mode<synchronous>, transform_indices = @transform_14, window_bounds = array<i64: 1, 1>}]} {
    %c0_i32 = arith.constant 0 : i32
    %0 = arith.cmpi eq, %arg0, %c0_i32 : i32
    %1 = arith.extui %0 : i1 to i32
    %c0_i32_0 = arith.constant 0 : i32
    %2 = arith.cmpi ne, %1, %c0_i32_0 : i32
    scf.if %2 {
      %c0_48 = arith.constant 0 : index
      %c0_49 = arith.constant 0 : index
      %106 = vector.load %arg1[%c0_48, %c0_49] : memref<32x128xf32, #tpu.memory_space<vmem>>, vector<32x128xf32>
      %c0_50 = arith.constant 0 : index
      %c0_51 = arith.constant 0 : index
      %107 = vector.load %arg16[%c0_50, %c0_51] : memref<32x128xf32, #tpu.memory_space<vmem>>, vector<32x128xf32>
      tpu.vector_store %arg16[%c0_50, %c0_51], %106 {strides = array<i32>} : memref<32x128xf32, #tpu.memory_space<vmem>>, vector<32x128xf32>,
      %108 = tpu.iota {dimensions = array<i32: 0>} : vector<2x16x32xi32>
      %109 = vector.shape_cast %108 : vector<2x16x32xi32> to vector<32x32xi32>
      %110 = tpu.iota {dimensions = array<i32: 0>} : vector<32x32xi32>
      %111 = tpu.iota {dimensions = array<i32: 1>} : vector<32x32xi32>
      %112 = tpu.transpose %109, [1, 0] : vector<32x32xi32> -> vector<32x32xi32>
      %113 = arith.cmpi eq, %109, %112 : vector<32x32xi32>
      %114 = arith.cmpi sle, %111, %110 : vector<32x32xi32>
      %115 = arith.andi %113, %114 : vector<32x32xi1>
      %c0_52 = arith.constant 0 : index
      %c0_53 = arith.constant 0 : index
      %116 = vector.load %arg2[%c0_52, %c0_53] : memref<1x32xf32, #tpu.memory_space<vmem>>, vector<1x32xf32>
      %cst_54 = arith.constant 1.000000e+00 : f32
      %117 = vector.broadcast %cst_54 : f32 to vector<1x32xf32>
      %118 = arith.subf %116, %117 : vector<1x32xf32>
      %cst_55 = arith.constant 1.000000e+09 : f32
      %119 = vector.broadcast %cst_55 : f32 to vector<1x32xf32>
      %120 = arith.mulf %118, %119 : vector<1x32xf32>
      %cst_56 = arith.constant 0.000000e+00 : f32
      %cst_57 = arith.constant -1.000000e+09 : f32
      %121 = vector.broadcast %cst_56 : f32 to vector<32x32xf32>
      %122 = vector.broadcast %cst_57 : f32 to vector<32x32xf32>
      %123 = arith.select %115, %121, %122 : vector<32x32xi1>, vector<32x32xf32>
      %124 = vector.broadcast %120 : vector<1x32xf32> to vector<32x32xf32>
      %125 = arith.addf %123, %124 : vector<32x32xf32>
      %c0_58 = arith.constant 0 : index
      %c0_59 = arith.constant 0 : index
      %126 = vector.load %arg17[%c0_58, %c0_59] : memref<32x32xf32, #tpu.memory_space<vmem>>, vector<32x32xf32>
      tpu.vector_store %arg17[%c0_58, %c0_59], %125 {strides = array<i32>} : memref<32x32xf32, #tpu.memory_space<vmem>>, vector<32x32xf32>,
    } else {
    }
    %c0 = arith.constant 0 : index
    %c0_1 = arith.constant 0 : index
    %3 = vector.load %arg16[%c0, %c0_1] : memref<32x128xf32, #tpu.memory_space<vmem>>, vector<32x128xf32>
    %c0_2 = arith.constant 0 : index
    %c0_3 = arith.constant 0 : index
    %c0_4 = arith.constant 0 : index
    %4 = vector.load %arg11[%c0_2, %c0_3, %c0_4] : memref<1x1x128xf32, #tpu.memory_space<vmem>>, vector<1x1x128xf32>
    %5 = vector.shape_cast %4 : vector<1x1x128xf32> to vector<1x128xf32>
    %6 = arith.mulf %3, %3 : vector<32x128xf32>
    %cst = arith.constant dense<0.000000e+00> : vector<32xf32>
    %7 = vector.multi_reduction <add>, %6, %cst [1] : vector<32x128xf32> to vector<32xf32>
    %8 = vector.shape_cast %7 : vector<32xf32> to vector<32x1xf32>
    %cst_5 = arith.constant 1.280000e+02 : f32
    %9 = vector.broadcast %cst_5 : f32 to vector<32x1xf32>
    %10 = arith.divf %8, %9 : vector<32x1xf32>
    %cst_6 = arith.constant 9.99999997E-7 : f32
    %11 = vector.broadcast %cst_6 : f32 to vector<32x1xf32>
    %12 = arith.addf %10, %11 : vector<32x1xf32>
    %13 = math.rsqrt %12 : vector<32x1xf32>
    %14 = vector.broadcast %13 : vector<32x1xf32> to vector<32x128xf32>
    %15 = arith.mulf %3, %14 : vector<32x128xf32>
    %16 = vector.broadcast %5 : vector<1x128xf32> to vector<32x128xf32>
    %17 = arith.mulf %15, %16 : vector<32x128xf32>
    %c0_7 = arith.constant 0 : index
    %c0_8 = arith.constant 0 : index
    %c0_9 = arith.constant 0 : index
    %18 = vector.load %arg7[%c0_7, %c0_8, %c0_9] : memref<1x128x384xbf16, #tpu.memory_space<vmem>>, vector<1x128x384xbf16>
    %19 = vector.shape_cast %18 : vector<1x128x384xbf16> to vector<128x384xbf16>
    %20 = arith.truncf %17 : vector<32x128xf32> to vector<32x128xbf16>
    %cst_10 = arith.constant dense<0.000000e+00> : vector<32x384xf32>
    %21 = tpu.matmul %20, %19, %cst_10 {dimension_numbers = #tpu.dot_dimension_numbers<[1], [0], [0], [1], [0, 0, 1, 1], [], []>} : vector<32x128xbf16>, vector<128x384xbf16>, vector<32x384xf32> -> vector<32x384xf32>
    %22 = vector.extract_strided_slice %21 {offsets = [0, 0], sizes = [32, 256], strides = [1, 1]} : vector<32x384xf32> to vector<32x256xf32>
    %23 = vector.extract_strided_slice %21 {offsets = [0, 256], sizes = [32, 128], strides = [1, 1]} : vector<32x384xf32> to vector<32x128xf32>
    %c0_11 = arith.constant 0 : index
    %c0_12 = arith.constant 0 : index
    %24 = vector.load %arg4[%c0_11, %c0_12] : memref<32x256xf32, #tpu.memory_space<vmem>>, vector<32x256xf32>
    %25 = arith.mulf %22, %24 : vector<32x256xf32>
    %c0_13 = arith.constant 0 : index
    %c0_14 = arith.constant 0 : index
    %26 = vector.load %arg6[%c0_13, %c0_14] : memref<256x256xbf16, #tpu.memory_space<vmem>>, vector<256x256xbf16>
    %27 = arith.truncf %22 : vector<32x256xf32> to vector<32x256xbf16>
    %cst_15 = arith.constant dense<0.000000e+00> : vector<32x256xf32>
    %28 = tpu.matmul %27, %26, %cst_15 {dimension_numbers = #tpu.dot_dimension_numbers<[1], [0], [0], [1], [0, 0, 1, 1], [], []>} : vector<32x256xbf16>, vector<256x256xbf16>, vector<32x256xf32> -> vector<32x256xf32>
    %c0_16 = arith.constant 0 : index
    %c0_17 = arith.constant 0 : index
    %29 = vector.load %arg5[%c0_16, %c0_17] : memref<32x256xf32, #tpu.memory_space<vmem>>, vector<32x256xf32>
    %30 = arith.mulf %28, %29 : vector<32x256xf32>
    %31 = arith.addf %25, %30 : vector<32x256xf32>
    %32 = tpu.transpose %31, [1, 0] : vector<32x256xf32> -> vector<256x32xf32>
    %33 = vector.shape_cast %32 : vector<256x32xf32> to vector<8x32x32xf32>
    %34 = tpu.transpose %33, [0, 2, 1] : vector<8x32x32xf32> -> vector<8x32x32xf32>
    %35 = vector.extract_strided_slice %34 {offsets = [0, 0, 0], sizes = [4, 32, 32], strides = [1, 1, 1]} : vector<8x32x32xf32> to vector<4x32x32xf32>
    %36 = vector.extract_strided_slice %34 {offsets = [4, 0, 0], sizes = [4, 32, 32], strides = [1, 1, 1]} : vector<8x32x32xf32> to vector<4x32x32xf32>
    %37 = tpu.transpose %23, [1, 0] : vector<32x128xf32> -> vector<128x32xf32>
    %38 = vector.shape_cast %37 : vector<128x32xf32> to vector<4x32x32xf32>
    %39 = tpu.transpose %38, [0, 2, 1] : vector<4x32x32xf32> -> vector<4x32x32xf32>
    %40 = arith.truncf %35 : vector<4x32x32xf32> to vector<4x32x32xbf16>
    %41 = arith.truncf %36 : vector<4x32x32xf32> to vector<4x32x32xbf16>
    "tpu.trace_start"() <{level = 10 : i32, message = "hqd,hkd->hqk"}> : () -> ()
    %cst_18 = arith.constant dense<0.000000e+00> : vector<4x32x32xf32>
    %42 = tpu.matmul %40, %41, %cst_18 {dimension_numbers = #tpu.dot_dimension_numbers<[2], [2], [1], [1], [0, 0, 0, 1, 1, 1], [0], [0]>} : vector<4x32x32xbf16>, vector<4x32x32xbf16>, vector<4x32x32xf32> -> vector<4x32x32xf32>
    "tpu.trace_stop"() : () -> ()
    %c0_19 = arith.constant 0 : index
    %c0_20 = arith.constant 0 : index
    %43 = vector.load %arg17[%c0_19, %c0_20] : memref<32x32xf32, #tpu.memory_space<vmem>>, vector<32x32xf32>
    %44 = vector.shape_cast %43 : vector<32x32xf32> to vector<1x32x32xf32>
    %45 = vector.broadcast %44 : vector<1x32x32xf32> to vector<4x32x32xf32>
    %46 = arith.addf %42, %45 : vector<4x32x32xf32>
    %cst_21 = arith.constant dense<0xFF800000> : vector<4x32xf32>
    %47 = vector.multi_reduction <maximumf>, %46, %cst_21 [2] : vector<4x32x32xf32> to vector<4x32xf32>
    %48 = vector.shape_cast %47 : vector<4x32xf32> to vector<4x32x1xf32>
    %49 = vector.broadcast %48 : vector<4x32x1xf32> to vector<4x32x32xf32>
    %50 = arith.subf %46, %49 : vector<4x32x32xf32>
    %51 = math.exp %50 : vector<4x32x32xf32>
    %cst_22 = arith.constant dense<0.000000e+00> : vector<4x32xf32>
    %52 = vector.multi_reduction <add>, %51, %cst_22 [2] : vector<4x32x32xf32> to vector<4x32xf32>
    %53 = vector.shape_cast %52 : vector<4x32xf32> to vector<4x32x1xf32>
    %54 = tpu.reciprocal %53 {approx = true} : vector<4x32x1xf32> -> vector<4x32x1xf32>
    %55 = vector.broadcast %54 : vector<4x32x1xf32> to vector<4x32x32xf32>
    %56 = arith.mulf %51, %55 : vector<4x32x32xf32>
    %57 = arith.truncf %56 : vector<4x32x32xf32> to vector<4x32x32xbf16>
    %58 = arith.truncf %39 : vector<4x32x32xf32> to vector<4x32x32xbf16>
    "tpu.trace_start"() <{level = 10 : i32, message = "hqk,hkd->hqd"}> : () -> ()
    %cst_23 = arith.constant dense<0.000000e+00> : vector<4x32x32xf32>
    %59 = tpu.matmul %57, %58, %cst_23 {dimension_numbers = #tpu.dot_dimension_numbers<[2], [1], [1], [2], [0, 0, 0, 1, 1, 2], [0], [0]>} : vector<4x32x32xbf16>, vector<4x32x32xbf16>, vector<4x32x32xf32> -> vector<4x32x32xf32>
    "tpu.trace_stop"() : () -> ()
    %60 = tpu.transpose %59, [0, 2, 1] : vector<4x32x32xf32> -> vector<4x32x32xf32>
    %61 = vector.shape_cast %60 : vector<4x32x32xf32> to vector<128x32xf32>
    %62 = tpu.transpose %61, [1, 0] : vector<128x32xf32> -> vector<32x128xf32>
    %c0_24 = arith.constant 0 : index
    %c0_25 = arith.constant 0 : index
    %c0_26 = arith.constant 0 : index
    %63 = vector.load %arg8[%c0_24, %c0_25, %c0_26] : memref<1x128x128xbf16, #tpu.memory_space<vmem>>, vector<1x128x128xbf16>
    %64 = vector.shape_cast %63 : vector<1x128x128xbf16> to vector<128x128xbf16>
    %65 = arith.truncf %62 : vector<32x128xf32> to vector<32x128xbf16>
    %cst_27 = arith.constant dense<0.000000e+00> : vector<32x128xf32>
    %66 = tpu.matmul %65, %64, %cst_27 {dimension_numbers = #tpu.dot_dimension_numbers<[1], [0], [0], [1], [0, 0, 1, 1], [], []>} : vector<32x128xbf16>, vector<128x128xbf16>, vector<32x128xf32> -> vector<32x128xf32>
    %67 = arith.addf %3, %66 : vector<32x128xf32>
    %c0_28 = arith.constant 0 : index
    %c0_29 = arith.constant 0 : index
    %c0_30 = arith.constant 0 : index
    %68 = vector.load %arg12[%c0_28, %c0_29, %c0_30] : memref<1x1x128xf32, #tpu.memory_space<vmem>>, vector<1x1x128xf32>
    %69 = vector.shape_cast %68 : vector<1x1x128xf32> to vector<1x128xf32>
    %70 = arith.mulf %67, %67 : vector<32x128xf32>
    %cst_31 = arith.constant dense<0.000000e+00> : vector<32xf32>
    %71 = vector.multi_reduction <add>, %70, %cst_31 [1] : vector<32x128xf32> to vector<32xf32>
    %72 = vector.shape_cast %71 : vector<32xf32> to vector<32x1xf32>
    %cst_32 = arith.constant 1.280000e+02 : f32
    %73 = vector.broadcast %cst_32 : f32 to vector<32x1xf32>
    %74 = arith.divf %72, %73 : vector<32x1xf32>
    %cst_33 = arith.constant 9.99999997E-7 : f32
    %75 = vector.broadcast %cst_33 : f32 to vector<32x1xf32>
    %76 = arith.addf %74, %75 : vector<32x1xf32>
    %77 = math.rsqrt %76 : vector<32x1xf32>
    %78 = vector.broadcast %77 : vector<32x1xf32> to vector<32x128xf32>
    %79 = arith.mulf %67, %78 : vector<32x128xf32>
    %80 = vector.broadcast %69 : vector<1x128xf32> to vector<32x128xf32>
    %81 = arith.mulf %79, %80 : vector<32x128xf32>
    %c0_34 = arith.constant 0 : index
    %c0_35 = arith.constant 0 : index
    %c0_36 = arith.constant 0 : index
    %82 = vector.load %arg9[%c0_34, %c0_35, %c0_36] : memref<1x128x512xbf16, #tpu.memory_space<vmem>>, vector<1x128x512xbf16>
    %83 = vector.shape_cast %82 : vector<1x128x512xbf16> to vector<128x512xbf16>
    %84 = arith.truncf %81 : vector<32x128xf32> to vector<32x128xbf16>
    %cst_37 = arith.constant dense<0.000000e+00> : vector<32x512xf32>
    %85 = tpu.matmul %84, %83, %cst_37 {dimension_numbers = #tpu.dot_dimension_numbers<[1], [0], [0], [1], [0, 0, 1, 1], [], []>} : vector<32x128xbf16>, vector<128x512xbf16>, vector<32x512xf32> -> vector<32x512xf32>
    %86 = vector.extract_strided_slice %85 {offsets = [0, 0], sizes = [32, 256], strides = [1, 1]} : vector<32x512xf32> to vector<32x256xf32>
    %87 = vector.extract_strided_slice %85 {offsets = [0, 256], sizes = [32, 256], strides = [1, 1]} : vector<32x512xf32> to vector<32x256xf32>
    %cst_38 = arith.constant 0.000000e+00 : f32
    %88 = vector.broadcast %cst_38 : f32 to vector<32x256xf32>
    %89 = arith.subf %88, %86 : vector<32x256xf32>
    %90 = math.exp %89 : vector<32x256xf32>
    %cst_39 = arith.constant 1.000000e+00 : f32
    %91 = vector.broadcast %cst_39 : f32 to vector<32x256xf32>
    %92 = arith.addf %91, %90 : vector<32x256xf32>
    %cst_40 = arith.constant 1.000000e+00 : f32
    %93 = vector.broadcast %cst_40 : f32 to vector<32x256xf32>
    %94 = arith.divf %93, %92 : vector<32x256xf32>
    %95 = arith.mulf %86, %94 : vector<32x256xf32>
    %96 = arith.mulf %95, %87 : vector<32x256xf32>
    %c0_41 = arith.constant 0 : index
    %c0_42 = arith.constant 0 : index
    %c0_43 = arith.constant 0 : index
    %97 = vector.load %arg10[%c0_41, %c0_42, %c0_43] : memref<1x256x128xbf16, #tpu.memory_space<vmem>>, vector<1x256x128xbf16>
    %98 = vector.shape_cast %97 : vector<1x256x128xbf16> to vector<256x128xbf16>
    %99 = arith.truncf %96 : vector<32x256xf32> to vector<32x256xbf16>
    %cst_44 = arith.constant dense<0.000000e+00> : vector<32x128xf32>
    %100 = tpu.matmul %99, %98, %cst_44 {dimension_numbers = #tpu.dot_dimension_numbers<[1], [0], [0], [1], [0, 0, 1, 1], [], []>} : vector<32x256xbf16>, vector<256x128xbf16>, vector<32x128xf32> -> vector<32x128xf32>
    %101 = arith.addf %67, %100 : vector<32x128xf32>
    %c0_45 = arith.constant 0 : index
    %c0_46 = arith.constant 0 : index
    %102 = vector.load %arg16[%c0_45, %c0_46] : memref<32x128xf32, #tpu.memory_space<vmem>>, vector<32x128xf32>
    tpu.vector_store %arg16[%c0_45, %c0_46], %101 {strides = array<i32>} : memref<32x128xf32, #tpu.memory_space<vmem>>, vector<32x128xf32>,
    %c1_i32 = arith.constant 1 : i32
    %103 = arith.cmpi eq, %arg0, %c1_i32 : i32
    %104 = arith.extui %103 : i1 to i32
    %c0_i32_47 = arith.constant 0 : i32
    %105 = arith.cmpi ne, %104, %c0_i32_47 : i32
    scf.if %105 {
      %c0_48 = arith.constant 0 : index
      %c0_49 = arith.constant 0 : index
      %106 = vector.load %arg13[%c0_48, %c0_49] : memref<1x128xf32, #tpu.memory_space<vmem>>, vector<1x128xf32>
      %107 = arith.mulf %101, %101 : vector<32x128xf32>
      %cst_50 = arith.constant dense<0.000000e+00> : vector<32xf32>
      %108 = vector.multi_reduction <add>, %107, %cst_50 [1] : vector<32x128xf32> to vector<32xf32>
      %109 = vector.shape_cast %108 : vector<32xf32> to vector<32x1xf32>
      %cst_51 = arith.constant 1.280000e+02 : f32
      %110 = vector.broadcast %cst_51 : f32 to vector<32x1xf32>
      %111 = arith.divf %109, %110 : vector<32x1xf32>
      %cst_52 = arith.constant 9.99999997E-7 : f32
      %112 = vector.broadcast %cst_52 : f32 to vector<32x1xf32>
      %113 = arith.addf %111, %112 : vector<32x1xf32>
      %114 = math.rsqrt %113 : vector<32x1xf32>
      %115 = vector.broadcast %114 : vector<32x1xf32> to vector<32x128xf32>
      %116 = arith.mulf %101, %115 : vector<32x128xf32>
      %117 = vector.broadcast %106 : vector<1x128xf32> to vector<32x128xf32>
      %118 = arith.mulf %116, %117 : vector<32x128xf32>
      %c0_53 = arith.constant 0 : index
      %c0_54 = arith.constant 0 : index
      %119 = vector.load %arg14[%c0_53, %c0_54] : memref<128x256xbf16, #tpu.memory_space<vmem>>, vector<128x256xbf16>
      %120 = arith.truncf %118 : vector<32x128xf32> to vector<32x128xbf16>
      %cst_55 = arith.constant dense<0.000000e+00> : vector<32x256xf32>
      %121 = tpu.matmul %120, %119, %cst_55 {dimension_numbers = #tpu.dot_dimension_numbers<[1], [0], [0], [1], [0, 0, 1, 1], [], []>} : vector<32x128xbf16>, vector<128x256xbf16>, vector<32x256xf32> -> vector<32x256xf32>
      %c0_56 = arith.constant 0 : index
      %c0_57 = arith.constant 0 : index
      %122 = vector.load %arg3[%c0_56, %c0_57] : memref<32x1xi32, #tpu.memory_space<vmem>>, vector<32x1xi32>
      %cst_58 = arith.constant dense<0xFF800000> : vector<32xf32>
      %123 = vector.multi_reduction <maximumf>, %121, %cst_58 [1] : vector<32x256xf32> to vector<32xf32>
      %124 = vector.shape_cast %123 : vector<32xf32> to vector<32x1xf32>
      %125 = vector.broadcast %124 : vector<32x1xf32> to vector<32x256xf32>
      %126 = arith.subf %121, %125 : vector<32x256xf32>
      %127 = math.exp %126 : vector<32x256xf32>
      %cst_59 = arith.constant dense<0.000000e+00> : vector<32xf32>
      %128 = vector.multi_reduction <add>, %127, %cst_59 [1] : vector<32x256xf32> to vector<32xf32>
      %129 = vector.shape_cast %128 : vector<32xf32> to vector<32x1xf32>
      %130 = math.log %129 : vector<32x1xf32>
      %131 = arith.addf %130, %124 : vector<32x1xf32>
      %132 = tpu.iota {dimensions = array<i32: 1>} : vector<32x256xi32>
      %133 = vector.broadcast %122 : vector<32x1xi32> to vector<32x256xi32>
      %134 = arith.cmpi eq, %132, %133 : vector<32x256xi32>
      %cst_60 = arith.constant 0.000000e+00 : f32
      %135 = vector.broadcast %cst_60 : f32 to vector<32x256xf32>
      %136 = arith.select %134, %121, %135 : vector<32x256xi1>, vector<32x256xf32>
      %cst_61 = arith.constant dense<0.000000e+00> : vector<32xf32>
      %137 = vector.multi_reduction <add>, %136, %cst_61 [1] : vector<32x256xf32> to vector<32xf32>
      %138 = vector.shape_cast %137 : vector<32xf32> to vector<32x1xf32>
      %c-100_i32 = arith.constant -100 : i32
      %139 = vector.broadcast %c-100_i32 : i32 to vector<32x1xi32>
      %140 = arith.cmpi ne, %122, %139 : vector<32x1xi32>
      %141 = arith.extui %140 : vector<32x1xi1> to vector<32x1xi32>
      %142 = arith.sitofp %141 : vector<32x1xi32> to vector<32x1xf32>
      %143 = arith.subf %131, %138 : vector<32x1xf32>
      %144 = arith.mulf %143, %142 : vector<32x1xf32>
      %cst_62 = arith.constant dense<0.000000e+00> : vector<1xf32>
      %145 = vector.multi_reduction <add>, %144, %cst_62 [0] : vector<32x1xf32> to vector<1xf32>
      %146 = vector.shape_cast %145 : vector<1xf32> to vector<1x1xf32>
      %cst_63 = arith.constant dense<0.000000e+00> : vector<1xf32>
      %147 = vector.multi_reduction <add>, %142, %cst_63 [0] : vector<32x1xf32> to vector<1xf32>
      %148 = vector.shape_cast %147 : vector<1xf32> to vector<1x1xf32>
      %cst_64 = arith.constant 1.000000e+00 : f32
      %149 = vector.broadcast %cst_64 : f32 to vector<1x1xf32>
      %150 = arith.maximumf %148, %149 : vector<1x1xf32>
      %151 = arith.divf %146, %150 : vector<1x1xf32>
      %c0_65 = arith.constant 0 : index
      %c0_66 = arith.constant 0 : index
      %152 = vector.load %arg15[%c0_65, %c0_66] : memref<1x1xf32, #tpu.memory_space<vmem>>, vector<1x1xf32>
      tpu.vector_store %arg15[%c0_65, %c0_66], %151 {strides = array<i32>} : memref<1x1xf32, #tpu.memory_space<vmem>>, vector<1x1xf32>,
    } else {
    }
    return
  }
  func.func @transform_0(%arg0: i32) -> (i32, i32) {
    %c0_i32 = arith.constant 0 : i32
    %c0_i32_0 = arith.constant 0 : i32
    %c0_i32_1 = arith.constant 0 : i32
    return %c0_i32, %c0_i32_0 : i32, i32
  }
  func.func @transform_1(%arg0: i32) -> (i32, i32) {
    %c0_i32 = arith.constant 0 : i32
    %c0_i32_0 = arith.constant 0 : i32
    %c0_i32_1 = arith.constant 0 : i32
    return %c0_i32, %c0_i32_0 : i32, i32
  }
  func.func @transform_2(%arg0: i32) -> (i32, i32) {
    %c0_i32 = arith.constant 0 : i32
    %c0_i32_0 = arith.constant 0 : i32
    %c0_i32_1 = arith.constant 0 : i32
    return %c0_i32, %c0_i32_0 : i32, i32
  }
  func.func @transform_3(%arg0: i32) -> (i32, i32) {
    %c0_i32 = arith.constant 0 : i32
    %c0_i32_0 = arith.constant 0 : i32
    %c0_i32_1 = arith.constant 0 : i32
    return %c0_i32, %c0_i32_0 : i32, i32
  }
  func.func @transform_4(%arg0: i32) -> (i32, i32) {
    %c0_i32 = arith.constant 0 : i32
    %c0_i32_0 = arith.constant 0 : i32
    %c0_i32_1 = arith.constant 0 : i32
    return %c0_i32, %c0_i32_0 : i32, i32
  }
  func.func @transform_5(%arg0: i32) -> (i32, i32) {
    %c0_i32 = arith.constant 0 : i32
    %c0_i32_0 = arith.constant 0 : i32
    %c0_i32_1 = arith.constant 0 : i32
    return %c0_i32, %c0_i32_0 : i32, i32
  }
  func.func @transform_6(%arg0: i32) -> (i32, i32, i32) {
    %c0_i32 = arith.constant 0 : i32
    %c0_i32_0 = arith.constant 0 : i32
    %c0_i32_1 = arith.constant 0 : i32
    return %arg0, %c0_i32, %c0_i32_0 : i32, i32, i32
  }
  func.func @transform_7(%arg0: i32) -> (i32, i32, i32) {
    %c0_i32 = arith.constant 0 : i32
    %c0_i32_0 = arith.constant 0 : i32
    %c0_i32_1 = arith.constant 0 : i32
    return %arg0, %c0_i32, %c0_i32_0 : i32, i32, i32
  }
  func.func @transform_8(%arg0: i32) -> (i32, i32, i32) {
    %c0_i32 = arith.constant 0 : i32
    %c0_i32_0 = arith.constant 0 : i32
    %c0_i32_1 = arith.constant 0 : i32
    return %arg0, %c0_i32, %c0_i32_0 : i32, i32, i32
  }
  func.func @transform_9(%arg0: i32) -> (i32, i32, i32) {
    %c0_i32 = arith.constant 0 : i32
    %c0_i32_0 = arith.constant 0 : i32
    %c0_i32_1 = arith.constant 0 : i32
    return %arg0, %c0_i32, %c0_i32_0 : i32, i32, i32
  }
  func.func @transform_10(%arg0: i32) -> (i32, i32, i32) {
    %c0_i32 = arith.constant 0 : i32
    %c0_i32_0 = arith.constant 0 : i32
    %c0_i32_1 = arith.constant 0 : i32
    return %arg0, %c0_i32, %c0_i32_0 : i32, i32, i32
  }
  func.func @transform_11(%arg0: i32) -> (i32, i32, i32) {
    %c0_i32 = arith.constant 0 : i32
    %c0_i32_0 = arith.constant 0 : i32
    %c0_i32_1 = arith.constant 0 : i32
    return %arg0, %c0_i32, %c0_i32_0 : i32, i32, i32
  }
  func.func @transform_12(%arg0: i32) -> (i32, i32) {
    %c0_i32 = arith.constant 0 : i32
    %c0_i32_0 = arith.constant 0 : i32
    %c0_i32_1 = arith.constant 0 : i32
    return %c0_i32, %c0_i32_0 : i32, i32
  }
  func.func @transform_13(%arg0: i32) -> (i32, i32) {
    %c0_i32 = arith.constant 0 : i32
    %c0_i32_0 = arith.constant 0 : i32
    %c0_i32_1 = arith.constant 0 : i32
    return %c0_i32, %c0_i32_0 : i32, i32
  }
  func.func @transform_14(%arg0: i32) -> (i32, i32) {
    %c0_i32 = arith.constant 0 : i32
    %c0_i32_0 = arith.constant 0 : i32
    %c0_i32_1 = arith.constant 0 : i32
    return %c0_i32, %c0_i32_0 : i32, i32
  }
}

</mosaic_0001>

<llo_original>
// kernel: llama_causal_lm_loss.1
$region0: #{llama_causal_lm_loss.1}
  #allocation0 [shape = 'u32[]', space=smem, size = 0x4, offset = 0x4, fixed_abs, tag = 'smem constant byte address 0x4 - core index']
  #allocation1 [shape = 'u32[144,128]{1,0:T(1,128)}', space=vmem, size = 0x12000, scoped, tag = 'internal scratch']
  #allocation2 [shape = 'f32[32,128]{1,0:T(8,128)}', space=vmem, size = 0x4000, scoped, tag = 'scratch operand']
  #allocation3 [shape = 'f32[32,32]{1,0:T(8,128)}', space=vmem, size = 0x4000, scoped, tag = 'scratch operand']
  %s0 = inlined_call_operand.vmem [shape: f32[32,128], index: 0, kind: input, shape index: {}]
  %s1 = inlined_call_operand.vmem [shape: f32[1,32], index: 1, kind: input, shape index: {}]
  %s2 = inlined_call_operand.vmem [shape: s32[32,1], index: 2, kind: input, shape index: {}]
  %s3 = inlined_call_operand.vmem [shape: f32[32,256], index: 3, kind: input, shape index: {}]
  %s4 = inlined_call_operand.hbm [shape: f32[32,256], index: 4, kind: input, shape index: {}]
  %s5 = inlined_call_operand.hbm [shape: bf16[256,256], index: 5, kind: input, shape index: {}]
  %s6 = inlined_call_operand.vmem [shape: bf16[2,128,384], index: 6, kind: input, shape index: {}]
  %s7 = inlined_call_operand.hbm [shape: bf16[2,128,128], index: 7, kind: input, shape index: {}]
  %s8 = inlined_call_operand.hbm [shape: bf16[2,128,512], index: 8, kind: input, shape index: {}]
  %s9 = inlined_call_operand.hbm [shape: bf16[2,256,128], index: 9, kind: input, shape index: {}]
  %s10 = inlined_call_operand.vmem [shape: f32[2,1,128], index: 10, kind: input, shape index: {}]
  %s11 = inlined_call_operand.vmem [shape: f32[2,1,128], index: 11, kind: input, shape index: {}]
  %s12 = inlined_call_operand.vmem [shape: f32[1,128], index: 12, kind: input, shape index: {}]
  %s13 = inlined_call_operand.hbm [shape: bf16[128,256], index: 13, kind: input, shape index: {}]
  %s14 = inlined_call_operand.hbm [shape: f32[1,1], index: 14, kind: output, shape index: {}]
  %s15 = sld [smem:[#allocation0]]
  $region121: #{llama_causal_lm_loss.1} parent=0
    _
  %s17 = ssub.s32 1, %s15
  %s18 = scalar_select 0, %s17, %s15
  $region1: #{llama_causal_lm_loss.1} parent=0
    #allocation4 [shape = 'u8[32768]{0}', space=vmem, size = 0x8000, scoped, tag = 'input window, operand 4, single buffered']
    #allocation5 [shape = 's32[2]{0}', space=sflag, size = 0x8, scoped, tag = 'scoped memory for llama_causal_lm_loss.1']
    #allocation6 [shape = 's32[2]{0}', space=sflag, size = 0x8, scoped, tag = 'scoped memory for llama_causal_lm_loss.1']
    #allocation7 [shape = 'u8[131072]{0}', space=vmem, size = 0x20000, scoped, tag = 'input window, operand 5, single buffered']
    #allocation8 [shape = 's32[1]{0}', space=sflag, size = 0x4, scoped, tag = 'scoped memory for llama_causal_lm_loss.1']
    #allocation9 [shape = 'u8[65536]{0}', space=vmem, size = 0x10000, scoped, tag = 'input window, operand 7']
    #allocation10 [shape = 'u8[262144]{0}', space=vmem, size = 0x40000, scoped, tag = 'input window, operand 8']
    #allocation11 [shape = 'u8[131072]{0}', space=vmem, size = 0x20000, scoped, tag = 'input window, operand 9']
    #allocation12 [shape = 'u8[65536]{0}', space=vmem, size = 0x10000, scoped, tag = 'input window, operand 13, single buffered']
    #allocation13 [shape = 'u8[512]{0}', space=vmem, size = 0x400, scoped, tag = 'output window, operand 0, single buffered']
    %19 = vsyncpa [#allocation5], 0
    %20 = vsyncpa [#allocation8], 0
    %21 = vsyncpa [#allocation6], 0
    loop: start=0, step=1, limit=4
    $region2: #{llama_causal_lm_loss.1} parent=1 // loop_pre_header
      _
    $region3: #{llama_causal_lm_loss.1} parent=1 // loop_header
      %s23 = sphi 0, %s27
      %p24 = scmp.ge.s32.totalorder %s23, 4
      %s31 = sphi 0, %s31
      %s33 = sphi 0, %s31
      %s34 = sphi 0, %s33
      %s48 = sphi 0, %s34
      %s52 = sphi 0, %s52
      %s54 = sphi 0, %s52
      %s55 = sphi 0, %s54
      %s69 = sphi 0, %s55
      %s73 = sphi 0, %s73
      %s75 = sphi 0, %s73
      %s76 = sphi 0, %s75
      %s90 = sphi 0, %s76
      %s94 = sphi 0, %s94
      %s96 = sphi 0, %s94
      %s97 = sphi 0, %s96
      %s111 = sphi 0, %s97
      %s115 = sphi 0, %s115
      %s117 = sphi 0, %s115
      %s118 = sphi 0, %s117
      %s132 = sphi 0, %s118
      %s136 = sphi 0, %s136
      %s138 = sphi 0, %s136
      %s139 = sphi 0, %s138
      %s153 = sphi 0, %s139
      %s159 = sphi 0, %s161
      %s162 = sphi 0, %s159
      %s163 = sphi 0, %s162
      %s179 = sphi 0, %s163
      %s185 = sphi 0, %s187
      %s188 = sphi 0, %s185
      %s189 = sphi 0, %s188
      %s205 = sphi 0, %s189
      %s211 = sphi 0, %s213
      %s214 = sphi 0, %s211
      %s215 = sphi 0, %s214
      %s231 = sphi 0, %s215
      %s237 = sphi 0, %s239
      %s240 = sphi 0, %s237
      %s241 = sphi 0, %s240
      %s257 = sphi 0, %s241
      %s263 = sphi 0, %s265
      %s266 = sphi 0, %s263
      %s267 = sphi 0, %s266
      %s283 = sphi 0, %s267
      %s289 = sphi 0, %s291
      %s292 = sphi 0, %s289
      %s293 = sphi 0, %s292
      %s309 = sphi 0, %s293
      %s313 = sphi 0, %s313
      %s315 = sphi 0, %s313
      %s316 = sphi 0, %s315
      %s330 = sphi 0, %s316
      %s334 = sphi 0, %s334
      %s336 = sphi 0, %s334
      %s337 = sphi 0, %s336
      %s351 = sphi 0, %s337
      %s355 = sphi 0, %s355
      %s357 = sphi 0, %s355
      %s358 = sphi 0, %s357
      %s372 = sphi 0, %s358
    $region4: #{llama_causal_lm_loss.1} parent=1 // loop_header_branch
      %26 = sbr.rel (%p24) target = $region8
    $region5: #{llama_causal_lm_loss.1} parent=1 // loop_body
      %s28 = ssub.s32 %s23, 1
      %s29 = ssub.s32 %s23, 2
      %s30 = sadd.s32 %s23, 1
      %s32 = sadd.s32 %s31, 1
      %p35 = scmp.eq.s32.totalorder %s23, 1
      %p36 = scmp.ne.s32.totalorder %s31, %s33
      %p37 = scmp.eq.s32.totalorder %s23, 0
      %p38 = por %p36, %p37
      %p39 = scmp.ne.s32.totalorder %s31, %s33
      %p40 = scmp.eq.s32.totalorder %s28, 1
      %p41 = por %p39, %p40
      %p42 = scmp.ne.s32.totalorder %s33, %s34
      %p43 = scmp.eq.s32.totalorder %s28, 0
      %p44 = por %p42, %p43
      %p45 = scmp.ne.s32.totalorder %s33, %s34
      %p46 = scmp.eq.s32.totalorder %s29, 1
      %p47 = por %p45, %p46
      %p49 = scmp.ne.s32.totalorder %s34, %s48
      %p50 = scmp.eq.s32.totalorder %s29, 0
      %p51 = por %p49, %p50
      %s53 = sadd.s32 %s52, 1
      %p56 = scmp.eq.s32.totalorder %s23, 1
      %p57 = scmp.ne.s32.totalorder %s52, %s54
      %p58 = scmp.eq.s32.totalorder %s23, 0
      %p59 = por %p57, %p58
      %p60 = scmp.ne.s32.totalorder %s52, %s54
      %p61 = scmp.eq.s32.totalorder %s28, 1
      %p62 = por %p60, %p61
      %p63 = scmp.ne.s32.totalorder %s54, %s55
      %p64 = scmp.eq.s32.totalorder %s28, 0
      %p65 = por %p63, %p64
      %p66 = scmp.ne.s32.totalorder %s54, %s55
      %p67 = scmp.eq.s32.totalorder %s29, 1
      %p68 = por %p66, %p67
      %p70 = scmp.ne.s32.totalorder %s55, %s69
      %p71 = scmp.eq.s32.totalorder %s29, 0
      %p72 = por %p70, %p71
      %s74 = sadd.s32 %s73, 1
      %p77 = scmp.eq.s32.totalorder %s23, 1
      %p78 = scmp.ne.s32.totalorder %s73, %s75
      %p79 = scmp.eq.s32.totalorder %s23, 0
      %p80 = por %p78, %p79
      %p81 = scmp.ne.s32.totalorder %s73, %s75
      %p82 = scmp.eq.s32.totalorder %s28, 1
      %p83 = por %p81, %p82
      %p84 = scmp.ne.s32.totalorder %s75, %s76
      %p85 = scmp.eq.s32.totalorder %s28, 0
      %p86 = por %p84, %p85
      %p87 = scmp.ne.s32.totalorder %s75, %s76
      %p88 = scmp.eq.s32.totalorder %s29, 1
      %p89 = por %p87, %p88
      %p91 = scmp.ne.s32.totalorder %s76, %s90
      %p92 = scmp.eq.s32.totalorder %s29, 0
      %p93 = por %p91, %p92
      %s95 = sadd.s32 %s94, 1
      %p98 = scmp.eq.s32.totalorder %s23, 1
      %p99 = scmp.ne.s32.totalorder %s94, %s96
      %p100 = scmp.eq.s32.totalorder %s23, 0
      %p101 = por %p99, %p100
      %p102 = scmp.ne.s32.totalorder %s94, %s96
      %p103 = scmp.eq.s32.totalorder %s28, 1
      %p104 = por %p102, %p103
      %p105 = scmp.ne.s32.totalorder %s96, %s97
      %p106 = scmp.eq.s32.totalorder %s28, 0
      %p107 = por %p105, %p106
      %p108 = scmp.ne.s32.totalorder %s96, %s97
      %p109 = scmp.eq.s32.totalorder %s29, 1
      %p110 = por %p108, %p109
      %p112 = scmp.ne.s32.totalorder %s97, %s111
      %p113 = scmp.eq.s32.totalorder %s29, 0
      %p114 = por %p112, %p113
      %s116 = sadd.s32 %s115, 1
      %p119 = scmp.eq.s32.totalorder %s23, 1
      %p120 = scmp.ne.s32.totalorder %s115, %s117
      %p121 = scmp.eq.s32.totalorder %s23, 0
      %p122 = por %p120, %p121
      %p123 = scmp.ne.s32.totalorder %s115, %s117
      %p124 = scmp.eq.s32.totalorder %s28, 1
      %p125 = por %p123, %p124
      %p126 = scmp.ne.s32.totalorder %s117, %s118
      %p127 = scmp.eq.s32.totalorder %s28, 0
      %p128 = por %p126, %p127
      %p129 = scmp.ne.s32.totalorder %s117, %s118
      %p130 = scmp.eq.s32.totalorder %s29, 1
      %p131 = por %p129, %p130
      %p133 = scmp.ne.s32.totalorder %s118, %s132
      %p134 = scmp.eq.s32.totalorder %s29, 0
      %p135 = por %p133, %p134
      %s137 = sadd.s32 %s136, 1
      %p140 = scmp.eq.s32.totalorder %s23, 1
      %p141 = scmp.ne.s32.totalorder %s136, %s138
      %p142 = scmp.eq.s32.totalorder %s23, 0
      %p143 = por %p141, %p142
      %p144 = scmp.ne.s32.totalorder %s136, %s138
      %p145 = scmp.eq.s32.totalorder %s28, 1
      %p146 = por %p144, %p145
      %p147 = scmp.ne.s32.totalorder %s138, %s139
      %p148 = scmp.eq.s32.totalorder %s28, 0
      %p149 = por %p147, %p148
      %p150 = scmp.ne.s32.totalorder %s138, %s139
      %p151 = scmp.eq.s32.totalorder %s29, 1
      %p152 = por %p150, %p151
      %p154 = scmp.ne.s32.totalorder %s139, %s153
      %p155 = scmp.eq.s32.totalorder %s29, 0
      %p156 = por %p154, %p155
      %s157 = ssub.s32 %s23, %s30
      %p158 = scmp.eq.s32.totalorder %s157, 0
      %s160 = sadd.s32 %s159, 1
      %s161 = scalar_select %p158, %s159, %s160
      %p164 = pneg %p158
      %p165 = scmp.eq.s32.totalorder %s23, 1
      %p166 = por %p164, %p165
      %p167 = scmp.ne.s32.totalorder %s159, %s162
      %p168 = scmp.eq.s32.totalorder %s23, 0
      %p169 = por %p167, %p168
      %p170 = scmp.ne.s32.totalorder %s159, %s162
      %p171 = scmp.eq.s32.totalorder %s28, 1
      %p172 = por %p170, %p171
      %p173 = scmp.ne.s32.totalorder %s162, %s163
      %p174 = scmp.eq.s32.totalorder %s28, 0
      %p175 = por %p173, %p174
      %p176 = scmp.ne.s32.totalorder %s162, %s163
      %p177 = scmp.eq.s32.totalorder %s29, 1
      %p178 = por %p176, %p177
      %p180 = scmp.ne.s32.totalorder %s163, %s179
      %p181 = scmp.eq.s32.totalorder %s29, 0
      %p182 = por %p180, %p181
      %s183 = ssub.s32 %s23, %s30
      %p184 = scmp.eq.s32.totalorder %s183, 0
      %s186 = sadd.s32 %s185, 1
      %s187 = scalar_select %p184, %s185, %s186
      %p190 = pneg %p184
      %p191 = scmp.eq.s32.totalorder %s23, 1
      %p192 = por %p190, %p191
      %p193 = scmp.ne.s32.totalorder %s185, %s188
      %p194 = scmp.eq.s32.totalorder %s23, 0
      %p195 = por %p193, %p194
      %p196 = scmp.ne.s32.totalorder %s185, %s188
      %p197 = scmp.eq.s32.totalorder %s28, 1
      %p198 = por %p196, %p197
      %p199 = scmp.ne.s32.totalorder %s188, %s189
      %p200 = scmp.eq.s32.totalorder %s28, 0
      %p201 = por %p199, %p200
      %p202 = scmp.ne.s32.totalorder %s188, %s189
      %p203 = scmp.eq.s32.totalorder %s29, 1
      %p204 = por %p202, %p203
      %p206 = scmp.ne.s32.totalorder %s189, %s205
      %p207 = scmp.eq.s32.totalorder %s29, 0
      %p208 = por %p206, %p207
      %s209 = ssub.s32 %s23, %s30
      %p210 = scmp.eq.s32.totalorder %s209, 0
      %s212 = sadd.s32 %s211, 1
      %s213 = scalar_select %p210, %s211, %s212
      %p216 = pneg %p210
      %p217 = scmp.eq.s32.totalorder %s23, 1
      %p218 = por %p216, %p217
      %p219 = scmp.ne.s32.totalorder %s211, %s214
      %p220 = scmp.eq.s32.totalorder %s23, 0
      %p221 = por %p219, %p220
      %p222 = scmp.ne.s32.totalorder %s211, %s214
      %p223 = scmp.eq.s32.totalorder %s28, 1
      %p224 = por %p222, %p223
      %p225 = scmp.ne.s32.totalorder %s214, %s215
      %p226 = scmp.eq.s32.totalorder %s28, 0
      %p227 = por %p225, %p226
      %p228 = scmp.ne.s32.totalorder %s214, %s215
      %p229 = scmp.eq.s32.totalorder %s29, 1
      %p230 = por %p228, %p229
      %p232 = scmp.ne.s32.totalorder %s215, %s231
      %p233 = scmp.eq.s32.totalorder %s29, 0
      %p234 = por %p232, %p233
      %s235 = ssub.s32 %s23, %s30
      %p236 = scmp.eq.s32.totalorder %s235, 0
      %s238 = sadd.s32 %s237, 1
      %s239 = scalar_select %p236, %s237, %s238
      %p242 = pneg %p236
      %p243 = scmp.eq.s32.totalorder %s23, 1
      %p244 = por %p242, %p243
      %p245 = scmp.ne.s32.totalorder %s237, %s240
      %p246 = scmp.eq.s32.totalorder %s23, 0
      %p247 = por %p245, %p246
      %p248 = scmp.ne.s32.totalorder %s237, %s240
      %p249 = scmp.eq.s32.totalorder %s28, 1
      %p250 = por %p248, %p249
      %p251 = scmp.ne.s32.totalorder %s240, %s241
      %p252 = scmp.eq.s32.totalorder %s28, 0
      %p253 = por %p251, %p252
      %p254 = scmp.ne.s32.totalorder %s240, %s241
      %p255 = scmp.eq.s32.totalorder %s29, 1
      %p256 = por %p254, %p255
      %p258 = scmp.ne.s32.totalorder %s241, %s257
      %p259 = scmp.eq.s32.totalorder %s29, 0
      %p260 = por %p258, %p259
      %s261 = ssub.s32 %s23, %s30
      %p262 = scmp.eq.s32.totalorder %s261, 0
      %s264 = sadd.s32 %s263, 1
      %s265 = scalar_select %p262, %s263, %s264
      %p268 = pneg %p262
      %p269 = scmp.eq.s32.totalorder %s23, 1
      %p270 = por %p268, %p269
      %p271 = scmp.ne.s32.totalorder %s263, %s266
      %p272 = scmp.eq.s32.totalorder %s23, 0
      %p273 = por %p271, %p272
      %p274 = scmp.ne.s32.totalorder %s263, %s266
      %p275 = scmp.eq.s32.totalorder %s28, 1
      %p276 = por %p274, %p275
      %p277 = scmp.ne.s32.totalorder %s266, %s267
      %p278 = scmp.eq.s32.totalorder %s28, 0
      %p279 = por %p277, %p278
      %p280 = scmp.ne.s32.totalorder %s266, %s267
      %p281 = scmp.eq.s32.totalorder %s29, 1
      %p282 = por %p280, %p281
      %p284 = scmp.ne.s32.totalorder %s267, %s283
      %p285 = scmp.eq.s32.totalorder %s29, 0
      %p286 = por %p284, %p285
      %s287 = ssub.s32 %s23, %s30
      %p288 = scmp.eq.s32.totalorder %s287, 0
      %s290 = sadd.s32 %s289, 1
      %s291 = scalar_select %p288, %s289, %s290
      %p294 = pneg %p288
      %p295 = scmp.eq.s32.totalorder %s23, 1
      %p296 = por %p294, %p295
      %p297 = scmp.ne.s32.totalorder %s289, %s292
      %p298 = scmp.eq.s32.totalorder %s23, 0
      %p299 = por %p297, %p298
      %p300 = scmp.ne.s32.totalorder %s289, %s292
      %p301 = scmp.eq.s32.totalorder %s28, 1
      %p302 = por %p300, %p301
      %p303 = scmp.ne.s32.totalorder %s292, %s293
      %p304 = scmp.eq.s32.totalorder %s28, 0
      %p305 = por %p303, %p304
      %p306 = scmp.ne.s32.totalorder %s292, %s293
      %p307 = scmp.eq.s32.totalorder %s29, 1
      %p308 = por %p306, %p307
      %p310 = scmp.ne.s32.totalorder %s293, %s309
      %p311 = scmp.eq.s32.totalorder %s29, 0
      %p312 = por %p310, %p311
      %s314 = sadd.s32 %s313, 1
      %p317 = scmp.eq.s32.totalorder %s23, 1
      %p318 = scmp.ne.s32.totalorder %s313, %s315
      %p319 = scmp.eq.s32.totalorder %s23, 0
      %p320 = por %p318, %p319
      %p321 = scmp.ne.s32.totalorder %s313, %s315
      %p322 = scmp.eq.s32.totalorder %s28, 1
      %p323 = por %p321, %p322
      %p324 = scmp.ne.s32.totalorder %s315, %s316
      %p325 = scmp.eq.s32.totalorder %s28, 0
      %p326 = por %p324, %p325
      %p327 = scmp.ne.s32.totalorder %s315, %s316
      %p328 = scmp.eq.s32.totalorder %s29, 1
      %p329 = por %p327, %p328
      %p331 = scmp.ne.s32.totalorder %s316, %s330
      %p332 = scmp.eq.s32.totalorder %s29, 0
      %p333 = por %p331, %p332
      %s335 = sadd.s32 %s334, 1
      %p338 = scmp.eq.s32.totalorder %s23, 1
      %p339 = scmp.ne.s32.totalorder %s334, %s336
      %p340 = scmp.eq.s32.totalorder %s23, 0
      %p341 = por %p339, %p340
      %p342 = scmp.ne.s32.totalorder %s334, %s336
      %p343 = scmp.eq.s32.totalorder %s28, 1
      %p344 = por %p342, %p343
      %p345 = scmp.ne.s32.totalorder %s336, %s337
      %p346 = scmp.eq.s32.totalorder %s28, 0
      %p347 = por %p345, %p346
      %p348 = scmp.ne.s32.totalorder %s336, %s337
      %p349 = scmp.eq.s32.totalorder %s29, 1
      %p350 = por %p348, %p349
      %p352 = scmp.ne.s32.totalorder %s337, %s351
      %p353 = scmp.eq.s32.totalorder %s29, 0
      %p354 = por %p352, %p353
      %s356 = sadd.s32 %s355, 1
      %p359 = scmp.eq.s32.totalorder %s23, 1
      %p360 = scmp.ne.s32.totalorder %s355, %s357
      %p361 = scmp.eq.s32.totalorder %s23, 0
      %p362 = por %p360, %p361
      %p363 = scmp.ne.s32.totalorder %s355, %s357
      %p364 = scmp.eq.s32.totalorder %s28, 1
      %p365 = por %p363, %p364
      %p366 = scmp.ne.s32.totalorder %s357, %s358
      %p367 = scmp.eq.s32.totalorder %s28, 0
      %p368 = por %p366, %p367
      %p369 = scmp.ne.s32.totalorder %s357, %s358
      %p370 = scmp.eq.s32.totalorder %s29, 1
      %p371 = por %p369, %p370
      %p373 = scmp.ne.s32.totalorder %s358, %s372
      %p374 = scmp.eq.s32.totalorder %s29, 0
      %p375 = por %p373, %p374
      %p376 = scmp.le.s32.totalorder 1, %s23
      %p377 = scmp.lt.s32.totalorder %s23, 3
      %p378 = pnand %p376, %p377
      %p379 = pneg %p378
      // Predicated region
      $region9: #{llama_causal_lm_loss.1} parent=5 // pred_check
        _
      $region10: #{llama_causal_lm_loss.1} parent=5 // pred_check_branch
        %381 = sbr.rel (%p378) target = $region12
      $region11: #{llama_causal_lm_loss.1} parent=5 // pred_region
        %s382 = ssub.s32 %s23, 1
        // Predicated region
        $region13: #{llama_causal_lm_loss.1} parent=11 // pred_check
          %p383 = pneg %p44
        $region14: #{llama_causal_lm_loss.1} parent=11 // pred_check_branch
          %385 = sbr.rel (%p383) target = $region16
        $region15: #{llama_causal_lm_loss.1} parent=11 // pred_region
          _
        $region16: #{llama_causal_lm_loss.1} parent=11 // pred_fallthru
          _
        // Predicated region
        $region17: #{llama_causal_lm_loss.1} parent=11 // pred_check
          %p386 = pneg %p65
        $region18: #{llama_causal_lm_loss.1} parent=11 // pred_check_branch
          %388 = sbr.rel (%p386) target = $region20
        $region19: #{llama_causal_lm_loss.1} parent=11 // pred_region
          _
        $region20: #{llama_causal_lm_loss.1} parent=11 // pred_fallthru
          _
        // Predicated region
        $region21: #{llama_causal_lm_loss.1} parent=11 // pred_check
          %p389 = pneg %p86
        $region22: #{llama_causal_lm_loss.1} parent=11 // pred_check_branch
          %391 = sbr.rel (%p389) target = $region24
        $region23: #{llama_causal_lm_loss.1} parent=11 // pred_region
          _
        $region24: #{llama_causal_lm_loss.1} parent=11 // pred_fallthru
          _
        // Predicated region
        $region25: #{llama_causal_lm_loss.1} parent=11 // pred_check
          %p392 = pneg %p107
        $region26: #{llama_causal_lm_loss.1} parent=11 // pred_check_branch
          %394 = sbr.rel (%p392) target = $region28
        $region27: #{llama_causal_lm_loss.1} parent=11 // pred_region
          _
        $region28: #{llama_causal_lm_loss.1} parent=11 // pred_fallthru
          _
        // Predicated region
        $region29: #{llama_causal_lm_loss.1} parent=11 // pred_check
          %p395 = pneg %p128
        $region30: #{llama_causal_lm_loss.1} parent=11 // pred_check_branch
          %397 = sbr.rel (%p395) target = $region32
        $region31: #{llama_causal_lm_loss.1} parent=11 // pred_region
          %s399 = ssub.s32 1024, 1024
          %400 = vsyncadd [#allocation5], %s399
          %s401 = sshll.u32 [#allocation4], 4
          %s402 = int_to_ptr.vmem [resolvable:$true] %s401
          %407 = dma.hbm_to_vmem [thread:$0]  %s4, 1024, %s402, [#allocation5], 256, 256, 16
        $region32: #{llama_causal_lm_loss.1} parent=11 // pred_fallthru
          _
        // Predicated region
        $region33: #{llama_causal_lm_loss.1} parent=11 // pred_check
          %p408 = pneg %p149
        $region34: #{llama_causal_lm_loss.1} parent=11 // pred_check_branch
          %410 = sbr.rel (%p408) target = $region36
        $region35: #{llama_causal_lm_loss.1} parent=11 // pred_region
          %s412 = ssub.s32 4096, 4096
          %413 = vsyncadd [#allocation8], %s412
          %s414 = sshll.u32 [#allocation7], 4
          %s415 = int_to_ptr.vmem [resolvable:$true] %s414
          %420 = dma.hbm_to_vmem [thread:$0]  %s5, 4096, %s415, [#allocation8], 128, 128, 8
        $region36: #{llama_causal_lm_loss.1} parent=11 // pred_fallthru
          _
        // Predicated region
        $region37: #{llama_causal_lm_loss.1} parent=11 // pred_check
          %p421 = pneg %p326
        $region38: #{llama_causal_lm_loss.1} parent=11 // pred_check_branch
          %423 = sbr.rel (%p421) target = $region40
        $region39: #{llama_causal_lm_loss.1} parent=11 // pred_region
          _
        $region40: #{llama_causal_lm_loss.1} parent=11 // pred_fallthru
          _
        // Predicated region
        $region41: #{llama_causal_lm_loss.1} parent=11 // pred_check
          %p424 = pneg %p347
        $region42: #{llama_causal_lm_loss.1} parent=11 // pred_check_branch
          %426 = sbr.rel (%p424) target = $region44
        $region43: #{llama_causal_lm_loss.1} parent=11 // pred_region
          %s428 = ssub.s32 2048, 2048
          %429 = vsyncadd [#allocation8], %s428
          %s430 = sshll.u32 [#allocation12], 4
          %s431 = int_to_ptr.vmem [resolvable:$true] %s430
          %436 = dma.hbm_to_vmem [thread:$0]  %s13, 2048, %s431, [#allocation8], 128, 128, 8
        $region44: #{llama_causal_lm_loss.1} parent=11 // pred_fallthru
          _
      $region12: #{llama_causal_lm_loss.1} parent=5 // pred_fallthru
        _
      %p437 = scmp.lt.s32.totalorder %s23, 2
      // Predicated region
      $region45: #{llama_causal_lm_loss.1} parent=5 // pred_check
        %p438 = pneg %p437
      $region46: #{llama_causal_lm_loss.1} parent=5 // pred_check_branch
        %440 = sbr.rel (%p438) target = $region48
      $region47: #{llama_causal_lm_loss.1} parent=5 // pred_region
        // Predicated region
        $region49: #{llama_causal_lm_loss.1} parent=47 // pred_check
          %p441 = pneg %p169
        $region50: #{llama_causal_lm_loss.1} parent=47 // pred_check_branch
          %443 = sbr.rel (%p441) target = $region52
        $region51: #{llama_causal_lm_loss.1} parent=47 // pred_region
          %p444 = scmp.lt.s32.totalorder %s23, 1
          %s445 = scalar_select %p444, %s23, 1
          %s446 = smul.addr %s445, 48
          %s447 = smul.addr %s446, 4
          %s448 = scalar_lea.vmem %s6, %s447
        $region52: #{llama_causal_lm_loss.1} parent=47 // pred_fallthru
          _
        // Predicated region
        $region53: #{llama_causal_lm_loss.1} parent=47 // pred_check
          %p449 = pneg %p195
        $region54: #{llama_causal_lm_loss.1} parent=47 // pred_check_branch
          %451 = sbr.rel (%p449) target = $region56
        $region55: #{llama_causal_lm_loss.1} parent=47 // pred_region
          %s452 = sand.u32 %s23, 1
          %s453 = scalar_lea.sflag [#allocation5], %s452
          %s454 = sand.u32 %s185, 1
          %s455 = smul.addr %s454, 64
          %s456 = scalar_lea.vmem [#allocation9], %s455
          %s458 = ssub.s32 1024, 1024
          %459 = vsyncadd %s453, %s458
          %s460 = smul.addr %s23, 16
          %s461 = smul.addr %s460, 64
          %s462 = scalar_lea.hbm %s7, %s461
          %s463 = sshll.u32 %s456, 4
          %s464 = int_to_ptr.vmem [resolvable:$true] %s463
          %469 = dma.hbm_to_vmem [thread:$0]  %s462, 1024, %s464, %s453, 64, 64, 4
        $region56: #{llama_causal_lm_loss.1} parent=47 // pred_fallthru
          _
        // Predicated region
        $region57: #{llama_causal_lm_loss.1} parent=47 // pred_check
          %p470 = pneg %p221
        $region58: #{llama_causal_lm_loss.1} parent=47 // pred_check_branch
          %472 = sbr.rel (%p470) target = $region60
        $region59: #{llama_causal_lm_loss.1} parent=47 // pred_region
          %s473 = sand.u32 %s23, 1
          %s474 = scalar_lea.sflag [#allocation5], %s473
          %s475 = sand.u32 %s211, 1
          %s476 = smul.addr %s475, 256
          %s477 = scalar_lea.vmem [#allocation10], %s476
          %s479 = ssub.s32 4096, 4096
          %480 = vsyncadd %s474, %s479
          %s481 = smul.addr %s23, 64
          %s482 = smul.addr %s481, 64
          %s483 = scalar_lea.hbm %s8, %s482
          %s484 = sshll.u32 %s477, 4
          %s485 = int_to_ptr.vmem [resolvable:$true] %s484
          %490 = dma.hbm_to_vmem [thread:$0]  %s483, 4096, %s485, %s474, 256, 256, 16
        $region60: #{llama_causal_lm_loss.1} parent=47 // pred_fallthru
          _
        // Predicated region
        $region61: #{llama_causal_lm_loss.1} parent=47 // pred_check
          %p491 = pneg %p247
        $region62: #{llama_causal_lm_loss.1} parent=47 // pred_check_branch
          %493 = sbr.rel (%p491) target = $region64
        $region63: #{llama_causal_lm_loss.1} parent=47 // pred_region
          %s494 = sand.u32 %s23, 1
          %s495 = scalar_lea.sflag [#allocation5], %s494
          %s496 = sand.u32 %s237, 1
          %s497 = smul.addr %s496, 128
          %s498 = scalar_lea.vmem [#allocation11], %s497
          %s500 = ssub.s32 2048, 2048
          %501 = vsyncadd %s495, %s500
          %s502 = smul.addr %s23, 32
          %s503 = smul.addr %s502, 64
          %s504 = scalar_lea.hbm %s9, %s503
          %s505 = sshll.u32 %s498, 4
          %s506 = int_to_ptr.vmem [resolvable:$true] %s505
          %511 = dma.hbm_to_vmem [thread:$0]  %s504, 2048, %s506, %s495, 64, 64, 4
        $region64: #{llama_causal_lm_loss.1} parent=47 // pred_fallthru
          _
        // Predicated region
        $region65: #{llama_causal_lm_loss.1} parent=47 // pred_check
          %p512 = pneg %p273
        $region66: #{llama_causal_lm_loss.1} parent=47 // pred_check_branch
          %514 = sbr.rel (%p512) target = $region68
        $region67: #{llama_causal_lm_loss.1} parent=47 // pred_region
          %p515 = scmp.lt.s32.totalorder %s23, 1
          %s516 = scalar_select %p515, %s23, 1
          %s517 = scalar_lea.vmem %s10, %s516
        $region68: #{llama_causal_lm_loss.1} parent=47 // pred_fallthru
          _
        // Predicated region
        $region69: #{llama_causal_lm_loss.1} parent=47 // pred_check
          %p518 = pneg %p299
        $region70: #{llama_causal_lm_loss.1} parent=47 // pred_check_branch
          %520 = sbr.rel (%p518) target = $region72
        $region71: #{llama_causal_lm_loss.1} parent=47 // pred_region
          %p521 = scmp.lt.s32.totalorder %s23, 1
          %s522 = scalar_select %p521, %s23, 1
          %s523 = scalar_lea.vmem %s11, %s522
        $region72: #{llama_causal_lm_loss.1} parent=47 // pred_fallthru
          _
      $region48: #{llama_causal_lm_loss.1} parent=5 // pred_fallthru
        _
      %p524 = scmp.le.s32.totalorder 1, %s23
      %p525 = scmp.lt.s32.totalorder %s23, 3
      %p526 = pnand %p524, %p525
      %p527 = pneg %p526
      // Predicated region
      $region73: #{llama_causal_lm_loss.1} parent=5 // pred_check
        _
      $region74: #{llama_causal_lm_loss.1} parent=5 // pred_check_branch
        %529 = sbr.rel (%p526) target = $region76
      $region75: #{llama_causal_lm_loss.1} parent=5 // pred_region
        %s530 = ssub.s32 %s23, 1
        // Predicated region
        $region77: #{llama_causal_lm_loss.1} parent=75 // pred_check
          %p531 = pneg %p128
        $region78: #{llama_causal_lm_loss.1} parent=75 // pred_check_branch
          %533 = sbr.rel (%p531) target = $region80
        $region79: #{llama_causal_lm_loss.1} parent=75 // pred_region
          %534 = dma.done [#allocation5], 1024
        $region80: #{llama_causal_lm_loss.1} parent=75 // pred_fallthru
          _
        // Predicated region
        $region81: #{llama_causal_lm_loss.1} parent=75 // pred_check
          %p535 = pneg %p149
        $region82: #{llama_causal_lm_loss.1} parent=75 // pred_check_branch
          %537 = sbr.rel (%p535) target = $region84
        $region83: #{llama_causal_lm_loss.1} parent=75 // pred_region
          %538 = dma.done [#allocation8], 4096
        $region84: #{llama_causal_lm_loss.1} parent=75 // pred_fallthru
          _
        %s539 = sand.u32 %s28, 1
        %s540 = scalar_lea.sflag [#allocation5], %s539
        %s541 = sand.u32 %s188, 1
        %s542 = smul.addr %s541, 64
        %s543 = scalar_lea.vmem [#allocation9], %s542
        // Predicated region
        $region85: #{llama_causal_lm_loss.1} parent=75 // pred_check
          %p544 = pneg %p201
        $region86: #{llama_causal_lm_loss.1} parent=75 // pred_check_branch
          %546 = sbr.rel (%p544) target = $region88
        $region87: #{llama_causal_lm_loss.1} parent=75 // pred_region
          %547 = dma.done %s540, 1024
        $region88: #{llama_causal_lm_loss.1} parent=75 // pred_fallthru
          _
        %s548 = sand.u32 %s28, 1
        %s549 = scalar_lea.sflag [#allocation5], %s548
        %s550 = sand.u32 %s214, 1
        %s551 = smul.addr %s550, 256
        %s552 = scalar_lea.vmem [#allocation10], %s551
        // Predicated region
        $region89: #{llama_causal_lm_loss.1} parent=75 // pred_check
          %p553 = pneg %p227
        $region90: #{llama_causal_lm_loss.1} parent=75 // pred_check_branch
          %555 = sbr.rel (%p553) target = $region92
        $region91: #{llama_causal_lm_loss.1} parent=75 // pred_region
          %556 = dma.done %s549, 4096
        $region92: #{llama_causal_lm_loss.1} parent=75 // pred_fallthru
          _
        %s557 = sand.u32 %s28, 1
        %s558 = scalar_lea.sflag [#allocation5], %s557
        %s559 = sand.u32 %s240, 1
        %s560 = smul.addr %s559, 128
        %s561 = scalar_lea.vmem [#allocation11], %s560
        // Predicated region
        $region93: #{llama_causal_lm_loss.1} parent=75 // pred_check
          %p562 = pneg %p253
        $region94: #{llama_causal_lm_loss.1} parent=75 // pred_check_branch
          %564 = sbr.rel (%p562) target = $region96
        $region95: #{llama_causal_lm_loss.1} parent=75 // pred_region
          %565 = dma.done %s558, 2048
        $region96: #{llama_causal_lm_loss.1} parent=75 // pred_fallthru
          _
        // Predicated region
        $region97: #{llama_causal_lm_loss.1} parent=75 // pred_check
          %p566 = pneg %p347
        $region98: #{llama_causal_lm_loss.1} parent=75 // pred_check_branch
          %568 = sbr.rel (%p566) target = $region100
        $region99: #{llama_causal_lm_loss.1} parent=75 // pred_region
          %569 = dma.done [#allocation8], 2048
        $region100: #{llama_causal_lm_loss.1} parent=75 // pred_fallthru
          _
        %p570 = pneg %p44
        %p571 = pneg %p41
        %p572 = pneg %p65
        %p573 = pneg %p62
        %p574 = pneg %p86
        %p575 = pneg %p83
        %p576 = pneg %p107
        %p577 = pneg %p104
        %p578 = pneg %p128
        %p579 = pneg %p125
        %p580 = pneg %p149
        %p581 = pneg %p146
        %p582 = scmp.lt.s32.totalorder %s28, 1
        %s583 = scalar_select %p582, %s28, 1
        %s584 = smul.addr %s583, 48
        %s585 = smul.addr %s584, 4
        %s586 = scalar_lea.vmem %s6, %s585
        %p587 = pneg %p175
        %p588 = pneg %p172
        %s589 = sand.u32 %s28, 1
        %s590 = scalar_lea.sflag [#allocation5], %s589
        %s591 = sand.u32 %s188, 1
        %s592 = smul.addr %s591, 64
        %s593 = scalar_lea.vmem [#allocation9], %s592
        %p594 = pneg %p201
        %p595 = pneg %p198
        %s596 = sand.u32 %s28, 1
        %s597 = scalar_lea.sflag [#allocation5], %s596
        %s598 = sand.u32 %s214, 1
        %s599 = smul.addr %s598, 256
        %s600 = scalar_lea.vmem [#allocation10], %s599
        %p601 = pneg %p227
        %p602 = pneg %p224
        %s603 = sand.u32 %s28, 1
        %s604 = scalar_lea.sflag [#allocation5], %s603
        %s605 = sand.u32 %s240, 1
        %s606 = smul.addr %s605, 128
        %s607 = scalar_lea.vmem [#allocation11], %s606
        %p608 = pneg %p253
        %p609 = pneg %p250
        %p610 = scmp.lt.s32.totalorder %s28, 1
        %s611 = scalar_select %p610, %s28, 1
        %s612 = scalar_lea.vmem %s10, %s611
        %p613 = pneg %p279
        %p614 = pneg %p276
        %p615 = scmp.lt.s32.totalorder %s28, 1
        %s616 = scalar_select %p615, %s28, 1
        %s617 = scalar_lea.vmem %s11, %s616
        %p618 = pneg %p305
        %p619 = pneg %p302
        %p620 = pneg %p326
        %p621 = pneg %p323
        %p622 = pneg %p347
        %p623 = pneg %p344
        %p624 = pneg %p368
        %p625 = pneg %p365
        %p626 = scmp.lt.s32.totalorder %s28, 1
        %s627 = scalar_select %p626, %s28, 1
        %s628 = smul.addr %s627, 48
        %s629 = smul.addr %s628, 4
        %s630 = scalar_lea.vmem %s6, %s629
        %p631 = scmp.lt.s32.totalorder %s28, 1
        %s632 = scalar_select %p631, %s28, 1
        %s633 = scalar_lea.vmem %s10, %s632
        %p634 = scmp.lt.s32.totalorder %s28, 1
        %s635 = scalar_select %p634, %s28, 1
        %s636 = scalar_lea.vmem %s11, %s635
        %p638 = scmp.eq.s32.totalorder %s28, 0
        // Predicated region
        $region101: #{llama_causal_lm_loss.1} parent=75 // pred_check
          %p639 = pneg %p638
        $region102: #{llama_causal_lm_loss.1} parent=75 // pred_check_branch
          %641 = sbr.rel (%p639) target = $region104
        $region103: #{llama_causal_lm_loss.1} parent=75 // pred_region
          %v642 = vld [vmem:[%s0] sm:$0xff]
          %v643 = vld [vmem:[%s0 + $0x8] sm:$0xff]
          %v644 = vld [vmem:[%s0 + $0x10] sm:$0xff]
          %v645 = vld [vmem:[%s0 + $0x18] sm:$0xff]
          %646 = vst [vmem:[#allocation2] sm:$0xff] %v642
          %647 = vst [vmem:[#allocation2 + $0x8] sm:$0xff] %v643
          %648 = vst [vmem:[#allocation2 + $0x10] sm:$0xff] %v644
          %649 = vst [vmem:[#allocation2 + $0x18] sm:$0xff] %v645
          %v650 = vlaneseq
          %v651 = vshrl.u32 %v650, 7
          %v652 = vadd.s32 %v651, 8
          %v653 = vadd.s32 %v651, 16
          %v654 = vadd.s32 %v651, 24
          %v655 = vlaneseq
          %v656 = vand.u32 %v655, 127
          %657 = vxpose.xlu0.b32.start [1/16] 0, 128
          %658 = vxpose.xlu0.b32.cont [2/16] 0, 128
          %659 = vxpose.xlu0.b32.cont [3/16] 1, 128
          %660 = vxpose.xlu0.b32.cont [4/16] 1, 128
          %661 = vxpose.xlu0.b32.cont [5/16] 0, 128
          %662 = vxpose.xlu0.b32.cont [6/16] 0, 128
          %663 = vxpose.xlu0.b32.cont [7/16] 0, 128
          %664 = vxpose.xlu0.b32.cont [8/16] 0, 128
          %665 = vxpose.xlu0.b32.cont [9/16] 0, 128
          %666 = vxpose.xlu0.b32.cont [10/16] 0, 128
          %667 = vxpose.xlu0.b32.cont [11/16] 0, 128
          %668 = vxpose.xlu0.b32.cont [12/16] 0, 128
          %669 = vxpose.xlu0.b32.cont [13/16] 0, 128
          %670 = vxpose.xlu0.b32.cont [14/16] 0, 128
          %671 = vxpose.xlu0.b32.cont [15/16] 0, 128
          %672 = vxpose.xlu0.b32.end [16/16] 0, 128
          %v673 = vpop.trf.xlu0
          %v674 = vpop.trf.xlu0
          %v675 = vpop.trf.xlu0
          %v676 = vpop.trf.xlu0
          %v677 = vpop.trf.xlu0
          %v678 = vpop.trf.xlu0
          %v679 = vpop.trf.xlu0
          %v680 = vpop.trf.xlu0
          %v681 = vpop.trf.xlu0
          %v682 = vpop.trf.xlu0
          %v683 = vpop.trf.xlu0
          %v684 = vpop.trf.xlu0
          %v685 = vpop.trf.xlu0
          %v686 = vpop.trf.xlu0
          %v687 = vpop.trf.xlu0
          %v688 = vpop.trf.xlu0
          %vm689 = vcmp.eq.s32.totalorder %v673, 0
          %vm690 = vcmp.eq.s32.totalorder %v674, 0
          %vm691 = vcmp.eq.s32.totalorder %v675, 1
          %vm692 = vcmp.eq.s32.totalorder %v676, 1
          %vm693 = vcmp.le.s32.totalorder %v656, %v651
          %vm694 = vcmp.le.s32.totalorder %v656, %v652
          %vm695 = vcmp.le.s32.totalorder %v656, %v653
          %vm696 = vcmp.le.s32.totalorder %v656, %v654
          %vm697 = vmand %vm689, %vm693
          %vm698 = vmand %vm690, %vm694
          %vm699 = vmand %vm691, %vm695
          %vm700 = vmand %vm692, %vm696
          %v701 = vld [vmem:[%s1] sm:$0x1]
          %v702 = vsub.f32 %v701, 1.0
          %v703 = vmul.f32 %v702, 1e+09
          %v704 = vsel %vm697, 0.0, -1e+09
          %v705 = vsel %vm698, 0.0, -1e+09
          %v706 = vsel %vm699, 0.0, -1e+09
          %v707 = vsel %vm700, 0.0, -1e+09
          %v709 = vlaneseq
          %v710 = vshrl.u32 %v709, 7
          %v711 = vsub.s32 0, %v710
          %v712 = vrot.slane %v703, %v711
          %v714 = vadd.f32 %v704, %v712
          %v715 = vadd.f32 %v705, %v712
          %v716 = vadd.f32 %v706, %v712
          %v717 = vadd.f32 %v707, %v712
          %vm718 = vcmask 261120
          %719 = vst.msk [vmem:[#allocation3] sm:$0xff] %vm718, %v714
          %720 = vst.msk [vmem:[#allocation3 + $0x8] sm:$0xff] %vm718, %v715
          %721 = vst.msk [vmem:[#allocation3 + $0x10] sm:$0xff] %vm718, %v716
          %722 = vst.msk [vmem:[#allocation3 + $0x18] sm:$0xff] %vm718, %v717
        $region104: #{llama_causal_lm_loss.1} parent=75 // pred_fallthru
          _
        %v723 = vld [vmem:[#allocation2] sm:$0xff]
        %v724 = vld [vmem:[#allocation2 + $0x8] sm:$0xff]
        %v725 = vld [vmem:[#allocation2 + $0x10] sm:$0xff]
        %v726 = vld [vmem:[#allocation2 + $0x18] sm:$0xff]
        %v727 = vld [vmem:[%s633] sm:$0x1]
        %v728 = vmul.f32 %v723, %v723
        %v729 = vmul.f32 %v724, %v724
        %v730 = vmul.f32 %v725, %v725
        %v731 = vmul.f32 %v726, %v726
        %732 = vadd.xlane.f32.xlu0 %v728
        %v733 = vpop.xlane.xlu0 %732
        %734 = vadd.xlane.f32.xlu0 %v729
        %v735 = vpop.xlane.xlu0 %734
        %736 = vadd.xlane.f32.xlu0 %v730
        %v737 = vpop.xlane.xlu0 %736
        %738 = vadd.xlane.f32.xlu0 %v731
        %v739 = vpop.xlane.xlu0 %738
        %v740 = vrcp.pop 128.0
        %v741 = vmul.f32 %v733, %v740
        %v742 = vmul.f32 %v735, %v740
        %v743 = vmul.f32 %v737, %v740
        %v744 = vmul.f32 %v739, %v740
        %v745 = vadd.f32 %v741, 1e-06
        %v746 = vadd.f32 %v742, 1e-06
        %v747 = vadd.f32 %v743, 1e-06
        %v748 = vadd.f32 %v744, 1e-06
        %v749 = vrsqrt.pop %v745
        %v750 = vrsqrt.pop %v746
        %v751 = vrsqrt.pop %v747
        %v752 = vrsqrt.pop %v748
        %v753 = vmul.f32 %v723, %v749
        %v754 = vmul.f32 %v724, %v750
        %v755 = vmul.f32 %v725, %v751
        %v756 = vmul.f32 %v726, %v752
        %v758 = vlaneseq
        %v759 = vshrl.u32 %v758, 7
        %v760 = vsub.s32 0, %v759
        %v761 = vrot.slane %v727, %v760
        %v763 = vmul.f32 %v753, %v761
        %v764 = vmul.f32 %v754, %v761
        %v765 = vmul.f32 %v755, %v761
        %v766 = vmul.f32 %v756, %v761
        %v767 = vld [vmem:[%s630] sm:$0xff]
        %v768 = vld [vmem:[%s630 + $0x8] sm:$0xf]
        %v769 = vld [vmem:[%s630 + $0xc] sm:$0xff]
        %v770 = vld [vmem:[%s630 + $0x14] sm:$0xf]
        %v771 = vld [vmem:[%s630 + $0x18] sm:$0xff]
        %v772 = vld [vmem:[%s630 + $0x20] sm:$0xf]
        %v773 = vld [vmem:[%s630 + $0x24] sm:$0xff]
        %v774 = vld [vmem:[%s630 + $0x2c] sm:$0xf]
        %v775 = vld [vmem:[%s630 + $0x30] sm:$0xff]
        %v776 = vld [vmem:[%s630 + $0x38] sm:$0xf]
        %v777 = vld [vmem:[%s630 + $0x3c] sm:$0xff]
        %v778 = vld [vmem:[%s630 + $0x44] sm:$0xf]
        %v779 = vld [vmem:[%s630 + $0x48] sm:$0xff]
        %v780 = vld [vmem:[%s630 + $0x50] sm:$0xf]
        %v781 = vld [vmem:[%s630 + $0x54] sm:$0xff]
        %v782 = vld [vmem:[%s630 + $0x5c] sm:$0xf]
        %v783 = vld [vmem:[%s630 + $0x60] sm:$0xff]
        %v784 = vld [vmem:[%s630 + $0x68] sm:$0xf]
        %v785 = vld [vmem:[%s630 + $0x6c] sm:$0xff]
        %v786 = vld [vmem:[%s630 + $0x74] sm:$0xf]
        %v787 = vld [vmem:[%s630 + $0x78] sm:$0xff]
        %v788 = vld [vmem:[%s630 + $0x80] sm:$0xf]
        %v789 = vld [vmem:[%s630 + $0x84] sm:$0xff]
        %v790 = vld [vmem:[%s630 + $0x8c] sm:$0xf]
        %v791 = vld [vmem:[%s630 + $0x90] sm:$0xff]
        %v792 = vld [vmem:[%s630 + $0x98] sm:$0xf]
        %v793 = vld [vmem:[%s630 + $0x9c] sm:$0xff]
        %v794 = vld [vmem:[%s630 + $0xa4] sm:$0xf]
        %v795 = vld [vmem:[%s630 + $0xa8] sm:$0xff]
        %v796 = vld [vmem:[%s630 + $0xb0] sm:$0xf]
        %v797 = vld [vmem:[%s630 + $0xb4] sm:$0xff]
        %v798 = vld [vmem:[%s630 + $0xbc] sm:$0xf]
        %v799 = vpack.c.bf16 %v764, %v763
        %v800 = vpack.c.bf16 %v766, %v765
        %v833 = vunpack.c.l.b16 %v767
        %v834 = vunpack.c.h.b16 %v767
        %v835 = vunpack.c.l.b16 %v768
        %v836 = vunpack.c.l.b16 %v769
        %v837 = vunpack.c.h.b16 %v769
        %v838 = vunpack.c.l.b16 %v770
        %v839 = vunpack.c.l.b16 %v771
        %v840 = vunpack.c.h.b16 %v771
        %v841 = vunpack.c.l.b16 %v772
        %v842 = vunpack.c.l.b16 %v773
        %v843 = vunpack.c.h.b16 %v773
        %v844 = vunpack.c.l.b16 %v774
        %v845 = vunpack.c.l.b16 %v775
        %v846 = vunpack.c.h.b16 %v775
        %v847 = vunpack.c.l.b16 %v776
        %v848 = vunpack.c.l.b16 %v777
        %v849 = vunpack.c.h.b16 %v777
        %v850 = vunpack.c.l.b16 %v778
        %v851 = vunpack.c.l.b16 %v779
        %v852 = vunpack.c.h.b16 %v779
        %v853 = vunpack.c.l.b16 %v780
        %v854 = vunpack.c.l.b16 %v781
        %v855 = vunpack.c.h.b16 %v781
        %v856 = vunpack.c.l.b16 %v782
        %v857 = vunpack.c.l.b16 %v783
        %v858 = vunpack.c.h.b16 %v783
        %v859 = vunpack.c.l.b16 %v784
        %v860 = vunpack.c.l.b16 %v785
        %v861 = vunpack.c.h.b16 %v785
        %v862 = vunpack.c.l.b16 %v786
        %v863 = vunpack.c.l.b16 %v787
        %v864 = vunpack.c.h.b16 %v787
        %v865 = vunpack.c.l.b16 %v788
        %v866 = vunpack.c.l.b16 %v789
        %v867 = vunpack.c.h.b16 %v789
        %v868 = vunpack.c.l.b16 %v790
        %v869 = vunpack.c.l.b16 %v791
        %v870 = vunpack.c.h.b16 %v791
        %v871 = vunpack.c.l.b16 %v792
        %v872 = vunpack.c.l.b16 %v793
        %v873 = vunpack.c.h.b16 %v793
        %v874 = vunpack.c.l.b16 %v794
        %v875 = vunpack.c.l.b16 %v795
        %v876 = vunpack.c.h.b16 %v795
        %v877 = vunpack.c.l.b16 %v796
        %v878 = vunpack.c.l.b16 %v797
        %v879 = vunpack.c.h.b16 %v797
        %v880 = vunpack.c.l.b16 %v798
        %v881 = vpack.c.b16 %v836, %v833
        %v882 = vpack.c.b16 %v837, %v834
        %v883 = vpack.c.b16 %v838, %v835
        %v884 = vpack.c.b16 %v842, %v839
        %v885 = vpack.c.b16 %v843, %v840
        %v886 = vpack.c.b16 %v844, %v841
        %v887 = vpack.c.b16 %v848, %v845
        %v888 = vpack.c.b16 %v849, %v846
        %v889 = vpack.c.b16 %v850, %v847
        %v890 = vpack.c.b16 %v854, %v851
        %v891 = vpack.c.b16 %v855, %v852
        %v892 = vpack.c.b16 %v856, %v853
        %v893 = vpack.c.b16 %v860, %v857
        %v894 = vpack.c.b16 %v861, %v858
        %v895 = vpack.c.b16 %v862, %v859
        %v896 = vpack.c.b16 %v866, %v863
        %v897 = vpack.c.b16 %v867, %v864
        %v898 = vpack.c.b16 %v868, %v865
        %v899 = vpack.c.b16 %v872, %v869
        %v900 = vpack.c.b16 %v873, %v870
        %v901 = vpack.c.b16 %v874, %v871
        %v902 = vpack.c.b16 %v878, %v875
        %v903 = vpack.c.b16 %v879, %v876
        %v904 = vpack.c.b16 %v880, %v877
        %929 = vmatprep.subr.bf16.mxu0 %v882
        %930 = vmatpush1.bf16.msra.mxu0 %v881
        %931 = vmatprep.subr.bf16.mxu0 %v885
        %932 = vmatpush1.bf16.msra.mxu0 %v884
        %933 = vmatprep.subr.bf16.mxu0 %v888
        %934 = vmatpush1.bf16.msra.mxu0 %v887
        %935 = vmatprep.subr.bf16.mxu0 %v891
        %936 = vmatpush1.bf16.msra.mxu0 %v890
        %937 = vmatprep.subr.bf16.mxu0 %v894
        %938 = vmatpush1.bf16.msra.mxu0 %v893
        %939 = vmatprep.subr.bf16.mxu0 %v897
        %940 = vmatpush1.bf16.msra.mxu0 %v896
        %941 = vmatprep.subr.bf16.mxu0 %v900
        %942 = vmatpush1.bf16.msra.mxu0 %v899
        %943 = vmatprep.subr.bf16.mxu0 %v903
        %944 = vmatpush1.bf16.msra.mxu0 %v902
        %945 = vmatprep.subr.bf16.mxu0 0
        %946 = vmatpush1.bf16.msra.mxu0 0
        %947 = vmatprep.subr.bf16.mxu0 0
        %948 = vmatpush1.bf16.msra.mxu0 0
        %949 = vmatprep.subr.bf16.mxu0 0
        %950 = vmatpush1.bf16.msra.mxu0 0
        %951 = vmatprep.subr.bf16.mxu0 0
        %952 = vmatpush1.bf16.msra.mxu0 0
        %953 = vmatprep.subr.bf16.mxu0 0
        %954 = vmatpush1.bf16.msra.mxu0 0
        %955 = vmatprep.subr.bf16.mxu0 0
        %956 = vmatpush1.bf16.msra.mxu0 0
        %957 = vmatprep.subr.bf16.mxu0 0
        %958 = vmatpush1.bf16.msra.mxu0 0
        %959 = vmatprep.subr.bf16.mxu0 0
        %960 = vmatpush1.bf16.msra.mxu0 0
        %961 = vmatprep.mubr.bf16.mxu0 0
        %962 = vmatmul.mubr.bf16.gmra.mrb[0].mxu0 %v799
        %v963 = vpop.f32.mrb[0].mxu0
        %v964 = vadd.f32 0.0, %v963
        %v965 = vpop.f32.mrb[0].mxu0
        %v966 = vadd.f32 0.0, %v965
        %v967 = vpop.f32.mrb[0].mxu0
        %v968 = vadd.f32 0.0, %v967
        %v969 = vpop.f32.mrb[0].mxu0
        %v970 = vadd.f32 0.0, %v969
        %971 = vmatprep.mubr.bf16.mxu0 0
        %972 = vmatmul.mubr.bf16.gmra.mrb[0].mxu0 %v800
        %v973 = vpop.f32.mrb[0].mxu0
        %v974 = vadd.f32 0.0, %v973
        %v975 = vpop.f32.mrb[0].mxu0
        %v976 = vadd.f32 0.0, %v975
        %v977 = vpop.f32.mrb[0].mxu0
        %v978 = vadd.f32 0.0, %v977
        %v979 = vpop.f32.mrb[0].mxu0
        %v980 = vadd.f32 0.0, %v979
        %981 = vdwg.mxu0
        %982 = vmatprep.subr.bf16.mxu0 0
        %983 = vmatpush1.bf16.msra.mxu0 %v883
        %984 = vmatprep.subr.bf16.mxu0 0
        %985 = vmatpush1.bf16.msra.mxu0 %v886
        %986 = vmatprep.subr.bf16.mxu0 0
        %987 = vmatpush1.bf16.msra.mxu0 %v889
        %988 = vmatprep.subr.bf16.mxu0 0
        %989 = vmatpush1.bf16.msra.mxu0 %v892
        %990 = vmatprep.subr.bf16.mxu0 0
        %991 = vmatpush1.bf16.msra.mxu0 %v895
        %992 = vmatprep.subr.bf16.mxu0 0
        %993 = vmatpush1.bf16.msra.mxu0 %v898
        %994 = vmatprep.subr.bf16.mxu0 0
        %995 = vmatpush1.bf16.msra.mxu0 %v901
        %996 = vmatprep.subr.bf16.mxu0 0
        %997 = vmatpush1.bf16.msra.mxu0 %v904
        %998 = vmatprep.subr.bf16.mxu0 0
        %999 = vmatpush1.bf16.msra.mxu0 0
        %1000 = vmatprep.subr.bf16.mxu0 0
        %1001 = vmatpush1.bf16.msra.mxu0 0
        %1002 = vmatprep.subr.bf16.mxu0 0
        %1003 = vmatpush1.bf16.msra.mxu0 0
        %1004 = vmatprep.subr.bf16.mxu0 0
        %1005 = vmatpush1.bf16.msra.mxu0 0
        %1006 = vmatprep.subr.bf16.mxu0 0
        %1007 = vmatpush1.bf16.msra.mxu0 0
        %1008 = vmatprep.subr.bf16.mxu0 0
        %1009 = vmatpush1.bf16.msra.mxu0 0
        %1010 = vmatprep.subr.bf16.mxu0 0
        %1011 = vmatpush1.bf16.msra.mxu0 0
        %1012 = vmatprep.subr.bf16.mxu0 0
        %1013 = vmatpush1.bf16.msra.mxu0 0
        %1014 = vmatprep.mubr.bf16.mxu0 0
        %1015 = vmatmul.mubr.bf16.gmra.mrb[0].mxu0 %v799
        %v1016 = vpop.f32.mrb[0].mxu0
        %v1017 = vadd.f32 0.0, %v1016
        %v1018 = vpop.f32.mrb[0].mxu0
        %v1019 = vpop.f32.mrb[0].mxu0
        %v1020 = vadd.f32 0.0, %v1019
        %v1021 = vpop.f32.mrb[0].mxu0
        %1022 = vmatprep.mubr.bf16.mxu0 0
        %1023 = vmatmul.mubr.bf16.gmra.mrb[0].mxu0 %v800
        %v1024 = vpop.f32.mrb[0].mxu0
        %v1025 = vadd.f32 0.0, %v1024
        %v1026 = vpop.f32.mrb[0].mxu0
        %v1027 = vpop.f32.mrb[0].mxu0
        %v1028 = vadd.f32 0.0, %v1027
        %v1029 = vpop.f32.mrb[0].mxu0
        %1030 = vdwg.mxu0
        %v1031 = vld [vmem:[%s3] sm:$0xff]
        %v1032 = vld [vmem:[%s3 + $0x8] sm:$0xff]
        %v1033 = vld [vmem:[%s3 + $0x10] sm:$0xff]
        %v1034 = vld [vmem:[%s3 + $0x18] sm:$0xff]
        %v1035 = vld [vmem:[%s3 + $0x20] sm:$0xff]
        %v1036 = vld [vmem:[%s3 + $0x28] sm:$0xff]
        %v1037 = vld [vmem:[%s3 + $0x30] sm:$0xff]
        %v1038 = vld [vmem:[%s3 + $0x38] sm:$0xff]
        %v1039 = vmul.f32 %v964, %v1031
        %v1040 = vmul.f32 %v966, %v1032
        %v1041 = vmul.f32 %v968, %v1033
        %v1042 = vmul.f32 %v970, %v1034
        %v1043 = vmul.f32 %v974, %v1035
        %v1044 = vmul.f32 %v976, %v1036
        %v1045 = vmul.f32 %v978, %v1037
        %v1046 = vmul.f32 %v980, %v1038
        %v1047 = vld [vmem:[#allocation7] sm:$0xff]
        %v1048 = vld [vmem:[#allocation7 + $0x8] sm:$0xff]
        %v1049 = vld [vmem:[#allocation7 + $0x10] sm:$0xff]
        %v1050 = vld [vmem:[#allocation7 + $0x18] sm:$0xff]
        %v1051 = vld [vmem:[#allocation7 + $0x20] sm:$0xff]
        %v1052 = vld [vmem:[#allocation7 + $0x28] sm:$0xff]
        %v1053 = vld [vmem:[#allocation7 + $0x30] sm:$0xff]
        %v1054 = vld [vmem:[#allocation7 + $0x38] sm:$0xff]
        %v1055 = vld [vmem:[#allocation7 + $0x40] sm:$0xff]
        %v1056 = vld [vmem:[#allocation7 + $0x48] sm:$0xff]
        %v1057 = vld [vmem:[#allocation7 + $0x50] sm:$0xff]
        %v1058 = vld [vmem:[#allocation7 + $0x58] sm:$0xff]
        %v1059 = vld [vmem:[#allocation7 + $0x60] sm:$0xff]
        %v1060 = vld [vmem:[#allocation7 + $0x68] sm:$0xff]
        %v1061 = vld [vmem:[#allocation7 + $0x70] sm:$0xff]
        %v1062 = vld [vmem:[#allocation7 + $0x78] sm:$0xff]
        %v1063 = vld [vmem:[#allocation7 + $0x80] sm:$0xff]
        %v1064 = vld [vmem:[#allocation7 + $0x88] sm:$0xff]
        %v1065 = vld [vmem:[#allocation7 + $0x90] sm:$0xff]
        %v1066 = vld [vmem:[#allocation7 + $0x98] sm:$0xff]
        %v1067 = vld [vmem:[#allocation7 + $0xa0] sm:$0xff]
        %v1068 = vld [vmem:[#allocation7 + $0xa8] sm:$0xff]
        %v1069 = vld [vmem:[#allocation7 + $0xb0] sm:$0xff]
        %v1070 = vld [vmem:[#allocation7 + $0xb8] sm:$0xff]
        %v1071 = vld [vmem:[#allocation7 + $0xc0] sm:$0xff]
        %v1072 = vld [vmem:[#allocation7 + $0xc8] sm:$0xff]
        %v1073 = vld [vmem:[#allocation7 + $0xd0] sm:$0xff]
        %v1074 = vld [vmem:[#allocation7 + $0xd8] sm:$0xff]
        %v1075 = vld [vmem:[#allocation7 + $0xe0] sm:$0xff]
        %v1076 = vld [vmem:[#allocation7 + $0xe8] sm:$0xff]
        %v1077 = vld [vmem:[#allocation7 + $0xf0] sm:$0xff]
        %v1078 = vld [vmem:[#allocation7 + $0xf8] sm:$0xff]
        %v1079 = vpack.c.bf16 %v968, %v964
        %v1080 = vpack.c.bf16 %v970, %v966
        %v1081 = vpack.c.bf16 %v978, %v974
        %v1082 = vpack.c.bf16 %v980, %v976
        %v1115 = vunpack.c.l.b16 %v1047
        %v1116 = vunpack.c.h.b16 %v1047
        %v1117 = vunpack.c.l.b16 %v1048
        %v1118 = vunpack.c.h.b16 %v1048
        %v1119 = vunpack.c.l.b16 %v1049
        %v1120 = vunpack.c.h.b16 %v1049
        %v1121 = vunpack.c.l.b16 %v1050
        %v1122 = vunpack.c.h.b16 %v1050
        %v1123 = vunpack.c.l.b16 %v1051
        %v1124 = vunpack.c.h.b16 %v1051
        %v1125 = vunpack.c.l.b16 %v1052
        %v1126 = vunpack.c.h.b16 %v1052
        %v1127 = vunpack.c.l.b16 %v1053
        %v1128 = vunpack.c.h.b16 %v1053
        %v1129 = vunpack.c.l.b16 %v1054
        %v1130 = vunpack.c.h.b16 %v1054
        %v1131 = vunpack.c.l.b16 %v1055
        %v1132 = vunpack.c.h.b16 %v1055
        %v1133 = vunpack.c.l.b16 %v1056
        %v1134 = vunpack.c.h.b16 %v1056
        %v1135 = vunpack.c.l.b16 %v1057
        %v1136 = vunpack.c.h.b16 %v1057
        %v1137 = vunpack.c.l.b16 %v1058
        %v1138 = vunpack.c.h.b16 %v1058
        %v1139 = vunpack.c.l.b16 %v1059
        %v1140 = vunpack.c.h.b16 %v1059
        %v1141 = vunpack.c.l.b16 %v1060
        %v1142 = vunpack.c.h.b16 %v1060
        %v1143 = vunpack.c.l.b16 %v1061
        %v1144 = vunpack.c.h.b16 %v1061
        %v1145 = vunpack.c.l.b16 %v1062
        %v1146 = vunpack.c.h.b16 %v1062
        %v1147 = vunpack.c.l.b16 %v1063
        %v1148 = vunpack.c.h.b16 %v1063
        %v1149 = vunpack.c.l.b16 %v1064
        %v1150 = vunpack.c.h.b16 %v1064
        %v1151 = vunpack.c.l.b16 %v1065
        %v1152 = vunpack.c.h.b16 %v1065
        %v1153 = vunpack.c.l.b16 %v1066
        %v1154 = vunpack.c.h.b16 %v1066
        %v1155 = vunpack.c.l.b16 %v1067
        %v1156 = vunpack.c.h.b16 %v1067
        %v1157 = vunpack.c.l.b16 %v1068
        %v1158 = vunpack.c.h.b16 %v1068
        %v1159 = vunpack.c.l.b16 %v1069
        %v1160 = vunpack.c.h.b16 %v1069
        %v1161 = vunpack.c.l.b16 %v1070
        %v1162 = vunpack.c.h.b16 %v1070
        %v1163 = vunpack.c.l.b16 %v1071
        %v1164 = vunpack.c.h.b16 %v1071
        %v1165 = vunpack.c.l.b16 %v1072
        %v1166 = vunpack.c.h.b16 %v1072
        %v1167 = vunpack.c.l.b16 %v1073
        %v1168 = vunpack.c.h.b16 %v1073
        %v1169 = vunpack.c.l.b16 %v1074
        %v1170 = vunpack.c.h.b16 %v1074
        %v1171 = vunpack.c.l.b16 %v1075
        %v1172 = vunpack.c.h.b16 %v1075
        %v1173 = vunpack.c.l.b16 %v1076
        %v1174 = vunpack.c.h.b16 %v1076
        %v1175 = vunpack.c.l.b16 %v1077
        %v1176 = vunpack.c.h.b16 %v1077
        %v1177 = vunpack.c.l.b16 %v1078
        %v1178 = vunpack.c.h.b16 %v1078
        %v1179 = vpack.c.b16 %v1117, %v1115
        %v1180 = vpack.c.b16 %v1118, %v1116
        %v1181 = vpack.c.b16 %v1121, %v1119
        %v1182 = vpack.c.b16 %v1122, %v1120
        %v1183 = vpack.c.b16 %v1125, %v1123
        %v1184 = vpack.c.b16 %v1126, %v1124
        %v1185 = vpack.c.b16 %v1129, %v1127
        %v1186 = vpack.c.b16 %v1130, %v1128
        %v1187 = vpack.c.b16 %v1133, %v1131
        %v1188 = vpack.c.b16 %v1134, %v1132
        %v1189 = vpack.c.b16 %v1137, %v1135
        %v1190 = vpack.c.b16 %v1138, %v1136
        %v1191 = vpack.c.b16 %v1141, %v1139
        %v1192 = vpack.c.b16 %v1142, %v1140
        %v1193 = vpack.c.b16 %v1145, %v1143
        %v1194 = vpack.c.b16 %v1146, %v1144
        %v1195 = vpack.c.b16 %v1149, %v1147
        %v1196 = vpack.c.b16 %v1150, %v1148
        %v1197 = vpack.c.b16 %v1153, %v1151
        %v1198 = vpack.c.b16 %v1154, %v1152
        %v1199 = vpack.c.b16 %v1157, %v1155
        %v1200 = vpack.c.b16 %v1158, %v1156
        %v1201 = vpack.c.b16 %v1161, %v1159
        %v1202 = vpack.c.b16 %v1162, %v1160
        %v1203 = vpack.c.b16 %v1165, %v1163
        %v1204 = vpack.c.b16 %v1166, %v1164
        %v1205 = vpack.c.b16 %v1169, %v1167
        %v1206 = vpack.c.b16 %v1170, %v1168
        %v1207 = vpack.c.b16 %v1173, %v1171
        %v1208 = vpack.c.b16 %v1174, %v1172
        %v1209 = vpack.c.b16 %v1177, %v1175
        %v1210 = vpack.c.b16 %v1178, %v1176
        %1243 = vmatprep.subr.bf16.mxu0 %v1180
        %1244 = vmatpush1.bf16.msra.mxu0 %v1179
        %1245 = vmatprep.subr.bf16.mxu0 %v1182
        %1246 = vmatpush1.bf16.msra.mxu0 %v1181
        %1247 = vmatprep.subr.bf16.mxu0 %v1184
        %1248 = vmatpush1.bf16.msra.mxu0 %v1183
        %1249 = vmatprep.subr.bf16.mxu0 %v1186
        %1250 = vmatpush1.bf16.msra.mxu0 %v1185
        %1251 = vmatprep.subr.bf16.mxu0 %v1188
        %1252 = vmatpush1.bf16.msra.mxu0 %v1187
        %1253 = vmatprep.subr.bf16.mxu0 %v1190
        %1254 = vmatpush1.bf16.msra.mxu0 %v1189
        %1255 = vmatprep.subr.bf16.mxu0 %v1192
        %1256 = vmatpush1.bf16.msra.mxu0 %v1191
        %1257 = vmatprep.subr.bf16.mxu0 %v1194
        %1258 = vmatpush1.bf16.msra.mxu0 %v1193
        %1259 = vmatprep.subr.bf16.mxu0 %v1196
        %1260 = vmatpush1.bf16.msra.mxu0 %v1195
        %1261 = vmatprep.subr.bf16.mxu0 %v1198
        %1262 = vmatpush1.bf16.msra.mxu0 %v1197
        %1263 = vmatprep.subr.bf16.mxu0 %v1200
        %1264 = vmatpush1.bf16.msra.mxu0 %v1199
        %1265 = vmatprep.subr.bf16.mxu0 %v1202
        %1266 = vmatpush1.bf16.msra.mxu0 %v1201
        %1267 = vmatprep.subr.bf16.mxu0 %v1204
        %1268 = vmatpush1.bf16.msra.mxu0 %v1203
        %1269 = vmatprep.subr.bf16.mxu0 %v1206
        %1270 = vmatpush1.bf16.msra.mxu0 %v1205
        %1271 = vmatprep.subr.bf16.mxu0 %v1208
        %1272 = vmatpush1.bf16.msra.mxu0 %v1207
        %1273 = vmatprep.subr.bf16.mxu0 %v1210
        %1274 = vmatpush1.bf16.msra.mxu0 %v1209
        %1275 = vmatprep.mubr.bf16.mxu0 %v1080
        %1276 = vmatmul.mubr.bf16.gmra.mrb[0].mxu0 %v1079
        %v1277 = vpop.f32.mrb[0].mxu0
        %v1278 = vadd.f32 0.0, %v1277
        %v1279 = vpop.f32.mrb[0].mxu0
        %v1280 = vadd.f32 0.0, %v1279
        %v1281 = vpop.f32.mrb[0].mxu0
        %v1282 = vadd.f32 0.0, %v1281
        %v1283 = vpop.f32.mrb[0].mxu0
        %v1284 = vadd.f32 0.0, %v1283
        %1285 = vmatprep.mubr.bf16.mxu0 %v1082
        %1286 = vmatmul.mubr.bf16.gmra.mrb[0].mxu0 %v1081
        %v1287 = vpop.f32.mrb[0].mxu0
        %v1288 = vadd.f32 0.0, %v1287
        %v1289 = vpop.f32.mrb[0].mxu0
        %v1290 = vadd.f32 0.0, %v1289
        %v1291 = vpop.f32.mrb[0].mxu0
        %v1292 = vadd.f32 0.0, %v1291
        %v1293 = vpop.f32.mrb[0].mxu0
        %v1294 = vadd.f32 0.0, %v1293
        %1295 = vdwg.mxu0
        %v1296 = vld [vmem:[#allocation4] sm:$0xff]
        %v1297 = vld [vmem:[#allocation4 + $0x8] sm:$0xff]
        %v1298 = vld [vmem:[#allocation4 + $0x10] sm:$0xff]
        %v1299 = vld [vmem:[#allocation4 + $0x18] sm:$0xff]
        %v1300 = vld [vmem:[#allocation4 + $0x20] sm:$0xff]
        %v1301 = vld [vmem:[#allocation4 + $0x28] sm:$0xff]
        %v1302 = vld [vmem:[#allocation4 + $0x30] sm:$0xff]
        %v1303 = vld [vmem:[#allocation4 + $0x38] sm:$0xff]
        %v1304 = vmul.f32 %v1278, %v1296
        %v1305 = vmul.f32 %v1280, %v1297
        %v1306 = vmul.f32 %v1282, %v1298
        %v1307 = vmul.f32 %v1284, %v1299
        %v1308 = vmul.f32 %v1288, %v1300
        %v1309 = vmul.f32 %v1290, %v1301
        %v1310 = vmul.f32 %v1292, %v1302
        %v1311 = vmul.f32 %v1294, %v1303
        %v1312 = vadd.f32 %v1039, %v1304
        %v1313 = vadd.f32 %v1040, %v1305
        %v1314 = vadd.f32 %v1041, %v1306
        %v1315 = vadd.f32 %v1042, %v1307
        %v1316 = vadd.f32 %v1043, %v1308
        %v1317 = vadd.f32 %v1044, %v1309
        %v1318 = vadd.f32 %v1045, %v1310
        %v1319 = vadd.f32 %v1046, %v1311
        %1320 = vxpose.xlu0.b32.start [1/16] %v1312, 128
        %1321 = vxpose.xlu0.b32.cont [2/16] %v1314, 128
        %1322 = vxpose.xlu0.b32.cont [3/16] %v1316, 128
        %1323 = vxpose.xlu0.b32.cont [4/16] %v1318, 128
        %1324 = vxpose.xlu0.b32.cont [5/16] 0.0, 128
        %1325 = vxpose.xlu0.b32.cont [6/16] 0.0, 128
        %1326 = vxpose.xlu0.b32.cont [7/16] 0.0, 128
        %1327 = vxpose.xlu0.b32.cont [8/16] 0.0, 128
        %1328 = vxpose.xlu0.b32.cont [9/16] 0.0, 128
        %1329 = vxpose.xlu0.b32.cont [10/16] 0.0, 128
        %1330 = vxpose.xlu0.b32.cont [11/16] 0.0, 128
        %1331 = vxpose.xlu0.b32.cont [12/16] 0.0, 128
        %1332 = vxpose.xlu0.b32.cont [13/16] 0.0, 128
        %1333 = vxpose.xlu0.b32.cont [14/16] 0.0, 128
        %1334 = vxpose.xlu0.b32.cont [15/16] 0.0, 128
        %1335 = vxpose.xlu0.b32.end [16/16] 0.0, 128
        %v1336 = vpop.trf.xlu0
        %v1337 = vpop.trf.xlu0
        %v1338 = vpop.trf.xlu0
        %v1339 = vpop.trf.xlu0
        %v1340 = vpop.trf.xlu0
        %v1341 = vpop.trf.xlu0
        %v1342 = vpop.trf.xlu0
        %v1343 = vpop.trf.xlu0
        %v1344 = vpop.trf.xlu0
        %v1345 = vpop.trf.xlu0
        %v1346 = vpop.trf.xlu0
        %v1347 = vpop.trf.xlu0
        %v1348 = vpop.trf.xlu0
        %v1349 = vpop.trf.xlu0
        %v1350 = vpop.trf.xlu0
        %v1351 = vpop.trf.xlu0
        %1352 = vxpose.xlu0.b32.start [1/16] %v1313, 128
        %1353 = vxpose.xlu0.b32.cont [2/16] %v1315, 128
        %1354 = vxpose.xlu0.b32.cont [3/16] %v1317, 128
        %1355 = vxpose.xlu0.b32.cont [4/16] %v1319, 128
        %1356 = vxpose.xlu0.b32.cont [5/16] 0.0, 128
        %1357 = vxpose.xlu0.b32.cont [6/16] 0.0, 128
        %1358 = vxpose.xlu0.b32.cont [7/16] 0.0, 128
        %1359 = vxpose.xlu0.b32.cont [8/16] 0.0, 128
        %1360 = vxpose.xlu0.b32.cont [9/16] 0.0, 128
        %1361 = vxpose.xlu0.b32.cont [10/16] 0.0, 128
        %1362 = vxpose.xlu0.b32.cont [11/16] 0.0, 128
        %1363 = vxpose.xlu0.b32.cont [12/16] 0.0, 128
        %1364 = vxpose.xlu0.b32.cont [13/16] 0.0, 128
        %1365 = vxpose.xlu0.b32.cont [14/16] 0.0, 128
        %1366 = vxpose.xlu0.b32.cont [15/16] 0.0, 128
        %1367 = vxpose.xlu0.b32.end [16/16] 0.0, 128
        %v1368 = vpop.trf.xlu0
        %v1369 = vpop.trf.xlu0
        %v1370 = vpop.trf.xlu0
        %v1371 = vpop.trf.xlu0
        %v1372 = vpop.trf.xlu0
        %v1373 = vpop.trf.xlu0
        %v1374 = vpop.trf.xlu0
        %v1375 = vpop.trf.xlu0
        %v1376 = vpop.trf.xlu0
        %v1377 = vpop.trf.xlu0
        %v1378 = vpop.trf.xlu0
        %v1379 = vpop.trf.xlu0
        %v1380 = vpop.trf.xlu0
        %v1381 = vpop.trf.xlu0
        %v1382 = vpop.trf.xlu0
        %v1383 = vpop.trf.xlu0
        %1384 = vxpose.xlu0.b32.start [1/16] %v1336, 128
        %1385 = vxpose.xlu0.b32.cont [2/16] %v1337, 128
        %1386 = vxpose.xlu0.b32.cont [3/16] %v1338, 128
        %1387 = vxpose.xlu0.b32.cont [4/16] %v1339, 128
        %1388 = vxpose.xlu0.b32.cont [5/16] 0.0, 128
        %1389 = vxpose.xlu0.b32.cont [6/16] 0.0, 128
        %1390 = vxpose.xlu0.b32.cont [7/16] 0.0, 128
        %1391 = vxpose.xlu0.b32.cont [8/16] 0.0, 128
        %1392 = vxpose.xlu0.b32.cont [9/16] 0.0, 128
        %1393 = vxpose.xlu0.b32.cont [10/16] 0.0, 128
        %1394 = vxpose.xlu0.b32.cont [11/16] 0.0, 128
        %1395 = vxpose.xlu0.b32.cont [12/16] 0.0, 128
        %1396 = vxpose.xlu0.b32.cont [13/16] 0.0, 128
        %1397 = vxpose.xlu0.b32.cont [14/16] 0.0, 128
        %1398 = vxpose.xlu0.b32.cont [15/16] 0.0, 128
        %1399 = vxpose.xlu0.b32.end [16/16] 0.0, 128
        %v1400 = vpop.trf.xlu0
        %v1401 = vpop.trf.xlu0
        %v1402 = vpop.trf.xlu0
        %v1403 = vpop.trf.xlu0
        %v1404 = vpop.trf.xlu0
        %v1405 = vpop.trf.xlu0
        %v1406 = vpop.trf.xlu0
        %v1407 = vpop.trf.xlu0
        %v1408 = vpop.trf.xlu0
        %v1409 = vpop.trf.xlu0
        %v1410 = vpop.trf.xlu0
        %v1411 = vpop.trf.xlu0
        %v1412 = vpop.trf.xlu0
        %v1413 = vpop.trf.xlu0
        %v1414 = vpop.trf.xlu0
        %v1415 = vpop.trf.xlu0
        %1416 = vxpose.xlu0.b32.start [1/16] %v1340, 128
        %1417 = vxpose.xlu0.b32.cont [2/16] %v1341, 128
        %1418 = vxpose.xlu0.b32.cont [3/16] %v1342, 128
        %1419 = vxpose.xlu0.b32.cont [4/16] %v1343, 128
        %1420 = vxpose.xlu0.b32.cont [5/16] 0.0, 128
        %1421 = vxpose.xlu0.b32.cont [6/16] 0.0, 128
        %1422 = vxpose.xlu0.b32.cont [7/16] 0.0, 128
        %1423 = vxpose.xlu0.b32.cont [8/16] 0.0, 128
        %1424 = vxpose.xlu0.b32.cont [9/16] 0.0, 128
        %1425 = vxpose.xlu0.b32.cont [10/16] 0.0, 128
        %1426 = vxpose.xlu0.b32.cont [11/16] 0.0, 128
        %1427 = vxpose.xlu0.b32.cont [12/16] 0.0, 128
        %1428 = vxpose.xlu0.b32.cont [13/16] 0.0, 128
        %1429 = vxpose.xlu0.b32.cont [14/16] 0.0, 128
        %1430 = vxpose.xlu0.b32.cont [15/16] 0.0, 128
        %1431 = vxpose.xlu0.b32.end [16/16] 0.0, 128
        %v1432 = vpop.trf.xlu0
        %v1433 = vpop.trf.xlu0
        %v1434 = vpop.trf.xlu0
        %v1435 = vpop.trf.xlu0
        %v1436 = vpop.trf.xlu0
        %v1437 = vpop.trf.xlu0
        %v1438 = vpop.trf.xlu0
        %v1439 = vpop.trf.xlu0
        %v1440 = vpop.trf.xlu0
        %v1441 = vpop.trf.xlu0
        %v1442 = vpop.trf.xlu0
        %v1443 = vpop.trf.xlu0
        %v1444 = vpop.trf.xlu0
        %v1445 = vpop.trf.xlu0
        %v1446 = vpop.trf.xlu0
        %v1447 = vpop.trf.xlu0
        %1448 = vxpose.xlu0.b32.start [1/16] %v1344, 128
        %1449 = vxpose.xlu0.b32.cont [2/16] %v1345, 128
        %1450 = vxpose.xlu0.b32.cont [3/16] %v1346, 128
        %1451 = vxpose.xlu0.b32.cont [4/16] %v1347, 128
        %1452 = vxpose.xlu0.b32.cont [5/16] 0.0, 128
        %1453 = vxpose.xlu0.b32.cont [6/16] 0.0, 128
        %1454 = vxpose.xlu0.b32.cont [7/16] 0.0, 128
        %1455 = vxpose.xlu0.b32.cont [8/16] 0.0, 128
        %1456 = vxpose.xlu0.b32.cont [9/16] 0.0, 128
        %1457 = vxpose.xlu0.b32.cont [10/16] 0.0, 128
        %1458 = vxpose.xlu0.b32.cont [11/16] 0.0, 128
        %1459 = vxpose.xlu0.b32.cont [12/16] 0.0, 128
        %1460 = vxpose.xlu0.b32.cont [13/16] 0.0, 128
        %1461 = vxpose.xlu0.b32.cont [14/16] 0.0, 128
        %1462 = vxpose.xlu0.b32.cont [15/16] 0.0, 128
        %1463 = vxpose.xlu0.b32.end [16/16] 0.0, 128
        %v1464 = vpop.trf.xlu0
        %v1465 = vpop.trf.xlu0
        %v1466 = vpop.trf.xlu0
        %v1467 = vpop.trf.xlu0
        %v1468 = vpop.trf.xlu0
        %v1469 = vpop.trf.xlu0
        %v1470 = vpop.trf.xlu0
        %v1471 = vpop.trf.xlu0
        %v1472 = vpop.trf.xlu0
        %v1473 = vpop.trf.xlu0
        %v1474 = vpop.trf.xlu0
        %v1475 = vpop.trf.xlu0
        %v1476 = vpop.trf.xlu0
        %v1477 = vpop.trf.xlu0
        %v1478 = vpop.trf.xlu0
        %v1479 = vpop.trf.xlu0
        %1480 = vxpose.xlu0.b32.start [1/16] %v1348, 128
        %1481 = vxpose.xlu0.b32.cont [2/16] %v1349, 128
        %1482 = vxpose.xlu0.b32.cont [3/16] %v1350, 128
        %1483 = vxpose.xlu0.b32.cont [4/16] %v1351, 128
        %1484 = vxpose.xlu0.b32.cont [5/16] 0.0, 128
        %1485 = vxpose.xlu0.b32.cont [6/16] 0.0, 128
        %1486 = vxpose.xlu0.b32.cont [7/16] 0.0, 128
        %1487 = vxpose.xlu0.b32.cont [8/16] 0.0, 128
        %1488 = vxpose.xlu0.b32.cont [9/16] 0.0, 128
        %1489 = vxpose.xlu0.b32.cont [10/16] 0.0, 128
        %1490 = vxpose.xlu0.b32.cont [11/16] 0.0, 128
        %1491 = vxpose.xlu0.b32.cont [12/16] 0.0, 128
        %1492 = vxpose.xlu0.b32.cont [13/16] 0.0, 128
        %1493 = vxpose.xlu0.b32.cont [14/16] 0.0, 128
        %1494 = vxpose.xlu0.b32.cont [15/16] 0.0, 128
        %1495 = vxpose.xlu0.b32.end [16/16] 0.0, 128
        %v1496 = vpop.trf.xlu0
        %v1497 = vpop.trf.xlu0
        %v1498 = vpop.trf.xlu0
        %v1499 = vpop.trf.xlu0
        %v1500 = vpop.trf.xlu0
        %v1501 = vpop.trf.xlu0
        %v1502 = vpop.trf.xlu0
        %v1503 = vpop.trf.xlu0
        %v1504 = vpop.trf.xlu0
        %v1505 = vpop.trf.xlu0
        %v1506 = vpop.trf.xlu0
        %v1507 = vpop.trf.xlu0
        %v1508 = vpop.trf.xlu0
        %v1509 = vpop.trf.xlu0
        %v1510 = vpop.trf.xlu0
        %v1511 = vpop.trf.xlu0
        %1512 = vxpose.xlu0.b32.start [1/16] %v1368, 128
        %1513 = vxpose.xlu0.b32.cont [2/16] %v1369, 128
        %1514 = vxpose.xlu0.b32.cont [3/16] %v1370, 128
        %1515 = vxpose.xlu0.b32.cont [4/16] %v1371, 128
        %1516 = vxpose.xlu0.b32.cont [5/16] 0.0, 128
        %1517 = vxpose.xlu0.b32.cont [6/16] 0.0, 128
        %1518 = vxpose.xlu0.b32.cont [7/16] 0.0, 128
        %1519 = vxpose.xlu0.b32.cont [8/16] 0.0, 128
        %1520 = vxpose.xlu0.b32.cont [9/16] 0.0, 128
        %1521 = vxpose.xlu0.b32.cont [10/16] 0.0, 128
        %1522 = vxpose.xlu0.b32.cont [11/16] 0.0, 128
        %1523 = vxpose.xlu0.b32.cont [12/16] 0.0, 128
        %1524 = vxpose.xlu0.b32.cont [13/16] 0.0, 128
        %1525 = vxpose.xlu0.b32.cont [14/16] 0.0, 128
        %1526 = vxpose.xlu0.b32.cont [15/16] 0.0, 128
        %1527 = vxpose.xlu0.b32.end [16/16] 0.0, 128
        %v1528 = vpop.trf.xlu0
        %v1529 = vpop.trf.xlu0
        %v1530 = vpop.trf.xlu0
        %v1531 = vpop.trf.xlu0
        %v1532 = vpop.trf.xlu0
        %v1533 = vpop.trf.xlu0
        %v1534 = vpop.trf.xlu0
        %v1535 = vpop.trf.xlu0
        %v1536 = vpop.trf.xlu0
        %v1537 = vpop.trf.xlu0
        %v1538 = vpop.trf.xlu0
        %v1539 = vpop.trf.xlu0
        %v1540 = vpop.trf.xlu0
        %v1541 = vpop.trf.xlu0
        %v1542 = vpop.trf.xlu0
        %v1543 = vpop.trf.xlu0
        %1544 = vxpose.xlu0.b32.start [1/16] %v1372, 128
        %1545 = vxpose.xlu0.b32.cont [2/16] %v1373, 128
        %1546 = vxpose.xlu0.b32.cont [3/16] %v1374, 128
        %1547 = vxpose.xlu0.b32.cont [4/16] %v1375, 128
        %1548 = vxpose.xlu0.b32.cont [5/16] 0.0, 128
        %1549 = vxpose.xlu0.b32.cont [6/16] 0.0, 128
        %1550 = vxpose.xlu0.b32.cont [7/16] 0.0, 128
        %1551 = vxpose.xlu0.b32.cont [8/16] 0.0, 128
        %1552 = vxpose.xlu0.b32.cont [9/16] 0.0, 128
        %1553 = vxpose.xlu0.b32.cont [10/16] 0.0, 128
        %1554 = vxpose.xlu0.b32.cont [11/16] 0.0, 128
        %1555 = vxpose.xlu0.b32.cont [12/16] 0.0, 128
        %1556 = vxpose.xlu0.b32.cont [13/16] 0.0, 128
        %1557 = vxpose.xlu0.b32.cont [14/16] 0.0, 128
        %1558 = vxpose.xlu0.b32.cont [15/16] 0.0, 128
        %1559 = vxpose.xlu0.b32.end [16/16] 0.0, 128
        %v1560 = vpop.trf.xlu0
        %v1561 = vpop.trf.xlu0
        %v1562 = vpop.trf.xlu0
        %v1563 = vpop.trf.xlu0
        %v1564 = vpop.trf.xlu0
        %v1565 = vpop.trf.xlu0
        %v1566 = vpop.trf.xlu0
        %v1567 = vpop.trf.xlu0
        %v1568 = vpop.trf.xlu0
        %v1569 = vpop.trf.xlu0
        %v1570 = vpop.trf.xlu0
        %v1571 = vpop.trf.xlu0
        %v1572 = vpop.trf.xlu0
        %v1573 = vpop.trf.xlu0
        %v1574 = vpop.trf.xlu0
        %v1575 = vpop.trf.xlu0
        %1576 = vxpose.xlu0.b32.start [1/16] %v1376, 128
        %1577 = vxpose.xlu0.b32.cont [2/16] %v1377, 128
        %1578 = vxpose.xlu0.b32.cont [3/16] %v1378, 128
        %1579 = vxpose.xlu0.b32.cont [4/16] %v1379, 128
        %1580 = vxpose.xlu0.b32.cont [5/16] 0.0, 128
        %1581 = vxpose.xlu0.b32.cont [6/16] 0.0, 128
        %1582 = vxpose.xlu0.b32.cont [7/16] 0.0, 128
        %1583 = vxpose.xlu0.b32.cont [8/16] 0.0, 128
        %1584 = vxpose.xlu0.b32.cont [9/16] 0.0, 128
        %1585 = vxpose.xlu0.b32.cont [10/16] 0.0, 128
        %1586 = vxpose.xlu0.b32.cont [11/16] 0.0, 128
        %1587 = vxpose.xlu0.b32.cont [12/16] 0.0, 128
        %1588 = vxpose.xlu0.b32.cont [13/16] 0.0, 128
        %1589 = vxpose.xlu0.b32.cont [14/16] 0.0, 128
        %1590 = vxpose.xlu0.b32.cont [15/16] 0.0, 128
        %1591 = vxpose.xlu0.b32.end [16/16] 0.0, 128
        %v1592 = vpop.trf.xlu0
        %v1593 = vpop.trf.xlu0
        %v1594 = vpop.trf.xlu0
        %v1595 = vpop.trf.xlu0
        %v1596 = vpop.trf.xlu0
        %v1597 = vpop.trf.xlu0
        %v1598 = vpop.trf.xlu0
        %v1599 = vpop.trf.xlu0
        %v1600 = vpop.trf.xlu0
        %v1601 = vpop.trf.xlu0
        %v1602 = vpop.trf.xlu0
        %v1603 = vpop.trf.xlu0
        %v1604 = vpop.trf.xlu0
        %v1605 = vpop.trf.xlu0
        %v1606 = vpop.trf.xlu0
        %v1607 = vpop.trf.xlu0
        %1608 = vxpose.xlu0.b32.start [1/16] %v1380, 128
        %1609 = vxpose.xlu0.b32.cont [2/16] %v1381, 128
        %1610 = vxpose.xlu0.b32.cont [3/16] %v1382, 128
        %1611 = vxpose.xlu0.b32.cont [4/16] %v1383, 128
        %1612 = vxpose.xlu0.b32.cont [5/16] 0.0, 128
        %1613 = vxpose.xlu0.b32.cont [6/16] 0.0, 128
        %1614 = vxpose.xlu0.b32.cont [7/16] 0.0, 128
        %1615 = vxpose.xlu0.b32.cont [8/16] 0.0, 128
        %1616 = vxpose.xlu0.b32.cont [9/16] 0.0, 128
        %1617 = vxpose.xlu0.b32.cont [10/16] 0.0, 128
        %1618 = vxpose.xlu0.b32.cont [11/16] 0.0, 128
        %1619 = vxpose.xlu0.b32.cont [12/16] 0.0, 128
        %1620 = vxpose.xlu0.b32.cont [13/16] 0.0, 128
        %1621 = vxpose.xlu0.b32.cont [14/16] 0.0, 128
        %1622 = vxpose.xlu0.b32.cont [15/16] 0.0, 128
        %1623 = vxpose.xlu0.b32.end [16/16] 0.0, 128
        %v1624 = vpop.trf.xlu0
        %v1625 = vpop.trf.xlu0
        %v1626 = vpop.trf.xlu0
        %v1627 = vpop.trf.xlu0
        %v1628 = vpop.trf.xlu0
        %v1629 = vpop.trf.xlu0
        %v1630 = vpop.trf.xlu0
        %v1631 = vpop.trf.xlu0
        %v1632 = vpop.trf.xlu0
        %v1633 = vpop.trf.xlu0
        %v1634 = vpop.trf.xlu0
        %v1635 = vpop.trf.xlu0
        %v1636 = vpop.trf.xlu0
        %v1637 = vpop.trf.xlu0
        %v1638 = vpop.trf.xlu0
        %v1639 = vpop.trf.xlu0
        %1640 = vxpose.xlu0.b32.start [1/16] %v1017, 128
        %1641 = vxpose.xlu0.b32.cont [2/16] %v1020, 128
        %1642 = vxpose.xlu0.b32.cont [3/16] %v1025, 128
        %1643 = vxpose.xlu0.b32.cont [4/16] %v1028, 128
        %1644 = vxpose.xlu0.b32.cont [5/16] 0.0, 128
        %1645 = vxpose.xlu0.b32.cont [6/16] 0.0, 128
        %1646 = vxpose.xlu0.b32.cont [7/16] 0.0, 128
        %1647 = vxpose.xlu0.b32.cont [8/16] 0.0, 128
        %1648 = vxpose.xlu0.b32.cont [9/16] 0.0, 128
        %1649 = vxpose.xlu0.b32.cont [10/16] 0.0, 128
        %1650 = vxpose.xlu0.b32.cont [11/16] 0.0, 128
        %1651 = vxpose.xlu0.b32.cont [12/16] 0.0, 128
        %1652 = vxpose.xlu0.b32.cont [13/16] 0.0, 128
        %1653 = vxpose.xlu0.b32.cont [14/16] 0.0, 128
        %1654 = vxpose.xlu0.b32.cont [15/16] 0.0, 128
        %1655 = vxpose.xlu0.b32.end [16/16] 0.0, 128
        %v1656 = vpop.trf.xlu0
        %v1657 = vpop.trf.xlu0
        %v1658 = vpop.trf.xlu0
        %v1659 = vpop.trf.xlu0
        %v1660 = vpop.trf.xlu0
        %v1661 = vpop.trf.xlu0
        %v1662 = vpop.trf.xlu0
        %v1663 = vpop.trf.xlu0
        %v1664 = vpop.trf.xlu0
        %v1665 = vpop.trf.xlu0
        %v1666 = vpop.trf.xlu0
        %v1667 = vpop.trf.xlu0
        %v1668 = vpop.trf.xlu0
        %v1669 = vpop.trf.xlu0
        %v1670 = vpop.trf.xlu0
        %v1671 = vpop.trf.xlu0
        %1672 = vxpose.xlu0.b32.start [1/16] %v1656, 128
        %1673 = vxpose.xlu0.b32.cont [2/16] %v1657, 128
        %1674 = vxpose.xlu0.b32.cont [3/16] %v1658, 128
        %1675 = vxpose.xlu0.b32.cont [4/16] %v1659, 128
        %1676 = vxpose.xlu0.b32.cont [5/16] 0.0, 128
        %1677 = vxpose.xlu0.b32.cont [6/16] 0.0, 128
        %1678 = vxpose.xlu0.b32.cont [7/16] 0.0, 128
        %1679 = vxpose.xlu0.b32.cont [8/16] 0.0, 128
        %1680 = vxpose.xlu0.b32.cont [9/16] 0.0, 128
        %1681 = vxpose.xlu0.b32.cont [10/16] 0.0, 128
        %1682 = vxpose.xlu0.b32.cont [11/16] 0.0, 128
        %1683 = vxpose.xlu0.b32.cont [12/16] 0.0, 128
        %1684 = vxpose.xlu0.b32.cont [13/16] 0.0, 128
        %1685 = vxpose.xlu0.b32.cont [14/16] 0.0, 128
        %1686 = vxpose.xlu0.b32.cont [15/16] 0.0, 128
        %1687 = vxpose.xlu0.b32.end [16/16] 0.0, 128
        %v1688 = vpop.trf.xlu0
        %v1689 = vpop.trf.xlu0
        %v1690 = vpop.trf.xlu0
        %v1691 = vpop.trf.xlu0
        %v1692 = vpop.trf.xlu0
        %v1693 = vpop.trf.xlu0
        %v1694 = vpop.trf.xlu0
        %v1695 = vpop.trf.xlu0
        %v1696 = vpop.trf.xlu0
        %v1697 = vpop.trf.xlu0
        %v1698 = vpop.trf.xlu0
        %v1699 = vpop.trf.xlu0
        %v1700 = vpop.trf.xlu0
        %v1701 = vpop.trf.xlu0
        %v1702 = vpop.trf.xlu0
        %v1703 = vpop.trf.xlu0
        %1704 = vxpose.xlu0.b32.start [1/16] %v1660, 128
        %1705 = vxpose.xlu0.b32.cont [2/16] %v1661, 128
        %1706 = vxpose.xlu0.b32.cont [3/16] %v1662, 128
        %1707 = vxpose.xlu0.b32.cont [4/16] %v1663, 128
        %1708 = vxpose.xlu0.b32.cont [5/16] 0.0, 128
        %1709 = vxpose.xlu0.b32.cont [6/16] 0.0, 128
        %1710 = vxpose.xlu0.b32.cont [7/16] 0.0, 128
        %1711 = vxpose.xlu0.b32.cont [8/16] 0.0, 128
        %1712 = vxpose.xlu0.b32.cont [9/16] 0.0, 128
        %1713 = vxpose.xlu0.b32.cont [10/16] 0.0, 128
        %1714 = vxpose.xlu0.b32.cont [11/16] 0.0, 128
        %1715 = vxpose.xlu0.b32.cont [12/16] 0.0, 128
        %1716 = vxpose.xlu0.b32.cont [13/16] 0.0, 128
        %1717 = vxpose.xlu0.b32.cont [14/16] 0.0, 128
        %1718 = vxpose.xlu0.b32.cont [15/16] 0.0, 128
        %1719 = vxpose.xlu0.b32.end [16/16] 0.0, 128
        %v1720 = vpop.trf.xlu0
        %v1721 = vpop.trf.xlu0
        %v1722 = vpop.trf.xlu0
        %v1723 = vpop.trf.xlu0
        %v1724 = vpop.trf.xlu0
        %v1725 = vpop.trf.xlu0
        %v1726 = vpop.trf.xlu0
        %v1727 = vpop.trf.xlu0
        %v1728 = vpop.trf.xlu0
        %v1729 = vpop.trf.xlu0
        %v1730 = vpop.trf.xlu0
        %v1731 = vpop.trf.xlu0
        %v1732 = vpop.trf.xlu0
        %v1733 = vpop.trf.xlu0
        %v1734 = vpop.trf.xlu0
        %v1735 = vpop.trf.xlu0
        %1736 = vxpose.xlu0.b32.start [1/16] %v1664, 128
        %1737 = vxpose.xlu0.b32.cont [2/16] %v1665, 128
        %1738 = vxpose.xlu0.b32.cont [3/16] %v1666, 128
        %1739 = vxpose.xlu0.b32.cont [4/16] %v1667, 128
        %1740 = vxpose.xlu0.b32.cont [5/16] 0.0, 128
        %1741 = vxpose.xlu0.b32.cont [6/16] 0.0, 128
        %1742 = vxpose.xlu0.b32.cont [7/16] 0.0, 128
        %1743 = vxpose.xlu0.b32.cont [8/16] 0.0, 128
        %1744 = vxpose.xlu0.b32.cont [9/16] 0.0, 128
        %1745 = vxpose.xlu0.b32.cont [10/16] 0.0, 128
        %1746 = vxpose.xlu0.b32.cont [11/16] 0.0, 128
        %1747 = vxpose.xlu0.b32.cont [12/16] 0.0, 128
        %1748 = vxpose.xlu0.b32.cont [13/16] 0.0, 128
        %1749 = vxpose.xlu0.b32.cont [14/16] 0.0, 128
        %1750 = vxpose.xlu0.b32.cont [15/16] 0.0, 128
        %1751 = vxpose.xlu0.b32.end [16/16] 0.0, 128
        %v1752 = vpop.trf.xlu0
        %v1753 = vpop.trf.xlu0
        %v1754 = vpop.trf.xlu0
        %v1755 = vpop.trf.xlu0
        %v1756 = vpop.trf.xlu0
        %v1757 = vpop.trf.xlu0
        %v1758 = vpop.trf.xlu0
        %v1759 = vpop.trf.xlu0
        %v1760 = vpop.trf.xlu0
        %v1761 = vpop.trf.xlu0
        %v1762 = vpop.trf.xlu0
        %v1763 = vpop.trf.xlu0
        %v1764 = vpop.trf.xlu0
        %v1765 = vpop.trf.xlu0
        %v1766 = vpop.trf.xlu0
        %v1767 = vpop.trf.xlu0
        %1768 = vxpose.xlu0.b32.start [1/16] %v1668, 128
        %1769 = vxpose.xlu0.b32.cont [2/16] %v1669, 128
        %1770 = vxpose.xlu0.b32.cont [3/16] %v1670, 128
        %1771 = vxpose.xlu0.b32.cont [4/16] %v1671, 128
        %1772 = vxpose.xlu0.b32.cont [5/16] 0.0, 128
        %1773 = vxpose.xlu0.b32.cont [6/16] 0.0, 128
        %1774 = vxpose.xlu0.b32.cont [7/16] 0.0, 128
        %1775 = vxpose.xlu0.b32.cont [8/16] 0.0, 128
        %1776 = vxpose.xlu0.b32.cont [9/16] 0.0, 128
        %1777 = vxpose.xlu0.b32.cont [10/16] 0.0, 128
        %1778 = vxpose.xlu0.b32.cont [11/16] 0.0, 128
        %1779 = vxpose.xlu0.b32.cont [12/16] 0.0, 128
        %1780 = vxpose.xlu0.b32.cont [13/16] 0.0, 128
        %1781 = vxpose.xlu0.b32.cont [14/16] 0.0, 128
        %1782 = vxpose.xlu0.b32.cont [15/16] 0.0, 128
        %1783 = vxpose.xlu0.b32.end [16/16] 0.0, 128
        %v1784 = vpop.trf.xlu0
        %v1785 = vpop.trf.xlu0
        %v1786 = vpop.trf.xlu0
        %v1787 = vpop.trf.xlu0
        %v1788 = vpop.trf.xlu0
        %v1789 = vpop.trf.xlu0
        %v1790 = vpop.trf.xlu0
        %v1791 = vpop.trf.xlu0
        %v1792 = vpop.trf.xlu0
        %v1793 = vpop.trf.xlu0
        %v1794 = vpop.trf.xlu0
        %v1795 = vpop.trf.xlu0
        %v1796 = vpop.trf.xlu0
        %v1797 = vpop.trf.xlu0
        %v1798 = vpop.trf.xlu0
        %v1799 = vpop.trf.xlu0
        %v1800 = vpack.c.bf16 %v1401, %v1400
        %v1801 = vpack.c.bf16 %v1403, %v1402
        %v1802 = vpack.c.bf16 %v1433, %v1432
        %v1803 = vpack.c.bf16 %v1435, %v1434
        %v1804 = vpack.c.bf16 %v1465, %v1464
        %v1805 = vpack.c.bf16 %v1467, %v1466
        %v1806 = vpack.c.bf16 %v1497, %v1496
        %v1807 = vpack.c.bf16 %v1499, %v1498
        %v1808 = vpack.c.bf16 %v1529, %v1528
        %v1809 = vpack.c.bf16 %v1531, %v1530
        %v1810 = vpack.c.bf16 %v1561, %v1560
        %v1811 = vpack.c.bf16 %v1563, %v1562
        %v1812 = vpack.c.bf16 %v1593, %v1592
        %v1813 = vpack.c.bf16 %v1595, %v1594
        %v1814 = vpack.c.bf16 %v1625, %v1624
        %v1815 = vpack.c.bf16 %v1627, %v1626
        %v1816 = vld [vmem:[#allocation3] sm:$0xff]
        %v1817 = vld [vmem:[#allocation3 + $0x8] sm:$0xff]
        %v1818 = vld [vmem:[#allocation3 + $0x10] sm:$0xff]
        %v1819 = vld [vmem:[#allocation3 + $0x18] sm:$0xff]
        %vm1820 = vcmask 261120
        %v1822 = vsel %vm1820, %v1800, 0
        %v1825 = vsel %vm1820, %v1801, 0
        %v1828 = vsel %vm1820, %v1808, 0
        %v1831 = vsel %vm1820, %v1809, 0
        %1833 = vmatprep.subr.bf16.mxu0 0
        %1834 = vmatpush1.bf16.xpose.msra.mxu0 %v1828
        %1835 = vmatprep.subr.bf16.mxu0 0
        %1836 = vmatpush1.bf16.xpose.msra.mxu0 %v1831
        %1837 = vmatprep.subr.bf16.mxu0 0
        %1838 = vmatpush1.bf16.xpose.msra.mxu0 0
        %1839 = vmatprep.subr.bf16.mxu0 0
        %1840 = vmatpush1.bf16.xpose.msra.mxu0 0
        %1841 = vmatprep.subr.bf16.mxu0 0
        %1842 = vmatpush1.bf16.xpose.msra.mxu0 0
        %1843 = vmatprep.subr.bf16.mxu0 0
        %1844 = vmatpush1.bf16.xpose.msra.mxu0 0
        %1845 = vmatprep.subr.bf16.mxu0 0
        %1846 = vmatpush1.bf16.xpose.msra.mxu0 0
        %1847 = vmatprep.subr.bf16.mxu0 0
        %1848 = vmatpush1.bf16.xpose.msra.mxu0 0
        %1849 = vmatprep.subr.bf16.mxu0 0
        %1850 = vmatpush1.bf16.xpose.msra.mxu0 0
        %1851 = vmatprep.subr.bf16.mxu0 0
        %1852 = vmatpush1.bf16.xpose.msra.mxu0 0
        %1853 = vmatprep.subr.bf16.mxu0 0
        %1854 = vmatpush1.bf16.xpose.msra.mxu0 0
        %1855 = vmatprep.subr.bf16.mxu0 0
        %1856 = vmatpush1.bf16.xpose.msra.mxu0 0
        %1857 = vmatprep.subr.bf16.mxu0 0
        %1858 = vmatpush1.bf16.xpose.msra.mxu0 0
        %1859 = vmatprep.subr.bf16.mxu0 0
        %1860 = vmatpush1.bf16.xpose.msra.mxu0 0
        %1861 = vmatprep.subr.bf16.mxu0 0
        %1862 = vmatpush1.bf16.xpose.msra.mxu0 0
        %1863 = vmatprep.subr.bf16.mxu0 0
        %1864 = vmatpush1.bf16.xpose.msra.mxu0 0
        %1865 = vmatprep.mubr.bf16.mxu0 0
        %1866 = vmatmul.mubr.bf16.gmra.mrb[0].mxu0 %v1822
        %v1867 = vpop.f32.mrb[0].mxu0
        %v1868 = vadd.f32 %v1816, %v1867
        %v1869 = vpop.f32.mrb[0].mxu0
        %v1870 = vpop.f32.mrb[0].mxu0
        %v1871 = vadd.f32 %v1817, %v1870
        %v1872 = vpop.f32.mrb[0].mxu0
        %1873 = vmatprep.mubr.bf16.mxu0 0
        %1874 = vmatmul.mubr.bf16.gmra.mrb[0].mxu0 %v1825
        %v1875 = vpop.f32.mrb[0].mxu0
        %v1876 = vadd.f32 %v1818, %v1875
        %v1877 = vpop.f32.mrb[0].mxu0
        %v1878 = vpop.f32.mrb[0].mxu0
        %v1879 = vadd.f32 %v1819, %v1878
        %v1880 = vpop.f32.mrb[0].mxu0
        %1881 = vdwg.mxu0
        %v1883 = vsel %vm1820, %v1802, 0
        %v1886 = vsel %vm1820, %v1803, 0
        %v1889 = vsel %vm1820, %v1810, 0
        %v1892 = vsel %vm1820, %v1811, 0
        %1894 = vmatprep.subr.bf16.mxu0 0
        %1895 = vmatpush1.bf16.xpose.msra.mxu0 %v1889
        %1896 = vmatprep.subr.bf16.mxu0 0
        %1897 = vmatpush1.bf16.xpose.msra.mxu0 %v1892
        %1898 = vmatprep.subr.bf16.mxu0 0
        %1899 = vmatpush1.bf16.xpose.msra.mxu0 0
        %1900 = vmatprep.subr.bf16.mxu0 0
        %1901 = vmatpush1.bf16.xpose.msra.mxu0 0
        %1902 = vmatprep.subr.bf16.mxu0 0
        %1903 = vmatpush1.bf16.xpose.msra.mxu0 0
        %1904 = vmatprep.subr.bf16.mxu0 0
        %1905 = vmatpush1.bf16.xpose.msra.mxu0 0
        %1906 = vmatprep.subr.bf16.mxu0 0
        %1907 = vmatpush1.bf16.xpose.msra.mxu0 0
        %1908 = vmatprep.subr.bf16.mxu0 0
        %1909 = vmatpush1.bf16.xpose.msra.mxu0 0
        %1910 = vmatprep.subr.bf16.mxu0 0
        %1911 = vmatpush1.bf16.xpose.msra.mxu0 0
        %1912 = vmatprep.subr.bf16.mxu0 0
        %1913 = vmatpush1.bf16.xpose.msra.mxu0 0
        %1914 = vmatprep.subr.bf16.mxu0 0
        %1915 = vmatpush1.bf16.xpose.msra.mxu0 0
        %1916 = vmatprep.subr.bf16.mxu0 0
        %1917 = vmatpush1.bf16.xpose.msra.mxu0 0
        %1918 = vmatprep.subr.bf16.mxu0 0
        %1919 = vmatpush1.bf16.xpose.msra.mxu0 0
        %1920 = vmatprep.subr.bf16.mxu0 0
        %1921 = vmatpush1.bf16.xpose.msra.mxu0 0
        %1922 = vmatprep.subr.bf16.mxu0 0
        %1923 = vmatpush1.bf16.xpose.msra.mxu0 0
        %1924 = vmatprep.subr.bf16.mxu0 0
        %1925 = vmatpush1.bf16.xpose.msra.mxu0 0
        %1926 = vmatprep.mubr.bf16.mxu0 0
        %1927 = vmatmul.mubr.bf16.gmra.mrb[0].mxu0 %v1883
        %v1928 = vpop.f32.mrb[0].mxu0
        %v1929 = vadd.f32 %v1816, %v1928
        %v1930 = vpop.f32.mrb[0].mxu0
        %v1931 = vpop.f32.mrb[0].mxu0
        %v1932 = vadd.f32 %v1817, %v1931
        %v1933 = vpop.f32.mrb[0].mxu0
        %1934 = vmatprep.mubr.bf16.mxu0 0
        %1935 = vmatmul.mubr.bf16.gmra.mrb[0].mxu0 %v1886
        %v1936 = vpop.f32.mrb[0].mxu0
        %v1937 = vadd.f32 %v1818, %v1936
        %v1938 = vpop.f32.mrb[0].mxu0
        %v1939 = vpop.f32.mrb[0].mxu0
        %v1940 = vadd.f32 %v1819, %v1939
        %v1941 = vpop.f32.mrb[0].mxu0
        %1942 = vdwg.mxu0
        %v1944 = vsel %vm1820, %v1804, 0
        %v1947 = vsel %vm1820, %v1805, 0
        %v1950 = vsel %vm1820, %v1812, 0
        %v1953 = vsel %vm1820, %v1813, 0
        %1955 = vmatprep.subr.bf16.mxu0 0
        %1956 = vmatpush1.bf16.xpose.msra.mxu0 %v1950
        %1957 = vmatprep.subr.bf16.mxu0 0
        %1958 = vmatpush1.bf16.xpose.msra.mxu0 %v1953
        %1959 = vmatprep.subr.bf16.mxu0 0
        %1960 = vmatpush1.bf16.xpose.msra.mxu0 0
        %1961 = vmatprep.subr.bf16.mxu0 0
        %1962 = vmatpush1.bf16.xpose.msra.mxu0 0
        %1963 = vmatprep.subr.bf16.mxu0 0
        %1964 = vmatpush1.bf16.xpose.msra.mxu0 0
        %1965 = vmatprep.subr.bf16.mxu0 0
        %1966 = vmatpush1.bf16.xpose.msra.mxu0 0
        %1967 = vmatprep.subr.bf16.mxu0 0
        %1968 = vmatpush1.bf16.xpose.msra.mxu0 0
        %1969 = vmatprep.subr.bf16.mxu0 0
        %1970 = vmatpush1.bf16.xpose.msra.mxu0 0
        %1971 = vmatprep.subr.bf16.mxu0 0
        %1972 = vmatpush1.bf16.xpose.msra.mxu0 0
        %1973 = vmatprep.subr.bf16.mxu0 0
        %1974 = vmatpush1.bf16.xpose.msra.mxu0 0
        %1975 = vmatprep.subr.bf16.mxu0 0
        %1976 = vmatpush1.bf16.xpose.msra.mxu0 0
        %1977 = vmatprep.subr.bf16.mxu0 0
        %1978 = vmatpush1.bf16.xpose.msra.mxu0 0
        %1979 = vmatprep.subr.bf16.mxu0 0
        %1980 = vmatpush1.bf16.xpose.msra.mxu0 0
        %1981 = vmatprep.subr.bf16.mxu0 0
        %1982 = vmatpush1.bf16.xpose.msra.mxu0 0
        %1983 = vmatprep.subr.bf16.mxu0 0
        %1984 = vmatpush1.bf16.xpose.msra.mxu0 0
        %1985 = vmatprep.subr.bf16.mxu0 0
        %1986 = vmatpush1.bf16.xpose.msra.mxu0 0
        %1987 = vmatprep.mubr.bf16.mxu0 0
        %1988 = vmatmul.mubr.bf16.gmra.mrb[0].mxu0 %v1944
        %v1989 = vpop.f32.mrb[0].mxu0
        %v1990 = vadd.f32 %v1816, %v1989
        %v1991 = vpop.f32.mrb[0].mxu0
        %v1992 = vpop.f32.mrb[0].mxu0
        %v1993 = vadd.f32 %v1817, %v1992
        %v1994 = vpop.f32.mrb[0].mxu0
        %1995 = vmatprep.mubr.bf16.mxu0 0
        %1996 = vmatmul.mubr.bf16.gmra.mrb[0].mxu0 %v1947
        %v1997 = vpop.f32.mrb[0].mxu0
        %v1998 = vadd.f32 %v1818, %v1997
        %v1999 = vpop.f32.mrb[0].mxu0
        %v2000 = vpop.f32.mrb[0].mxu0
        %v2001 = vadd.f32 %v1819, %v2000
        %v2002 = vpop.f32.mrb[0].mxu0
        %2003 = vdwg.mxu0
        %v2005 = vsel %vm1820, %v1806, 0
        %v2008 = vsel %vm1820, %v1807, 0
        %v2011 = vsel %vm1820, %v1814, 0
        %v2014 = vsel %vm1820, %v1815, 0
        %2016 = vmatprep.subr.bf16.mxu0 0
        %2017 = vmatpush1.bf16.xpose.msra.mxu0 %v2011
        %2018 = vmatprep.subr.bf16.mxu0 0
        %2019 = vmatpush1.bf16.xpose.msra.mxu0 %v2014
        %2020 = vmatprep.subr.bf16.mxu0 0
        %2021 = vmatpush1.bf16.xpose.msra.mxu0 0
        %2022 = vmatprep.subr.bf16.mxu0 0
        %2023 = vmatpush1.bf16.xpose.msra.mxu0 0
        %2024 = vmatprep.subr.bf16.mxu0 0
        %2025 = vmatpush1.bf16.xpose.msra.mxu0 0
        %2026 = vmatprep.subr.bf16.mxu0 0
        %2027 = vmatpush1.bf16.xpose.msra.mxu0 0
        %2028 = vmatprep.subr.bf16.mxu0 0
        %2029 = vmatpush1.bf16.xpose.msra.mxu0 0
        %2030 = vmatprep.subr.bf16.mxu0 0
        %2031 = vmatpush1.bf16.xpose.msra.mxu0 0
        %2032 = vmatprep.subr.bf16.mxu0 0
        %2033 = vmatpush1.bf16.xpose.msra.mxu0 0
        %2034 = vmatprep.subr.bf16.mxu0 0
        %2035 = vmatpush1.bf16.xpose.msra.mxu0 0
        %2036 = vmatprep.subr.bf16.mxu0 0
        %2037 = vmatpush1.bf16.xpose.msra.mxu0 0
        %2038 = vmatprep.subr.bf16.mxu0 0
        %2039 = vmatpush1.bf16.xpose.msra.mxu0 0
        %2040 = vmatprep.subr.bf16.mxu0 0
        %2041 = vmatpush1.bf16.xpose.msra.mxu0 0
        %2042 = vmatprep.subr.bf16.mxu0 0
        %2043 = vmatpush1.bf16.xpose.msra.mxu0 0
        %2044 = vmatprep.subr.bf16.mxu0 0
        %2045 = vmatpush1.bf16.xpose.msra.mxu0 0
        %2046 = vmatprep.subr.bf16.mxu0 0
        %2047 = vmatpush1.bf16.xpose.msra.mxu0 0
        %2048 = vmatprep.mubr.bf16.mxu0 0
        %2049 = vmatmul.mubr.bf16.gmra.mrb[0].mxu0 %v2005
        %v2050 = vpop.f32.mrb[0].mxu0
        %v2051 = vadd.f32 %v1816, %v2050
        %v2052 = vpop.f32.mrb[0].mxu0
        %v2053 = vpop.f32.mrb[0].mxu0
        %v2054 = vadd.f32 %v1817, %v2053
        %v2055 = vpop.f32.mrb[0].mxu0
        %2056 = vmatprep.mubr.bf16.mxu0 0
        %2057 = vmatmul.mubr.bf16.gmra.mrb[0].mxu0 %v2008
        %v2058 = vpop.f32.mrb[0].mxu0
        %v2059 = vadd.f32 %v1818, %v2058
        %v2060 = vpop.f32.mrb[0].mxu0
        %v2061 = vpop.f32.mrb[0].mxu0
        %v2062 = vadd.f32 %v1819, %v2061
        %v2063 = vpop.f32.mrb[0].mxu0
        %2064 = vdwg.mxu0
        %v2065 = vsel %vm1820, %v1868, -inf
        %2066 = vmax.xlane.f32.xlu0 %v2065
        %v2067 = vpop.xlane.xlu0 %2066
        %v2068 = vsel %vm1820, %v1871, -inf
        %2069 = vmax.xlane.f32.xlu0 %v2068
        %v2070 = vpop.xlane.xlu0 %2069
        %v2071 = vsel %vm1820, %v1876, -inf
        %2072 = vmax.xlane.f32.xlu0 %v2071
        %v2073 = vpop.xlane.xlu0 %2072
        %v2074 = vsel %vm1820, %v1879, -inf
        %2075 = vmax.xlane.f32.xlu0 %v2074
        %v2076 = vpop.xlane.xlu0 %2075
        %v2077 = vsel %vm1820, %v1929, -inf
        %2078 = vmax.xlane.f32.xlu0 %v2077
        %v2079 = vpop.xlane.xlu0 %2078
        %v2080 = vsel %vm1820, %v1932, -inf
        %2081 = vmax.xlane.f32.xlu0 %v2080
        %v2082 = vpop.xlane.xlu0 %2081
        %v2083 = vsel %vm1820, %v1937, -inf
        %2084 = vmax.xlane.f32.xlu0 %v2083
        %v2085 = vpop.xlane.xlu0 %2084
        %v2086 = vsel %vm1820, %v1940, -inf
        %2087 = vmax.xlane.f32.xlu0 %v2086
        %v2088 = vpop.xlane.xlu0 %2087
        %v2089 = vsel %vm1820, %v1990, -inf
        %2090 = vmax.xlane.f32.xlu0 %v2089
        %v2091 = vpop.xlane.xlu0 %2090
        %v2092 = vsel %vm1820, %v1993, -inf
        %2093 = vmax.xlane.f32.xlu0 %v2092
        %v2094 = vpop.xlane.xlu0 %2093
        %v2095 = vsel %vm1820, %v1998, -inf
        %2096 = vmax.xlane.f32.xlu0 %v2095
        %v2097 = vpop.xlane.xlu0 %2096
        %v2098 = vsel %vm1820, %v2001, -inf
        %2099 = vmax.xlane.f32.xlu0 %v2098
        %v2100 = vpop.xlane.xlu0 %2099
        %v2101 = vsel %vm1820, %v2051, -inf
        %2102 = vmax.xlane.f32.xlu0 %v2101
        %v2103 = vpop.xlane.xlu0 %2102
        %v2104 = vsel %vm1820, %v2054, -inf
        %2105 = vmax.xlane.f32.xlu0 %v2104
        %v2106 = vpop.xlane.xlu0 %2105
        %v2107 = vsel %vm1820, %v2059, -inf
        %2108 = vmax.xlane.f32.xlu0 %v2107
        %v2109 = vpop.xlane.xlu0 %2108
        %v2110 = vsel %vm1820, %v2062, -inf
        %2111 = vmax.xlane.f32.xlu0 %v2110
        %v2112 = vpop.xlane.xlu0 %2111
        %v2113 = vsub.f32 %v1868, %v2067
        %v2114 = vsub.f32 %v1871, %v2070
        %v2115 = vsub.f32 %v1876, %v2073
        %v2116 = vsub.f32 %v1879, %v2076
        %v2117 = vsub.f32 %v1929, %v2079
        %v2118 = vsub.f32 %v1932, %v2082
        %v2119 = vsub.f32 %v1937, %v2085
        %v2120 = vsub.f32 %v1940, %v2088
        %v2121 = vsub.f32 %v1990, %v2091
        %v2122 = vsub.f32 %v1993, %v2094
        %v2123 = vsub.f32 %v1998, %v2097
        %v2124 = vsub.f32 %v2001, %v2100
        %v2125 = vsub.f32 %v2051, %v2103
        %v2126 = vsub.f32 %v2054, %v2106
        %v2127 = vsub.f32 %v2059, %v2109
        %v2128 = vsub.f32 %v2062, %v2112
        %v2129 = vmul.f32 %v2113, 1.442695
        %v2130 = vpow.pop %v2129
        %v2131 = vmul.f32 %v2114, 1.442695
        %v2132 = vpow.pop %v2131
        %v2133 = vmul.f32 %v2115, 1.442695
        %v2134 = vpow.pop %v2133
        %v2135 = vmul.f32 %v2116, 1.442695
        %v2136 = vpow.pop %v2135
        %v2137 = vmul.f32 %v2117, 1.442695
        %v2138 = vpow.pop %v2137
        %v2139 = vmul.f32 %v2118, 1.442695
        %v2140 = vpow.pop %v2139
        %v2141 = vmul.f32 %v2119, 1.442695
        %v2142 = vpow.pop %v2141
        %v2143 = vmul.f32 %v2120, 1.442695
        %v2144 = vpow.pop %v2143
        %v2145 = vmul.f32 %v2121, 1.442695
        %v2146 = vpow.pop %v2145
        %v2147 = vmul.f32 %v2122, 1.442695
        %v2148 = vpow.pop %v2147
        %v2149 = vmul.f32 %v2123, 1.442695
        %v2150 = vpow.pop %v2149
        %v2151 = vmul.f32 %v2124, 1.442695
        %v2152 = vpow.pop %v2151
        %v2153 = vmul.f32 %v2125, 1.442695
        %v2154 = vpow.pop %v2153
        %v2155 = vmul.f32 %v2126, 1.442695
        %v2156 = vpow.pop %v2155
        %v2157 = vmul.f32 %v2127, 1.442695
        %v2158 = vpow.pop %v2157
        %v2159 = vmul.f32 %v2128, 1.442695
        %v2160 = vpow.pop %v2159
        %v2161 = vsel %vm1820, %v2130, 0.0
        %2162 = vadd.xlane.f32.xlu0 %v2161
        %v2163 = vpop.xlane.xlu0 %2162
        %v2164 = vsel %vm1820, %v2132, 0.0
        %2165 = vadd.xlane.f32.xlu0 %v2164
        %v2166 = vpop.xlane.xlu0 %2165
        %v2167 = vsel %vm1820, %v2134, 0.0
        %2168 = vadd.xlane.f32.xlu0 %v2167
        %v2169 = vpop.xlane.xlu0 %2168
        %v2170 = vsel %vm1820, %v2136, 0.0
        %2171 = vadd.xlane.f32.xlu0 %v2170
        %v2172 = vpop.xlane.xlu0 %2171
        %v2173 = vsel %vm1820, %v2138, 0.0
        %2174 = vadd.xlane.f32.xlu0 %v2173
        %v2175 = vpop.xlane.xlu0 %2174
        %v2176 = vsel %vm1820, %v2140, 0.0
        %2177 = vadd.xlane.f32.xlu0 %v2176
        %v2178 = vpop.xlane.xlu0 %2177
        %v2179 = vsel %vm1820, %v2142, 0.0
        %2180 = vadd.xlane.f32.xlu0 %v2179
        %v2181 = vpop.xlane.xlu0 %2180
        %v2182 = vsel %vm1820, %v2144, 0.0
        %2183 = vadd.xlane.f32.xlu0 %v2182
        %v2184 = vpop.xlane.xlu0 %2183
        %v2185 = vsel %vm1820, %v2146, 0.0
        %2186 = vadd.xlane.f32.xlu0 %v2185
        %v2187 = vpop.xlane.xlu0 %2186
        %v2188 = vsel %vm1820, %v2148, 0.0
        %2189 = vadd.xlane.f32.xlu0 %v2188
        %v2190 = vpop.xlane.xlu0 %2189
        %v2191 = vsel %vm1820, %v2150, 0.0
        %2192 = vadd.xlane.f32.xlu0 %v2191
        %v2193 = vpop.xlane.xlu0 %2192
        %v2194 = vsel %vm1820, %v2152, 0.0
        %2195 = vadd.xlane.f32.xlu0 %v2194
        %v2196 = vpop.xlane.xlu0 %2195
        %v2197 = vsel %vm1820, %v2154, 0.0
        %2198 = vadd.xlane.f32.xlu0 %v2197
        %v2199 = vpop.xlane.xlu0 %2198
        %v2200 = vsel %vm1820, %v2156, 0.0
        %2201 = vadd.xlane.f32.xlu0 %v2200
        %v2202 = vpop.xlane.xlu0 %2201
        %v2203 = vsel %vm1820, %v2158, 0.0
        %2204 = vadd.xlane.f32.xlu0 %v2203
        %v2205 = vpop.xlane.xlu0 %2204
        %v2206 = vsel %vm1820, %v2160, 0.0
        %2207 = vadd.xlane.f32.xlu0 %v2206
        %v2208 = vpop.xlane.xlu0 %2207
        %v2209 = vrcp.pop %v2163
        %v2210 = vrcp.pop %v2166
        %v2211 = vrcp.pop %v2169
        %v2212 = vrcp.pop %v2172
        %v2213 = vrcp.pop %v2175
        %v2214 = vrcp.pop %v2178
        %v2215 = vrcp.pop %v2181
        %v2216 = vrcp.pop %v2184
        %v2217 = vrcp.pop %v2187
        %v2218 = vrcp.pop %v2190
        %v2219 = vrcp.pop %v2193
        %v2220 = vrcp.pop %v2196
        %v2221 = vrcp.pop %v2199
        %v2222 = vrcp.pop %v2202
        %v2223 = vrcp.pop %v2205
        %v2224 = vrcp.pop %v2208
        %v2225 = vmul.f32 %v2130, %v2209
        %v2226 = vmul.f32 %v2132, %v2210
        %v2227 = vmul.f32 %v2134, %v2211
        %v2228 = vmul.f32 %v2136, %v2212
        %v2229 = vmul.f32 %v2138, %v2213
        %v2230 = vmul.f32 %v2140, %v2214
        %v2231 = vmul.f32 %v2142, %v2215
        %v2232 = vmul.f32 %v2144, %v2216
        %v2233 = vmul.f32 %v2146, %v2217
        %v2234 = vmul.f32 %v2148, %v2218
        %v2235 = vmul.f32 %v2150, %v2219
        %v2236 = vmul.f32 %v2152, %v2220
        %v2237 = vmul.f32 %v2154, %v2221
        %v2238 = vmul.f32 %v2156, %v2222
        %v2239 = vmul.f32 %v2158, %v2223
        %v2240 = vmul.f32 %v2160, %v2224
        %v2241 = vpack.c.bf16 %v2226, %v2225
        %v2242 = vpack.c.bf16 %v2228, %v2227
        %v2243 = vpack.c.bf16 %v2230, %v2229
        %v2244 = vpack.c.bf16 %v2232, %v2231
        %v2245 = vpack.c.bf16 %v2234, %v2233
        %v2246 = vpack.c.bf16 %v2236, %v2235
        %v2247 = vpack.c.bf16 %v2238, %v2237
        %v2248 = vpack.c.bf16 %v2240, %v2239
        %v2249 = vpack.c.bf16 %v1689, %v1688
        %v2250 = vpack.c.bf16 %v1691, %v1690
        %v2251 = vpack.c.bf16 %v1721, %v1720
        %v2252 = vpack.c.bf16 %v1723, %v1722
        %v2253 = vpack.c.bf16 %v1753, %v1752
        %v2254 = vpack.c.bf16 %v1755, %v1754
        %v2255 = vpack.c.bf16 %v1785, %v1784
        %v2256 = vpack.c.bf16 %v1787, %v1786
        %v2258 = vsel %vm1820, %v2241, 0
        %v2261 = vsel %vm1820, %v2242, 0
        %2263 = vmatprep.subr.bf16.mxu0 0
        %2264 = vmatpush1.bf16.msra.mxu0 %v2249
        %2265 = vmatprep.subr.bf16.mxu0 0
        %2266 = vmatpush1.bf16.msra.mxu0 %v2250
        %2267 = vmatprep.subr.bf16.mxu0 0
        %2268 = vmatpush1.bf16.msra.mxu0 0
        %2269 = vmatprep.subr.bf16.mxu0 0
        %2270 = vmatpush1.bf16.msra.mxu0 0
        %2271 = vmatprep.subr.bf16.mxu0 0
        %2272 = vmatpush1.bf16.msra.mxu0 0
        %2273 = vmatprep.subr.bf16.mxu0 0
        %2274 = vmatpush1.bf16.msra.mxu0 0
        %2275 = vmatprep.subr.bf16.mxu0 0
        %2276 = vmatpush1.bf16.msra.mxu0 0
        %2277 = vmatprep.subr.bf16.mxu0 0
        %2278 = vmatpush1.bf16.msra.mxu0 0
        %2279 = vmatprep.subr.bf16.mxu0 0
        %2280 = vmatpush1.bf16.msra.mxu0 0
        %2281 = vmatprep.subr.bf16.mxu0 0
        %2282 = vmatpush1.bf16.msra.mxu0 0
        %2283 = vmatprep.subr.bf16.mxu0 0
        %2284 = vmatpush1.bf16.msra.mxu0 0
        %2285 = vmatprep.subr.bf16.mxu0 0
        %2286 = vmatpush1.bf16.msra.mxu0 0
        %2287 = vmatprep.subr.bf16.mxu0 0
        %2288 = vmatpush1.bf16.msra.mxu0 0
        %2289 = vmatprep.subr.bf16.mxu0 0
        %2290 = vmatpush1.bf16.msra.mxu0 0
        %2291 = vmatprep.subr.bf16.mxu0 0
        %2292 = vmatpush1.bf16.msra.mxu0 0
        %2293 = vmatprep.subr.bf16.mxu0 0
        %2294 = vmatpush1.bf16.msra.mxu0 0
        %2295 = vmatprep.mubr.bf16.mxu0 0
        %2296 = vmatmul.mubr.bf16.gmra.mrb[0].mxu0 %v2258
        %v2297 = vpop.f32.mrb[0].mxu0
        %v2298 = vadd.f32 0.0, %v2297
        %v2299 = vpop.f32.mrb[0].mxu0
        %v2300 = vpop.f32.mrb[0].mxu0
        %v2301 = vadd.f32 0.0, %v2300
        %v2302 = vpop.f32.mrb[0].mxu0
        %2303 = vmatprep.mubr.bf16.mxu0 0
        %2304 = vmatmul.mubr.bf16.gmra.mrb[0].mxu0 %v2261
        %v2305 = vpop.f32.mrb[0].mxu0
        %v2306 = vadd.f32 0.0, %v2305
        %v2307 = vpop.f32.mrb[0].mxu0
        %v2308 = vpop.f32.mrb[0].mxu0
        %v2309 = vadd.f32 0.0, %v2308
        %v2310 = vpop.f32.mrb[0].mxu0
        %2311 = vdwg.mxu0
        %v2313 = vsel %vm1820, %v2243, 0
        %v2316 = vsel %vm1820, %v2244, 0
        %2318 = vmatprep.subr.bf16.mxu0 0
        %2319 = vmatpush1.bf16.msra.mxu0 %v2251
        %2320 = vmatprep.subr.bf16.mxu0 0
        %2321 = vmatpush1.bf16.msra.mxu0 %v2252
        %2322 = vmatprep.subr.bf16.mxu0 0
        %2323 = vmatpush1.bf16.msra.mxu0 0
        %2324 = vmatprep.subr.bf16.mxu0 0
        %2325 = vmatpush1.bf16.msra.mxu0 0
        %2326 = vmatprep.subr.bf16.mxu0 0
        %2327 = vmatpush1.bf16.msra.mxu0 0
        %2328 = vmatprep.subr.bf16.mxu0 0
        %2329 = vmatpush1.bf16.msra.mxu0 0
        %2330 = vmatprep.subr.bf16.mxu0 0
        %2331 = vmatpush1.bf16.msra.mxu0 0
        %2332 = vmatprep.subr.bf16.mxu0 0
        %2333 = vmatpush1.bf16.msra.mxu0 0
        %2334 = vmatprep.subr.bf16.mxu0 0
        %2335 = vmatpush1.bf16.msra.mxu0 0
        %2336 = vmatprep.subr.bf16.mxu0 0
        %2337 = vmatpush1.bf16.msra.mxu0 0
        %2338 = vmatprep.subr.bf16.mxu0 0
        %2339 = vmatpush1.bf16.msra.mxu0 0
        %2340 = vmatprep.subr.bf16.mxu0 0
        %2341 = vmatpush1.bf16.msra.mxu0 0
        %2342 = vmatprep.subr.bf16.mxu0 0
        %2343 = vmatpush1.bf16.msra.mxu0 0
        %2344 = vmatprep.subr.bf16.mxu0 0
        %2345 = vmatpush1.bf16.msra.mxu0 0
        %2346 = vmatprep.subr.bf16.mxu0 0
        %2347 = vmatpush1.bf16.msra.mxu0 0
        %2348 = vmatprep.subr.bf16.mxu0 0
        %2349 = vmatpush1.bf16.msra.mxu0 0
        %2350 = vmatprep.mubr.bf16.mxu0 0
        %2351 = vmatmul.mubr.bf16.gmra.mrb[0].mxu0 %v2313
        %v2352 = vpop.f32.mrb[0].mxu0
        %v2353 = vadd.f32 0.0, %v2352
        %v2354 = vpop.f32.mrb[0].mxu0
        %v2355 = vpop.f32.mrb[0].mxu0
        %v2356 = vadd.f32 0.0, %v2355
        %v2357 = vpop.f32.mrb[0].mxu0
        %2358 = vmatprep.mubr.bf16.mxu0 0
        %2359 = vmatmul.mubr.bf16.gmra.mrb[0].mxu0 %v2316
        %v2360 = vpop.f32.mrb[0].mxu0
        %v2361 = vadd.f32 0.0, %v2360
        %v2362 = vpop.f32.mrb[0].mxu0
        %v2363 = vpop.f32.mrb[0].mxu0
        %v2364 = vadd.f32 0.0, %v2363
        %v2365 = vpop.f32.mrb[0].mxu0
        %2366 = vdwg.mxu0
        %v2368 = vsel %vm1820, %v2245, 0
        %v2371 = vsel %vm1820, %v2246, 0
        %2373 = vmatprep.subr.bf16.mxu0 0
        %2374 = vmatpush1.bf16.msra.mxu0 %v2253
        %2375 = vmatprep.subr.bf16.mxu0 0
        %2376 = vmatpush1.bf16.msra.mxu0 %v2254
        %2377 = vmatprep.subr.bf16.mxu0 0
        %2378 = vmatpush1.bf16.msra.mxu0 0
        %2379 = vmatprep.subr.bf16.mxu0 0
        %2380 = vmatpush1.bf16.msra.mxu0 0
        %2381 = vmatprep.subr.bf16.mxu0 0
        %2382 = vmatpush1.bf16.msra.mxu0 0
        %2383 = vmatprep.subr.bf16.mxu0 0
        %2384 = vmatpush1.bf16.msra.mxu0 0
        %2385 = vmatprep.subr.bf16.mxu0 0
        %2386 = vmatpush1.bf16.msra.mxu0 0
        %2387 = vmatprep.subr.bf16.mxu0 0
        %2388 = vmatpush1.bf16.msra.mxu0 0
        %2389 = vmatprep.subr.bf16.mxu0 0
        %2390 = vmatpush1.bf16.msra.mxu0 0
        %2391 = vmatprep.subr.bf16.mxu0 0
        %2392 = vmatpush1.bf16.msra.mxu0 0
        %2393 = vmatprep.subr.bf16.mxu0 0
        %2394 = vmatpush1.bf16.msra.mxu0 0
        %2395 = vmatprep.subr.bf16.mxu0 0
        %2396 = vmatpush1.bf16.msra.mxu0 0
        %2397 = vmatprep.subr.bf16.mxu0 0
        %2398 = vmatpush1.bf16.msra.mxu0 0
        %2399 = vmatprep.subr.bf16.mxu0 0
        %2400 = vmatpush1.bf16.msra.mxu0 0
        %2401 = vmatprep.subr.bf16.mxu0 0
        %2402 = vmatpush1.bf16.msra.mxu0 0
        %2403 = vmatprep.subr.bf16.mxu0 0
        %2404 = vmatpush1.bf16.msra.mxu0 0
        %2405 = vmatprep.mubr.bf16.mxu0 0
        %2406 = vmatmul.mubr.bf16.gmra.mrb[0].mxu0 %v2368
        %v2407 = vpop.f32.mrb[0].mxu0
        %v2408 = vadd.f32 0.0, %v2407
        %v2409 = vpop.f32.mrb[0].mxu0
        %v2410 = vpop.f32.mrb[0].mxu0
        %v2411 = vadd.f32 0.0, %v2410
        %v2412 = vpop.f32.mrb[0].mxu0
        %2413 = vmatprep.mubr.bf16.mxu0 0
        %2414 = vmatmul.mubr.bf16.gmra.mrb[0].mxu0 %v2371
        %v2415 = vpop.f32.mrb[0].mxu0
        %v2416 = vadd.f32 0.0, %v2415
        %v2417 = vpop.f32.mrb[0].mxu0
        %v2418 = vpop.f32.mrb[0].mxu0
        %v2419 = vadd.f32 0.0, %v2418
        %v2420 = vpop.f32.mrb[0].mxu0
        %2421 = vdwg.mxu0
        %v2423 = vsel %vm1820, %v2247, 0
        %v2426 = vsel %vm1820, %v2248, 0
        %2428 = vmatprep.subr.bf16.mxu0 0
        %2429 = vmatpush1.bf16.msra.mxu0 %v2255
        %2430 = vmatprep.subr.bf16.mxu0 0
        %2431 = vmatpush1.bf16.msra.mxu0 %v2256
        %2432 = vmatprep.subr.bf16.mxu0 0
        %2433 = vmatpush1.bf16.msra.mxu0 0
        %2434 = vmatprep.subr.bf16.mxu0 0
        %2435 = vmatpush1.bf16.msra.mxu0 0
        %2436 = vmatprep.subr.bf16.mxu0 0
        %2437 = vmatpush1.bf16.msra.mxu0 0
        %2438 = vmatprep.subr.bf16.mxu0 0
        %2439 = vmatpush1.bf16.msra.mxu0 0
        %2440 = vmatprep.subr.bf16.mxu0 0
        %2441 = vmatpush1.bf16.msra.mxu0 0
        %2442 = vmatprep.subr.bf16.mxu0 0
        %2443 = vmatpush1.bf16.msra.mxu0 0
        %2444 = vmatprep.subr.bf16.mxu0 0
        %2445 = vmatpush1.bf16.msra.mxu0 0
        %2446 = vmatprep.subr.bf16.mxu0 0
        %2447 = vmatpush1.bf16.msra.mxu0 0
        %2448 = vmatprep.subr.bf16.mxu0 0
        %2449 = vmatpush1.bf16.msra.mxu0 0
        %2450 = vmatprep.subr.bf16.mxu0 0
        %2451 = vmatpush1.bf16.msra.mxu0 0
        %2452 = vmatprep.subr.bf16.mxu0 0
        %2453 = vmatpush1.bf16.msra.mxu0 0
        %2454 = vmatprep.subr.bf16.mxu0 0
        %2455 = vmatpush1.bf16.msra.mxu0 0
        %2456 = vmatprep.subr.bf16.mxu0 0
        %2457 = vmatpush1.bf16.msra.mxu0 0
        %2458 = vmatprep.subr.bf16.mxu0 0
        %2459 = vmatpush1.bf16.msra.mxu0 0
        %2460 = vmatprep.mubr.bf16.mxu0 0
        %2461 = vmatmul.mubr.bf16.gmra.mrb[0].mxu0 %v2423
        %v2462 = vpop.f32.mrb[0].mxu0
        %v2463 = vadd.f32 0.0, %v2462
        %v2464 = vpop.f32.mrb[0].mxu0
        %v2465 = vpop.f32.mrb[0].mxu0
        %v2466 = vadd.f32 0.0, %v2465
        %v2467 = vpop.f32.mrb[0].mxu0
        %2468 = vmatprep.mubr.bf16.mxu0 0
        %2469 = vmatmul.mubr.bf16.gmra.mrb[0].mxu0 %v2426
        %v2470 = vpop.f32.mrb[0].mxu0
        %v2471 = vadd.f32 0.0, %v2470
        %v2472 = vpop.f32.mrb[0].mxu0
        %v2473 = vpop.f32.mrb[0].mxu0
        %v2474 = vadd.f32 0.0, %v2473
        %v2475 = vpop.f32.mrb[0].mxu0
        %2476 = vdwg.mxu0
        %2477 = vxpose.xlu0.b32.start [1/16] %v2298, 128
        %2478 = vxpose.xlu0.b32.cont [2/16] %v2301, 128
        %2479 = vxpose.xlu0.b32.cont [3/16] %v2306, 128
        %2480 = vxpose.xlu0.b32.cont [4/16] %v2309, 128
        %2481 = vxpose.xlu0.b32.cont [5/16] 0.0, 128
        %2482 = vxpose.xlu0.b32.cont [6/16] 0.0, 128
        %2483 = vxpose.xlu0.b32.cont [7/16] 0.0, 128
        %2484 = vxpose.xlu0.b32.cont [8/16] 0.0, 128
        %2485 = vxpose.xlu0.b32.cont [9/16] 0.0, 128
        %2486 = vxpose.xlu0.b32.cont [10/16] 0.0, 128
        %2487 = vxpose.xlu0.b32.cont [11/16] 0.0, 128
        %2488 = vxpose.xlu0.b32.cont [12/16] 0.0, 128
        %2489 = vxpose.xlu0.b32.cont [13/16] 0.0, 128
        %2490 = vxpose.xlu0.b32.cont [14/16] 0.0, 128
        %2491 = vxpose.xlu0.b32.cont [15/16] 0.0, 128
        %2492 = vxpose.xlu0.b32.end [16/16] 0.0, 128
        %v2493 = vpop.trf.xlu0
        %v2494 = vpop.trf.xlu0
        %v2495 = vpop.trf.xlu0
        %v2496 = vpop.trf.xlu0
        %v2497 = vpop.trf.xlu0
        %v2498 = vpop.trf.xlu0
        %v2499 = vpop.trf.xlu0
        %v2500 = vpop.trf.xlu0
        %v2501 = vpop.trf.xlu0
        %v2502 = vpop.trf.xlu0
        %v2503 = vpop.trf.xlu0
        %v2504 = vpop.trf.xlu0
        %v2505 = vpop.trf.xlu0
        %v2506 = vpop.trf.xlu0
        %v2507 = vpop.trf.xlu0
        %v2508 = vpop.trf.xlu0
        %2509 = vxpose.xlu0.b32.start [1/16] %v2353, 128
        %2510 = vxpose.xlu0.b32.cont [2/16] %v2356, 128
        %2511 = vxpose.xlu0.b32.cont [3/16] %v2361, 128
        %2512 = vxpose.xlu0.b32.cont [4/16] %v2364, 128
        %2513 = vxpose.xlu0.b32.cont [5/16] 0.0, 128
        %2514 = vxpose.xlu0.b32.cont [6/16] 0.0, 128
        %2515 = vxpose.xlu0.b32.cont [7/16] 0.0, 128
        %2516 = vxpose.xlu0.b32.cont [8/16] 0.0, 128
        %2517 = vxpose.xlu0.b32.cont [9/16] 0.0, 128
        %2518 = vxpose.xlu0.b32.cont [10/16] 0.0, 128
        %2519 = vxpose.xlu0.b32.cont [11/16] 0.0, 128
        %2520 = vxpose.xlu0.b32.cont [12/16] 0.0, 128
        %2521 = vxpose.xlu0.b32.cont [13/16] 0.0, 128
        %2522 = vxpose.xlu0.b32.cont [14/16] 0.0, 128
        %2523 = vxpose.xlu0.b32.cont [15/16] 0.0, 128
        %2524 = vxpose.xlu0.b32.end [16/16] 0.0, 128
        %v2525 = vpop.trf.xlu0
        %v2526 = vpop.trf.xlu0
        %v2527 = vpop.trf.xlu0
        %v2528 = vpop.trf.xlu0
        %v2529 = vpop.trf.xlu0
        %v2530 = vpop.trf.xlu0
        %v2531 = vpop.trf.xlu0
        %v2532 = vpop.trf.xlu0
        %v2533 = vpop.trf.xlu0
        %v2534 = vpop.trf.xlu0
        %v2535 = vpop.trf.xlu0
        %v2536 = vpop.trf.xlu0
        %v2537 = vpop.trf.xlu0
        %v2538 = vpop.trf.xlu0
        %v2539 = vpop.trf.xlu0
        %v2540 = vpop.trf.xlu0
        %2541 = vxpose.xlu0.b32.start [1/16] %v2408, 128
        %2542 = vxpose.xlu0.b32.cont [2/16] %v2411, 128
        %2543 = vxpose.xlu0.b32.cont [3/16] %v2416, 128
        %2544 = vxpose.xlu0.b32.cont [4/16] %v2419, 128
        %2545 = vxpose.xlu0.b32.cont [5/16] 0.0, 128
        %2546 = vxpose.xlu0.b32.cont [6/16] 0.0, 128
        %2547 = vxpose.xlu0.b32.cont [7/16] 0.0, 128
        %2548 = vxpose.xlu0.b32.cont [8/16] 0.0, 128
        %2549 = vxpose.xlu0.b32.cont [9/16] 0.0, 128
        %2550 = vxpose.xlu0.b32.cont [10/16] 0.0, 128
        %2551 = vxpose.xlu0.b32.cont [11/16] 0.0, 128
        %2552 = vxpose.xlu0.b32.cont [12/16] 0.0, 128
        %2553 = vxpose.xlu0.b32.cont [13/16] 0.0, 128
        %2554 = vxpose.xlu0.b32.cont [14/16] 0.0, 128
        %2555 = vxpose.xlu0.b32.cont [15/16] 0.0, 128
        %2556 = vxpose.xlu0.b32.end [16/16] 0.0, 128
        %v2557 = vpop.trf.xlu0
        %v2558 = vpop.trf.xlu0
        %v2559 = vpop.trf.xlu0
        %v2560 = vpop.trf.xlu0
        %v2561 = vpop.trf.xlu0
        %v2562 = vpop.trf.xlu0
        %v2563 = vpop.trf.xlu0
        %v2564 = vpop.trf.xlu0
        %v2565 = vpop.trf.xlu0
        %v2566 = vpop.trf.xlu0
        %v2567 = vpop.trf.xlu0
        %v2568 = vpop.trf.xlu0
        %v2569 = vpop.trf.xlu0
        %v2570 = vpop.trf.xlu0
        %v2571 = vpop.trf.xlu0
        %v2572 = vpop.trf.xlu0
        %2573 = vxpose.xlu0.b32.start [1/16] %v2463, 128
        %2574 = vxpose.xlu0.b32.cont [2/16] %v2466, 128
        %2575 = vxpose.xlu0.b32.cont [3/16] %v2471, 128
        %2576 = vxpose.xlu0.b32.cont [4/16] %v2474, 128
        %2577 = vxpose.xlu0.b32.cont [5/16] 0.0, 128
        %2578 = vxpose.xlu0.b32.cont [6/16] 0.0, 128
        %2579 = vxpose.xlu0.b32.cont [7/16] 0.0, 128
        %2580 = vxpose.xlu0.b32.cont [8/16] 0.0, 128
        %2581 = vxpose.xlu0.b32.cont [9/16] 0.0, 128
        %2582 = vxpose.xlu0.b32.cont [10/16] 0.0, 128
        %2583 = vxpose.xlu0.b32.cont [11/16] 0.0, 128
        %2584 = vxpose.xlu0.b32.cont [12/16] 0.0, 128
        %2585 = vxpose.xlu0.b32.cont [13/16] 0.0, 128
        %2586 = vxpose.xlu0.b32.cont [14/16] 0.0, 128
        %2587 = vxpose.xlu0.b32.cont [15/16] 0.0, 128
        %2588 = vxpose.xlu0.b32.end [16/16] 0.0, 128
        %v2589 = vpop.trf.xlu0
        %v2590 = vpop.trf.xlu0
        %v2591 = vpop.trf.xlu0
        %v2592 = vpop.trf.xlu0
        %v2593 = vpop.trf.xlu0
        %v2594 = vpop.trf.xlu0
        %v2595 = vpop.trf.xlu0
        %v2596 = vpop.trf.xlu0
        %v2597 = vpop.trf.xlu0
        %v2598 = vpop.trf.xlu0
        %v2599 = vpop.trf.xlu0
        %v2600 = vpop.trf.xlu0
        %v2601 = vpop.trf.xlu0
        %v2602 = vpop.trf.xlu0
        %v2603 = vpop.trf.xlu0
        %v2604 = vpop.trf.xlu0
        %2605 = vxpose.xlu0.b32.start [1/16] %v2493, 128
        %2606 = vxpose.xlu0.b32.cont [2/16] %v2494, 128
        %2607 = vxpose.xlu0.b32.cont [3/16] %v2495, 128
        %2608 = vxpose.xlu0.b32.cont [4/16] %v2496, 128
        %2609 = vxpose.xlu0.b32.cont [5/16] %v2525, 128
        %2610 = vxpose.xlu0.b32.cont [6/16] %v2526, 128
        %2611 = vxpose.xlu0.b32.cont [7/16] %v2527, 128
        %2612 = vxpose.xlu0.b32.cont [8/16] %v2528, 128
        %2613 = vxpose.xlu0.b32.cont [9/16] %v2557, 128
        %2614 = vxpose.xlu0.b32.cont [10/16] %v2558, 128
        %2615 = vxpose.xlu0.b32.cont [11/16] %v2559, 128
        %2616 = vxpose.xlu0.b32.cont [12/16] %v2560, 128
        %2617 = vxpose.xlu0.b32.cont [13/16] %v2589, 128
        %2618 = vxpose.xlu0.b32.cont [14/16] %v2590, 128
        %2619 = vxpose.xlu0.b32.cont [15/16] %v2591, 128
        %2620 = vxpose.xlu0.b32.end [16/16] %v2592, 128
        %v2621 = vpop.trf.xlu0
        %v2622 = vpop.trf.xlu0
        %v2623 = vpop.trf.xlu0
        %v2624 = vpop.trf.xlu0
        %v2625 = vpop.trf.xlu0
        %v2626 = vpop.trf.xlu0
        %v2627 = vpop.trf.xlu0
        %v2628 = vpop.trf.xlu0
        %v2629 = vpop.trf.xlu0
        %v2630 = vpop.trf.xlu0
        %v2631 = vpop.trf.xlu0
        %v2632 = vpop.trf.xlu0
        %v2633 = vpop.trf.xlu0
        %v2634 = vpop.trf.xlu0
        %v2635 = vpop.trf.xlu0
        %v2636 = vpop.trf.xlu0
        %v2637 = vld [vmem:[%s543] sm:$0xf]
        %v2638 = vld [vmem:[%s543 + $0x4] sm:$0xf]
        %v2639 = vld [vmem:[%s543 + $0x8] sm:$0xf]
        %v2640 = vld [vmem:[%s543 + $0xc] sm:$0xf]
        %v2641 = vld [vmem:[%s543 + $0x10] sm:$0xf]
        %v2642 = vld [vmem:[%s543 + $0x14] sm:$0xf]
        %v2643 = vld [vmem:[%s543 + $0x18] sm:$0xf]
        %v2644 = vld [vmem:[%s543 + $0x1c] sm:$0xf]
        %v2645 = vld [vmem:[%s543 + $0x20] sm:$0xf]
        %v2646 = vld [vmem:[%s543 + $0x24] sm:$0xf]
        %v2647 = vld [vmem:[%s543 + $0x28] sm:$0xf]
        %v2648 = vld [vmem:[%s543 + $0x2c] sm:$0xf]
        %v2649 = vld [vmem:[%s543 + $0x30] sm:$0xf]
        %v2650 = vld [vmem:[%s543 + $0x34] sm:$0xf]
        %v2651 = vld [vmem:[%s543 + $0x38] sm:$0xf]
        %v2652 = vld [vmem:[%s543 + $0x3c] sm:$0xf]
        %v2653 = vpack.c.bf16 %v2622, %v2621
        %v2654 = vpack.c.bf16 %v2624, %v2623
        %v2671 = vunpack.c.l.b16 %v2637
        %v2672 = vunpack.c.l.b16 %v2638
        %v2673 = vunpack.c.l.b16 %v2639
        %v2674 = vunpack.c.l.b16 %v2640
        %v2675 = vunpack.c.l.b16 %v2641
        %v2676 = vunpack.c.l.b16 %v2642
        %v2677 = vunpack.c.l.b16 %v2643
        %v2678 = vunpack.c.l.b16 %v2644
        %v2679 = vunpack.c.l.b16 %v2645
        %v2680 = vunpack.c.l.b16 %v2646
        %v2681 = vunpack.c.l.b16 %v2647
        %v2682 = vunpack.c.l.b16 %v2648
        %v2683 = vunpack.c.l.b16 %v2649
        %v2684 = vunpack.c.l.b16 %v2650
        %v2685 = vunpack.c.l.b16 %v2651
        %v2686 = vunpack.c.l.b16 %v2652
        %v2687 = vpack.c.b16 %v2672, %v2671
        %v2688 = vpack.c.b16 %v2674, %v2673
        %v2689 = vpack.c.b16 %v2676, %v2675
        %v2690 = vpack.c.b16 %v2678, %v2677
        %v2691 = vpack.c.b16 %v2680, %v2679
        %v2692 = vpack.c.b16 %v2682, %v2681
        %v2693 = vpack.c.b16 %v2684, %v2683
        %v2694 = vpack.c.b16 %v2686, %v2685
        %2703 = vmatprep.subr.bf16.mxu0 0
        %2704 = vmatpush1.bf16.msra.mxu0 %v2687
        %2705 = vmatprep.subr.bf16.mxu0 0
        %2706 = vmatpush1.bf16.msra.mxu0 %v2688
        %2707 = vmatprep.subr.bf16.mxu0 0
        %2708 = vmatpush1.bf16.msra.mxu0 %v2689
        %2709 = vmatprep.subr.bf16.mxu0 0
        %2710 = vmatpush1.bf16.msra.mxu0 %v2690
        %2711 = vmatprep.subr.bf16.mxu0 0
        %2712 = vmatpush1.bf16.msra.mxu0 %v2691
        %2713 = vmatprep.subr.bf16.mxu0 0
        %2714 = vmatpush1.bf16.msra.mxu0 %v2692
        %2715 = vmatprep.subr.bf16.mxu0 0
        %2716 = vmatpush1.bf16.msra.mxu0 %v2693
        %2717 = vmatprep.subr.bf16.mxu0 0
        %2718 = vmatpush1.bf16.msra.mxu0 %v2694
        %2719 = vmatprep.subr.bf16.mxu0 0
        %2720 = vmatpush1.bf16.msra.mxu0 0
        %2721 = vmatprep.subr.bf16.mxu0 0
        %2722 = vmatpush1.bf16.msra.mxu0 0
        %2723 = vmatprep.subr.bf16.mxu0 0
        %2724 = vmatpush1.bf16.msra.mxu0 0
        %2725 = vmatprep.subr.bf16.mxu0 0
        %2726 = vmatpush1.bf16.msra.mxu0 0
        %2727 = vmatprep.subr.bf16.mxu0 0
        %2728 = vmatpush1.bf16.msra.mxu0 0
        %2729 = vmatprep.subr.bf16.mxu0 0
        %2730 = vmatpush1.bf16.msra.mxu0 0
        %2731 = vmatprep.subr.bf16.mxu0 0
        %2732 = vmatpush1.bf16.msra.mxu0 0
        %2733 = vmatprep.subr.bf16.mxu0 0
        %2734 = vmatpush1.bf16.msra.mxu0 0
        %2735 = vmatprep.mubr.bf16.mxu0 0
        %2736 = vmatmul.mubr.bf16.gmra.mrb[0].mxu0 %v2653
        %v2737 = vpop.f32.mrb[0].mxu0
        %v2738 = vadd.f32 0.0, %v2737
        %v2739 = vpop.f32.mrb[0].mxu0
        %v2740 = vpop.f32.mrb[0].mxu0
        %v2741 = vadd.f32 0.0, %v2740
        %v2742 = vpop.f32.mrb[0].mxu0
        %2743 = vmatprep.mubr.bf16.mxu0 0
        %2744 = vmatmul.mubr.bf16.gmra.mrb[0].mxu0 %v2654
        %v2745 = vpop.f32.mrb[0].mxu0
        %v2746 = vadd.f32 0.0, %v2745
        %v2747 = vpop.f32.mrb[0].mxu0
        %v2748 = vpop.f32.mrb[0].mxu0
        %v2749 = vadd.f32 0.0, %v2748
        %v2750 = vpop.f32.mrb[0].mxu0
        %2751 = vdwg.mxu0
        %v2752 = vadd.f32 %v723, %v2738
        %v2753 = vadd.f32 %v724, %v2741
        %v2754 = vadd.f32 %v725, %v2746
        %v2755 = vadd.f32 %v726, %v2749
        %v2756 = vld [vmem:[%s636] sm:$0x1]
        %v2757 = vmul.f32 %v2752, %v2752
        %v2758 = vmul.f32 %v2753, %v2753
        %v2759 = vmul.f32 %v2754, %v2754
        %v2760 = vmul.f32 %v2755, %v2755
        %2761 = vadd.xlane.f32.xlu0 %v2757
        %v2762 = vpop.xlane.xlu0 %2761
        %2763 = vadd.xlane.f32.xlu0 %v2758
        %v2764 = vpop.xlane.xlu0 %2763
        %2765 = vadd.xlane.f32.xlu0 %v2759
        %v2766 = vpop.xlane.xlu0 %2765
        %2767 = vadd.xlane.f32.xlu0 %v2760
        %v2768 = vpop.xlane.xlu0 %2767
        %v2769 = vmul.f32 %v2762, %v740
        %v2770 = vmul.f32 %v2764, %v740
        %v2771 = vmul.f32 %v2766, %v740
        %v2772 = vmul.f32 %v2768, %v740
        %v2773 = vadd.f32 %v2769, 1e-06
        %v2774 = vadd.f32 %v2770, 1e-06
        %v2775 = vadd.f32 %v2771, 1e-06
        %v2776 = vadd.f32 %v2772, 1e-06
        %v2777 = vrsqrt.pop %v2773
        %v2778 = vrsqrt.pop %v2774
        %v2779 = vrsqrt.pop %v2775
        %v2780 = vrsqrt.pop %v2776
        %v2781 = vmul.f32 %v2752, %v2777
        %v2782 = vmul.f32 %v2753, %v2778
        %v2783 = vmul.f32 %v2754, %v2779
        %v2784 = vmul.f32 %v2755, %v2780
        %v2786 = vlaneseq
        %v2787 = vshrl.u32 %v2786, 7
        %v2788 = vsub.s32 0, %v2787
        %v2789 = vrot.slane %v2756, %v2788
        %v2791 = vmul.f32 %v2781, %v2789
        %v2792 = vmul.f32 %v2782, %v2789
        %v2793 = vmul.f32 %v2783, %v2789
        %v2794 = vmul.f32 %v2784, %v2789
        %v2795 = vld [vmem:[%s552] sm:$0xff]
        %v2796 = vld [vmem:[%s552 + $0x8] sm:$0xff]
        %v2797 = vld [vmem:[%s552 + $0x10] sm:$0xff]
        %v2798 = vld [vmem:[%s552 + $0x18] sm:$0xff]
        %v2799 = vld [vmem:[%s552 + $0x20] sm:$0xff]
        %v2800 = vld [vmem:[%s552 + $0x28] sm:$0xff]
        %v2801 = vld [vmem:[%s552 + $0x30] sm:$0xff]
        %v2802 = vld [vmem:[%s552 + $0x38] sm:$0xff]
        %v2803 = vld [vmem:[%s552 + $0x40] sm:$0xff]
        %v2804 = vld [vmem:[%s552 + $0x48] sm:$0xff]
        %v2805 = vld [vmem:[%s552 + $0x50] sm:$0xff]
        %v2806 = vld [vmem:[%s552 + $0x58] sm:$0xff]
        %v2807 = vld [vmem:[%s552 + $0x60] sm:$0xff]
        %v2808 = vld [vmem:[%s552 + $0x68] sm:$0xff]
        %v2809 = vld [vmem:[%s552 + $0x70] sm:$0xff]
        %v2810 = vld [vmem:[%s552 + $0x78] sm:$0xff]
        %v2811 = vld [vmem:[%s552 + $0x80] sm:$0xff]
        %v2812 = vld [vmem:[%s552 + $0x88] sm:$0xff]
        %v2813 = vld [vmem:[%s552 + $0x90] sm:$0xff]
        %v2814 = vld [vmem:[%s552 + $0x98] sm:$0xff]
        %v2815 = vld [vmem:[%s552 + $0xa0] sm:$0xff]
        %v2816 = vld [vmem:[%s552 + $0xa8] sm:$0xff]
        %v2817 = vld [vmem:[%s552 + $0xb0] sm:$0xff]
        %v2818 = vld [vmem:[%s552 + $0xb8] sm:$0xff]
        %v2819 = vld [vmem:[%s552 + $0xc0] sm:$0xff]
        %v2820 = vld [vmem:[%s552 + $0xc8] sm:$0xff]
        %v2821 = vld [vmem:[%s552 + $0xd0] sm:$0xff]
        %v2822 = vld [vmem:[%s552 + $0xd8] sm:$0xff]
        %v2823 = vld [vmem:[%s552 + $0xe0] sm:$0xff]
        %v2824 = vld [vmem:[%s552 + $0xe8] sm:$0xff]
        %v2825 = vld [vmem:[%s552 + $0xf0] sm:$0xff]
        %v2826 = vld [vmem:[%s552 + $0xf8] sm:$0xff]
        %v2827 = vpack.c.bf16 %v2792, %v2791
        %v2828 = vpack.c.bf16 %v2794, %v2793
        %v2861 = vunpack.c.l.b16 %v2795
        %v2862 = vunpack.c.h.b16 %v2795
        %v2863 = vunpack.c.l.b16 %v2796
        %v2864 = vunpack.c.h.b16 %v2796
        %v2865 = vunpack.c.l.b16 %v2797
        %v2866 = vunpack.c.h.b16 %v2797
        %v2867 = vunpack.c.l.b16 %v2798
        %v2868 = vunpack.c.h.b16 %v2798
        %v2869 = vunpack.c.l.b16 %v2799
        %v2870 = vunpack.c.h.b16 %v2799
        %v2871 = vunpack.c.l.b16 %v2800
        %v2872 = vunpack.c.h.b16 %v2800
        %v2873 = vunpack.c.l.b16 %v2801
        %v2874 = vunpack.c.h.b16 %v2801
        %v2875 = vunpack.c.l.b16 %v2802
        %v2876 = vunpack.c.h.b16 %v2802
        %v2877 = vunpack.c.l.b16 %v2803
        %v2878 = vunpack.c.h.b16 %v2803
        %v2879 = vunpack.c.l.b16 %v2804
        %v2880 = vunpack.c.h.b16 %v2804
        %v2881 = vunpack.c.l.b16 %v2805
        %v2882 = vunpack.c.h.b16 %v2805
        %v2883 = vunpack.c.l.b16 %v2806
        %v2884 = vunpack.c.h.b16 %v2806
        %v2885 = vunpack.c.l.b16 %v2807
        %v2886 = vunpack.c.h.b16 %v2807
        %v2887 = vunpack.c.l.b16 %v2808
        %v2888 = vunpack.c.h.b16 %v2808
        %v2889 = vunpack.c.l.b16 %v2809
        %v2890 = vunpack.c.h.b16 %v2809
        %v2891 = vunpack.c.l.b16 %v2810
        %v2892 = vunpack.c.h.b16 %v2810
        %v2893 = vunpack.c.l.b16 %v2811
        %v2894 = vunpack.c.h.b16 %v2811
        %v2895 = vunpack.c.l.b16 %v2812
        %v2896 = vunpack.c.h.b16 %v2812
        %v2897 = vunpack.c.l.b16 %v2813
        %v2898 = vunpack.c.h.b16 %v2813
        %v2899 = vunpack.c.l.b16 %v2814
        %v2900 = vunpack.c.h.b16 %v2814
        %v2901 = vunpack.c.l.b16 %v2815
        %v2902 = vunpack.c.h.b16 %v2815
        %v2903 = vunpack.c.l.b16 %v2816
        %v2904 = vunpack.c.h.b16 %v2816
        %v2905 = vunpack.c.l.b16 %v2817
        %v2906 = vunpack.c.h.b16 %v2817
        %v2907 = vunpack.c.l.b16 %v2818
        %v2908 = vunpack.c.h.b16 %v2818
        %v2909 = vunpack.c.l.b16 %v2819
        %v2910 = vunpack.c.h.b16 %v2819
        %v2911 = vunpack.c.l.b16 %v2820
        %v2912 = vunpack.c.h.b16 %v2820
        %v2913 = vunpack.c.l.b16 %v2821
        %v2914 = vunpack.c.h.b16 %v2821
        %v2915 = vunpack.c.l.b16 %v2822
        %v2916 = vunpack.c.h.b16 %v2822
        %v2917 = vunpack.c.l.b16 %v2823
        %v2918 = vunpack.c.h.b16 %v2823
        %v2919 = vunpack.c.l.b16 %v2824
        %v2920 = vunpack.c.h.b16 %v2824
        %v2921 = vunpack.c.l.b16 %v2825
        %v2922 = vunpack.c.h.b16 %v2825
        %v2923 = vunpack.c.l.b16 %v2826
        %v2924 = vunpack.c.h.b16 %v2826
        %v2925 = vpack.c.b16 %v2865, %v2861
        %v2926 = vpack.c.b16 %v2866, %v2862
        %v2927 = vpack.c.b16 %v2867, %v2863
        %v2928 = vpack.c.b16 %v2868, %v2864
        %v2929 = vpack.c.b16 %v2873, %v2869
        %v2930 = vpack.c.b16 %v2874, %v2870
        %v2931 = vpack.c.b16 %v2875, %v2871
        %v2932 = vpack.c.b16 %v2876, %v2872
        %v2933 = vpack.c.b16 %v2881, %v2877
        %v2934 = vpack.c.b16 %v2882, %v2878
        %v2935 = vpack.c.b16 %v2883, %v2879
        %v2936 = vpack.c.b16 %v2884, %v2880
        %v2937 = vpack.c.b16 %v2889, %v2885
        %v2938 = vpack.c.b16 %v2890, %v2886
        %v2939 = vpack.c.b16 %v2891, %v2887
        %v2940 = vpack.c.b16 %v2892, %v2888
        %v2941 = vpack.c.b16 %v2897, %v2893
        %v2942 = vpack.c.b16 %v2898, %v2894
        %v2943 = vpack.c.b16 %v2899, %v2895
        %v2944 = vpack.c.b16 %v2900, %v2896
        %v2945 = vpack.c.b16 %v2905, %v2901
        %v2946 = vpack.c.b16 %v2906, %v2902
        %v2947 = vpack.c.b16 %v2907, %v2903
        %v2948 = vpack.c.b16 %v2908, %v2904
        %v2949 = vpack.c.b16 %v2913, %v2909
        %v2950 = vpack.c.b16 %v2914, %v2910
        %v2951 = vpack.c.b16 %v2915, %v2911
        %v2952 = vpack.c.b16 %v2916, %v2912
        %v2953 = vpack.c.b16 %v2921, %v2917
        %v2954 = vpack.c.b16 %v2922, %v2918
        %v2955 = vpack.c.b16 %v2923, %v2919
        %v2956 = vpack.c.b16 %v2924, %v2920
        %2989 = vmatprep.subr.bf16.mxu0 %v2926
        %2990 = vmatpush1.bf16.msra.mxu0 %v2925
        %2991 = vmatprep.subr.bf16.mxu0 %v2930
        %2992 = vmatpush1.bf16.msra.mxu0 %v2929
        %2993 = vmatprep.subr.bf16.mxu0 %v2934
        %2994 = vmatpush1.bf16.msra.mxu0 %v2933
        %2995 = vmatprep.subr.bf16.mxu0 %v2938
        %2996 = vmatpush1.bf16.msra.mxu0 %v2937
        %2997 = vmatprep.subr.bf16.mxu0 %v2942
        %2998 = vmatpush1.bf16.msra.mxu0 %v2941
        %2999 = vmatprep.subr.bf16.mxu0 %v2946
        %3000 = vmatpush1.bf16.msra.mxu0 %v2945
        %3001 = vmatprep.subr.bf16.mxu0 %v2950
        %3002 = vmatpush1.bf16.msra.mxu0 %v2949
        %3003 = vmatprep.subr.bf16.mxu0 %v2954
        %3004 = vmatpush1.bf16.msra.mxu0 %v2953
        %3005 = vmatprep.subr.bf16.mxu0 0
        %3006 = vmatpush1.bf16.msra.mxu0 0
        %3007 = vmatprep.subr.bf16.mxu0 0
        %3008 = vmatpush1.bf16.msra.mxu0 0
        %3009 = vmatprep.subr.bf16.mxu0 0
        %3010 = vmatpush1.bf16.msra.mxu0 0
        %3011 = vmatprep.subr.bf16.mxu0 0
        %3012 = vmatpush1.bf16.msra.mxu0 0
        %3013 = vmatprep.subr.bf16.mxu0 0
        %3014 = vmatpush1.bf16.msra.mxu0 0
        %3015 = vmatprep.subr.bf16.mxu0 0
        %3016 = vmatpush1.bf16.msra.mxu0 0
        %3017 = vmatprep.subr.bf16.mxu0 0
        %3018 = vmatpush1.bf16.msra.mxu0 0
        %3019 = vmatprep.subr.bf16.mxu0 0
        %3020 = vmatpush1.bf16.msra.mxu0 0
        %3021 = vmatprep.mubr.bf16.mxu0 0
        %3022 = vmatmul.mubr.bf16.gmra.mrb[0].mxu0 %v2827
        %v3023 = vpop.f32.mrb[0].mxu0
        %v3024 = vadd.f32 0.0, %v3023
        %v3025 = vpop.f32.mrb[0].mxu0
        %v3026 = vadd.f32 0.0, %v3025
        %v3027 = vpop.f32.mrb[0].mxu0
        %v3028 = vadd.f32 0.0, %v3027
        %v3029 = vpop.f32.mrb[0].mxu0
        %v3030 = vadd.f32 0.0, %v3029
        %3031 = vmatprep.mubr.bf16.mxu0 0
        %3032 = vmatmul.mubr.bf16.gmra.mrb[0].mxu0 %v2828
        %v3033 = vpop.f32.mrb[0].mxu0
        %v3034 = vadd.f32 0.0, %v3033
        %v3035 = vpop.f32.mrb[0].mxu0
        %v3036 = vadd.f32 0.0, %v3035
        %v3037 = vpop.f32.mrb[0].mxu0
        %v3038 = vadd.f32 0.0, %v3037
        %v3039 = vpop.f32.mrb[0].mxu0
        %v3040 = vadd.f32 0.0, %v3039
        %3041 = vdwg.mxu0
        %3042 = vmatprep.subr.bf16.mxu0 %v2928
        %3043 = vmatpush1.bf16.msra.mxu0 %v2927
        %3044 = vmatprep.subr.bf16.mxu0 %v2932
        %3045 = vmatpush1.bf16.msra.mxu0 %v2931
        %3046 = vmatprep.subr.bf16.mxu0 %v2936
        %3047 = vmatpush1.bf16.msra.mxu0 %v2935
        %3048 = vmatprep.subr.bf16.mxu0 %v2940
        %3049 = vmatpush1.bf16.msra.mxu0 %v2939
        %3050 = vmatprep.subr.bf16.mxu0 %v2944
        %3051 = vmatpush1.bf16.msra.mxu0 %v2943
        %3052 = vmatprep.subr.bf16.mxu0 %v2948
        %3053 = vmatpush1.bf16.msra.mxu0 %v2947
        %3054 = vmatprep.subr.bf16.mxu0 %v2952
        %3055 = vmatpush1.bf16.msra.mxu0 %v2951
        %3056 = vmatprep.subr.bf16.mxu0 %v2956
        %3057 = vmatpush1.bf16.msra.mxu0 %v2955
        %3058 = vmatprep.subr.bf16.mxu0 0
        %3059 = vmatpush1.bf16.msra.mxu0 0
        %3060 = vmatprep.subr.bf16.mxu0 0
        %3061 = vmatpush1.bf16.msra.mxu0 0
        %3062 = vmatprep.subr.bf16.mxu0 0
        %3063 = vmatpush1.bf16.msra.mxu0 0
        %3064 = vmatprep.subr.bf16.mxu0 0
        %3065 = vmatpush1.bf16.msra.mxu0 0
        %3066 = vmatprep.subr.bf16.mxu0 0
        %3067 = vmatpush1.bf16.msra.mxu0 0
        %3068 = vmatprep.subr.bf16.mxu0 0
        %3069 = vmatpush1.bf16.msra.mxu0 0
        %3070 = vmatprep.subr.bf16.mxu0 0
        %3071 = vmatpush1.bf16.msra.mxu0 0
        %3072 = vmatprep.subr.bf16.mxu0 0
        %3073 = vmatpush1.bf16.msra.mxu0 0
        %3074 = vmatprep.mubr.bf16.mxu0 0
        %3075 = vmatmul.mubr.bf16.gmra.mrb[0].mxu0 %v2827
        %v3076 = vpop.f32.mrb[0].mxu0
        %v3077 = vadd.f32 0.0, %v3076
        %v3078 = vpop.f32.mrb[0].mxu0
        %v3079 = vadd.f32 0.0, %v3078
        %v3080 = vpop.f32.mrb[0].mxu0
        %v3081 = vadd.f32 0.0, %v3080
        %v3082 = vpop.f32.mrb[0].mxu0
        %v3083 = vadd.f32 0.0, %v3082
        %3084 = vmatprep.mubr.bf16.mxu0 0
        %3085 = vmatmul.mubr.bf16.gmra.mrb[0].mxu0 %v2828
        %v3086 = vpop.f32.mrb[0].mxu0
        %v3087 = vadd.f32 0.0, %v3086
        %v3088 = vpop.f32.mrb[0].mxu0
        %v3089 = vadd.f32 0.0, %v3088
        %v3090 = vpop.f32.mrb[0].mxu0
        %v3091 = vadd.f32 0.0, %v3090
        %v3092 = vpop.f32.mrb[0].mxu0
        %v3093 = vadd.f32 0.0, %v3092
        %3094 = vdwg.mxu0
        %v3095 = vsub.f32 0.0, %v3024
        %v3096 = vsub.f32 0.0, %v3026
        %v3097 = vsub.f32 0.0, %v3028
        %v3098 = vsub.f32 0.0, %v3030
        %v3099 = vsub.f32 0.0, %v3034
        %v3100 = vsub.f32 0.0, %v3036
        %v3101 = vsub.f32 0.0, %v3038
        %v3102 = vsub.f32 0.0, %v3040
        %v3103 = vmul.f32 %v3095, 1.442695
        %v3104 = vpow.pop %v3103
        %v3105 = vmul.f32 %v3096, 1.442695
        %v3106 = vpow.pop %v3105
        %v3107 = vmul.f32 %v3097, 1.442695
        %v3108 = vpow.pop %v3107
        %v3109 = vmul.f32 %v3098, 1.442695
        %v3110 = vpow.pop %v3109
        %v3111 = vmul.f32 %v3099, 1.442695
        %v3112 = vpow.pop %v3111
        %v3113 = vmul.f32 %v3100, 1.442695
        %v3114 = vpow.pop %v3113
        %v3115 = vmul.f32 %v3101, 1.442695
        %v3116 = vpow.pop %v3115
        %v3117 = vmul.f32 %v3102, 1.442695
        %v3118 = vpow.pop %v3117
        %v3119 = vadd.f32 %v3104, 1.0
        %v3120 = vadd.f32 %v3106, 1.0
        %v3121 = vadd.f32 %v3108, 1.0
        %v3122 = vadd.f32 %v3110, 1.0
        %v3123 = vadd.f32 %v3112, 1.0
        %v3124 = vadd.f32 %v3114, 1.0
        %v3125 = vadd.f32 %v3116, 1.0
        %v3126 = vadd.f32 %v3118, 1.0
        %v3127 = vrcp.pop %v3119
        %v3128 = vmul.f32 1.0, %v3127
        %v3129 = vrcp.pop %v3120
        %v3130 = vmul.f32 1.0, %v3129
        %v3131 = vrcp.pop %v3121
        %v3132 = vmul.f32 1.0, %v3131
        %v3133 = vrcp.pop %v3122
        %v3134 = vmul.f32 1.0, %v3133
        %v3135 = vrcp.pop %v3123
        %v3136 = vmul.f32 1.0, %v3135
        %v3137 = vrcp.pop %v3124
        %v3138 = vmul.f32 1.0, %v3137
        %v3139 = vrcp.pop %v3125
        %v3140 = vmul.f32 1.0, %v3139
        %v3141 = vrcp.pop %v3126
        %v3142 = vmul.f32 1.0, %v3141
        %v3143 = vmul.f32 %v3024, %v3128
        %v3144 = vmul.f32 %v3026, %v3130
        %v3145 = vmul.f32 %v3028, %v3132
        %v3146 = vmul.f32 %v3030, %v3134
        %v3147 = vmul.f32 %v3034, %v3136
        %v3148 = vmul.f32 %v3036, %v3138
        %v3149 = vmul.f32 %v3038, %v3140
        %v3150 = vmul.f32 %v3040, %v3142
        %v3151 = vmul.f32 %v3143, %v3077
        %v3152 = vmul.f32 %v3144, %v3079
        %v3153 = vmul.f32 %v3145, %v3081
        %v3154 = vmul.f32 %v3146, %v3083
        %v3155 = vmul.f32 %v3147, %v3087
        %v3156 = vmul.f32 %v3148, %v3089
        %v3157 = vmul.f32 %v3149, %v3091
        %v3158 = vmul.f32 %v3150, %v3093
        %v3159 = vld [vmem:[%s561] sm:$0xf]
        %v3160 = vld [vmem:[%s561 + $0x4] sm:$0xf]
        %v3161 = vld [vmem:[%s561 + $0x8] sm:$0xf]
        %v3162 = vld [vmem:[%s561 + $0xc] sm:$0xf]
        %v3163 = vld [vmem:[%s561 + $0x10] sm:$0xf]
        %v3164 = vld [vmem:[%s561 + $0x14] sm:$0xf]
        %v3165 = vld [vmem:[%s561 + $0x18] sm:$0xf]
        %v3166 = vld [vmem:[%s561 + $0x1c] sm:$0xf]
        %v3167 = vld [vmem:[%s561 + $0x20] sm:$0xf]
        %v3168 = vld [vmem:[%s561 + $0x24] sm:$0xf]
        %v3169 = vld [vmem:[%s561 + $0x28] sm:$0xf]
        %v3170 = vld [vmem:[%s561 + $0x2c] sm:$0xf]
        %v3171 = vld [vmem:[%s561 + $0x30] sm:$0xf]
        %v3172 = vld [vmem:[%s561 + $0x34] sm:$0xf]
        %v3173 = vld [vmem:[%s561 + $0x38] sm:$0xf]
        %v3174 = vld [vmem:[%s561 + $0x3c] sm:$0xf]
        %v3175 = vld [vmem:[%s561 + $0x40] sm:$0xf]
        %v3176 = vld [vmem:[%s561 + $0x44] sm:$0xf]
        %v3177 = vld [vmem:[%s561 + $0x48] sm:$0xf]
        %v3178 = vld [vmem:[%s561 + $0x4c] sm:$0xf]
        %v3179 = vld [vmem:[%s561 + $0x50] sm:$0xf]
        %v3180 = vld [vmem:[%s561 + $0x54] sm:$0xf]
        %v3181 = vld [vmem:[%s561 + $0x58] sm:$0xf]
        %v3182 = vld [vmem:[%s561 + $0x5c] sm:$0xf]
        %v3183 = vld [vmem:[%s561 + $0x60] sm:$0xf]
        %v3184 = vld [vmem:[%s561 + $0x64] sm:$0xf]
        %v3185 = vld [vmem:[%s561 + $0x68] sm:$0xf]
        %v3186 = vld [vmem:[%s561 + $0x6c] sm:$0xf]
        %v3187 = vld [vmem:[%s561 + $0x70] sm:$0xf]
        %v3188 = vld [vmem:[%s561 + $0x74] sm:$0xf]
        %v3189 = vld [vmem:[%s561 + $0x78] sm:$0xf]
        %v3190 = vld [vmem:[%s561 + $0x7c] sm:$0xf]
        %v3191 = vpack.c.bf16 %v3153, %v3151
        %v3192 = vpack.c.bf16 %v3154, %v3152
        %v3193 = vpack.c.bf16 %v3157, %v3155
        %v3194 = vpack.c.bf16 %v3158, %v3156
        %v3227 = vunpack.c.l.b16 %v3159
        %v3228 = vunpack.c.l.b16 %v3160
        %v3229 = vunpack.c.l.b16 %v3161
        %v3230 = vunpack.c.l.b16 %v3162
        %v3231 = vunpack.c.l.b16 %v3163
        %v3232 = vunpack.c.l.b16 %v3164
        %v3233 = vunpack.c.l.b16 %v3165
        %v3234 = vunpack.c.l.b16 %v3166
        %v3235 = vunpack.c.l.b16 %v3167
        %v3236 = vunpack.c.l.b16 %v3168
        %v3237 = vunpack.c.l.b16 %v3169
        %v3238 = vunpack.c.l.b16 %v3170
        %v3239 = vunpack.c.l.b16 %v3171
        %v3240 = vunpack.c.l.b16 %v3172
        %v3241 = vunpack.c.l.b16 %v3173
        %v3242 = vunpack.c.l.b16 %v3174
        %v3243 = vunpack.c.l.b16 %v3175
        %v3244 = vunpack.c.l.b16 %v3176
        %v3245 = vunpack.c.l.b16 %v3177
        %v3246 = vunpack.c.l.b16 %v3178
        %v3247 = vunpack.c.l.b16 %v3179
        %v3248 = vunpack.c.l.b16 %v3180
        %v3249 = vunpack.c.l.b16 %v3181
        %v3250 = vunpack.c.l.b16 %v3182
        %v3251 = vunpack.c.l.b16 %v3183
        %v3252 = vunpack.c.l.b16 %v3184
        %v3253 = vunpack.c.l.b16 %v3185
        %v3254 = vunpack.c.l.b16 %v3186
        %v3255 = vunpack.c.l.b16 %v3187
        %v3256 = vunpack.c.l.b16 %v3188
        %v3257 = vunpack.c.l.b16 %v3189
        %v3258 = vunpack.c.l.b16 %v3190
        %v3259 = vpack.c.b16 %v3228, %v3227
        %v3260 = vpack.c.b16 %v3230, %v3229
        %v3261 = vpack.c.b16 %v3232, %v3231
        %v3262 = vpack.c.b16 %v3234, %v3233
        %v3263 = vpack.c.b16 %v3236, %v3235
        %v3264 = vpack.c.b16 %v3238, %v3237
        %v3265 = vpack.c.b16 %v3240, %v3239
        %v3266 = vpack.c.b16 %v3242, %v3241
        %v3267 = vpack.c.b16 %v3244, %v3243
        %v3268 = vpack.c.b16 %v3246, %v3245
        %v3269 = vpack.c.b16 %v3248, %v3247
        %v3270 = vpack.c.b16 %v3250, %v3249
        %v3271 = vpack.c.b16 %v3252, %v3251
        %v3272 = vpack.c.b16 %v3254, %v3253
        %v3273 = vpack.c.b16 %v3256, %v3255
        %v3274 = vpack.c.b16 %v3258, %v3257
        %3291 = vmatprep.subr.bf16.mxu0 0
        %3292 = vmatpush1.bf16.msra.mxu0 %v3259
        %3293 = vmatprep.subr.bf16.mxu0 0
        %3294 = vmatpush1.bf16.msra.mxu0 %v3260
        %3295 = vmatprep.subr.bf16.mxu0 0
        %3296 = vmatpush1.bf16.msra.mxu0 %v3261
        %3297 = vmatprep.subr.bf16.mxu0 0
        %3298 = vmatpush1.bf16.msra.mxu0 %v3262
        %3299 = vmatprep.subr.bf16.mxu0 0
        %3300 = vmatpush1.bf16.msra.mxu0 %v3263
        %3301 = vmatprep.subr.bf16.mxu0 0
        %3302 = vmatpush1.bf16.msra.mxu0 %v3264
        %3303 = vmatprep.subr.bf16.mxu0 0
        %3304 = vmatpush1.bf16.msra.mxu0 %v3265
        %3305 = vmatprep.subr.bf16.mxu0 0
        %3306 = vmatpush1.bf16.msra.mxu0 %v3266
        %3307 = vmatprep.subr.bf16.mxu0 0
        %3308 = vmatpush1.bf16.msra.mxu0 %v3267
        %3309 = vmatprep.subr.bf16.mxu0 0
        %3310 = vmatpush1.bf16.msra.mxu0 %v3268
        %3311 = vmatprep.subr.bf16.mxu0 0
        %3312 = vmatpush1.bf16.msra.mxu0 %v3269
        %3313 = vmatprep.subr.bf16.mxu0 0
        %3314 = vmatpush1.bf16.msra.mxu0 %v3270
        %3315 = vmatprep.subr.bf16.mxu0 0
        %3316 = vmatpush1.bf16.msra.mxu0 %v3271
        %3317 = vmatprep.subr.bf16.mxu0 0
        %3318 = vmatpush1.bf16.msra.mxu0 %v3272
        %3319 = vmatprep.subr.bf16.mxu0 0
        %3320 = vmatpush1.bf16.msra.mxu0 %v3273
        %3321 = vmatprep.subr.bf16.mxu0 0
        %3322 = vmatpush1.bf16.msra.mxu0 %v3274
        %3323 = vmatprep.mubr.bf16.mxu0 %v3192
        %3324 = vmatmul.mubr.bf16.gmra.mrb[0].mxu0 %v3191
        %v3325 = vpop.f32.mrb[0].mxu0
        %v3326 = vadd.f32 0.0, %v3325
        %v3327 = vpop.f32.mrb[0].mxu0
        %v3328 = vpop.f32.mrb[0].mxu0
        %v3329 = vadd.f32 0.0, %v3328
        %v3330 = vpop.f32.mrb[0].mxu0
        %3331 = vmatprep.mubr.bf16.mxu0 %v3194
        %3332 = vmatmul.mubr.bf16.gmra.mrb[0].mxu0 %v3193
        %v3333 = vpop.f32.mrb[0].mxu0
        %v3334 = vadd.f32 0.0, %v3333
        %v3335 = vpop.f32.mrb[0].mxu0
        %v3336 = vpop.f32.mrb[0].mxu0
        %v3337 = vadd.f32 0.0, %v3336
        %v3338 = vpop.f32.mrb[0].mxu0
        %3339 = vdwg.mxu0
        %v3340 = vadd.f32 %v2752, %v3326
        %v3341 = vadd.f32 %v2753, %v3329
        %v3342 = vadd.f32 %v2754, %v3334
        %v3343 = vadd.f32 %v2755, %v3337
        %3344 = vst [vmem:[#allocation2] sm:$0xff] %v3340
        %3345 = vst [vmem:[#allocation2 + $0x8] sm:$0xff] %v3341
        %3346 = vst [vmem:[#allocation2 + $0x10] sm:$0xff] %v3342
        %3347 = vst [vmem:[#allocation2 + $0x18] sm:$0xff] %v3343
        %p3348 = scmp.eq.s32.totalorder %s28, 1
        // Predicated region
        $region105: #{llama_causal_lm_loss.1} parent=75 // pred_check
          %p3349 = pneg %p3348
        $region106: #{llama_causal_lm_loss.1} parent=75 // pred_check_branch
          %3351 = sbr.rel (%p3349) target = $region108
        $region107: #{llama_causal_lm_loss.1} parent=75 // pred_region
          %v3352 = vld [vmem:[%s12] sm:$0x1]
          %v3353 = vmul.f32 %v3340, %v3340
          %v3354 = vmul.f32 %v3341, %v3341
          %v3355 = vmul.f32 %v3342, %v3342
          %v3356 = vmul.f32 %v3343, %v3343
          %3357 = vadd.xlane.f32.xlu0 %v3353
          %v3358 = vpop.xlane.xlu0 %3357
          %3359 = vadd.xlane.f32.xlu0 %v3354
          %v3360 = vpop.xlane.xlu0 %3359
          %3361 = vadd.xlane.f32.xlu0 %v3355
          %v3362 = vpop.xlane.xlu0 %3361
          %3363 = vadd.xlane.f32.xlu0 %v3356
          %v3364 = vpop.xlane.xlu0 %3363
          %v3365 = vmul.f32 %v3358, %v740
          %v3366 = vmul.f32 %v3360, %v740
          %v3367 = vmul.f32 %v3362, %v740
          %v3368 = vmul.f32 %v3364, %v740
          %v3369 = vadd.f32 %v3365, 1e-06
          %v3370 = vadd.f32 %v3366, 1e-06
          %v3371 = vadd.f32 %v3367, 1e-06
          %v3372 = vadd.f32 %v3368, 1e-06
          %v3373 = vrsqrt.pop %v3369
          %v3374 = vrsqrt.pop %v3370
          %v3375 = vrsqrt.pop %v3371
          %v3376 = vrsqrt.pop %v3372
          %v3377 = vmul.f32 %v3340, %v3373
          %v3378 = vmul.f32 %v3341, %v3374
          %v3379 = vmul.f32 %v3342, %v3375
          %v3380 = vmul.f32 %v3343, %v3376
          %v3382 = vlaneseq
          %v3383 = vshrl.u32 %v3382, 7
          %v3384 = vsub.s32 0, %v3383
          %v3385 = vrot.slane %v3352, %v3384
          %v3387 = vmul.f32 %v3377, %v3385
          %v3388 = vmul.f32 %v3378, %v3385
          %v3389 = vmul.f32 %v3379, %v3385
          %v3390 = vmul.f32 %v3380, %v3385
          %v3391 = vld [vmem:[#allocation12] sm:$0xff]
          %v3392 = vld [vmem:[#allocation12 + $0x8] sm:$0xff]
          %v3393 = vld [vmem:[#allocation12 + $0x10] sm:$0xff]
          %v3394 = vld [vmem:[#allocation12 + $0x18] sm:$0xff]
          %v3395 = vld [vmem:[#allocation12 + $0x20] sm:$0xff]
          %v3396 = vld [vmem:[#allocation12 + $0x28] sm:$0xff]
          %v3397 = vld [vmem:[#allocation12 + $0x30] sm:$0xff]
          %v3398 = vld [vmem:[#allocation12 + $0x38] sm:$0xff]
          %v3399 = vld [vmem:[#allocation12 + $0x40] sm:$0xff]
          %v3400 = vld [vmem:[#allocation12 + $0x48] sm:$0xff]
          %v3401 = vld [vmem:[#allocation12 + $0x50] sm:$0xff]
          %v3402 = vld [vmem:[#allocation12 + $0x58] sm:$0xff]
          %v3403 = vld [vmem:[#allocation12 + $0x60] sm:$0xff]
          %v3404 = vld [vmem:[#allocation12 + $0x68] sm:$0xff]
          %v3405 = vld [vmem:[#allocation12 + $0x70] sm:$0xff]
          %v3406 = vld [vmem:[#allocation12 + $0x78] sm:$0xff]
          %v3407 = vpack.c.bf16 %v3388, %v3387
          %v3408 = vpack.c.bf16 %v3390, %v3389
          %v3425 = vunpack.c.l.b16 %v3391
          %v3426 = vunpack.c.h.b16 %v3391
          %v3427 = vunpack.c.l.b16 %v3392
          %v3428 = vunpack.c.h.b16 %v3392
          %v3429 = vunpack.c.l.b16 %v3393
          %v3430 = vunpack.c.h.b16 %v3393
          %v3431 = vunpack.c.l.b16 %v3394
          %v3432 = vunpack.c.h.b16 %v3394
          %v3433 = vunpack.c.l.b16 %v3395
          %v3434 = vunpack.c.h.b16 %v3395
          %v3435 = vunpack.c.l.b16 %v3396
          %v3436 = vunpack.c.h.b16 %v3396
          %v3437 = vunpack.c.l.b16 %v3397
          %v3438 = vunpack.c.h.b16 %v3397
          %v3439 = vunpack.c.l.b16 %v3398
          %v3440 = vunpack.c.h.b16 %v3398
          %v3441 = vunpack.c.l.b16 %v3399
          %v3442 = vunpack.c.h.b16 %v3399
          %v3443 = vunpack.c.l.b16 %v3400
          %v3444 = vunpack.c.h.b16 %v3400
          %v3445 = vunpack.c.l.b16 %v3401
          %v3446 = vunpack.c.h.b16 %v3401
          %v3447 = vunpack.c.l.b16 %v3402
          %v3448 = vunpack.c.h.b16 %v3402
          %v3449 = vunpack.c.l.b16 %v3403
          %v3450 = vunpack.c.h.b16 %v3403
          %v3451 = vunpack.c.l.b16 %v3404
          %v3452 = vunpack.c.h.b16 %v3404
          %v3453 = vunpack.c.l.b16 %v3405
          %v3454 = vunpack.c.h.b16 %v3405
          %v3455 = vunpack.c.l.b16 %v3406
          %v3456 = vunpack.c.h.b16 %v3406
          %v3457 = vpack.c.b16 %v3427, %v3425
          %v3458 = vpack.c.b16 %v3428, %v3426
          %v3459 = vpack.c.b16 %v3431, %v3429
          %v3460 = vpack.c.b16 %v3432, %v3430
          %v3461 = vpack.c.b16 %v3435, %v3433
          %v3462 = vpack.c.b16 %v3436, %v3434
          %v3463 = vpack.c.b16 %v3439, %v3437
          %v3464 = vpack.c.b16 %v3440, %v3438
          %v3465 = vpack.c.b16 %v3443, %v3441
          %v3466 = vpack.c.b16 %v3444, %v3442
          %v3467 = vpack.c.b16 %v3447, %v3445
          %v3468 = vpack.c.b16 %v3448, %v3446
          %v3469 = vpack.c.b16 %v3451, %v3449
          %v3470 = vpack.c.b16 %v3452, %v3450
          %v3471 = vpack.c.b16 %v3455, %v3453
          %v3472 = vpack.c.b16 %v3456, %v3454
          %3489 = vmatprep.subr.bf16.mxu0 %v3458
          %3490 = vmatpush1.bf16.msra.mxu0 %v3457
          %3491 = vmatprep.subr.bf16.mxu0 %v3460
          %3492 = vmatpush1.bf16.msra.mxu0 %v3459
          %3493 = vmatprep.subr.bf16.mxu0 %v3462
          %3494 = vmatpush1.bf16.msra.mxu0 %v3461
          %3495 = vmatprep.subr.bf16.mxu0 %v3464
          %3496 = vmatpush1.bf16.msra.mxu0 %v3463
          %3497 = vmatprep.subr.bf16.mxu0 %v3466
          %3498 = vmatpush1.bf16.msra.mxu0 %v3465
          %3499 = vmatprep.subr.bf16.mxu0 %v3468
          %3500 = vmatpush1.bf16.msra.mxu0 %v3467
          %3501 = vmatprep.subr.bf16.mxu0 %v3470
          %3502 = vmatpush1.bf16.msra.mxu0 %v3469
          %3503 = vmatprep.subr.bf16.mxu0 %v3472
          %3504 = vmatpush1.bf16.msra.mxu0 %v3471
          %3505 = vmatprep.subr.bf16.mxu0 0
          %3506 = vmatpush1.bf16.msra.mxu0 0
          %3507 = vmatprep.subr.bf16.mxu0 0
          %3508 = vmatpush1.bf16.msra.mxu0 0
          %3509 = vmatprep.subr.bf16.mxu0 0
          %3510 = vmatpush1.bf16.msra.mxu0 0
          %3511 = vmatprep.subr.bf16.mxu0 0
          %3512 = vmatpush1.bf16.msra.mxu0 0
          %3513 = vmatprep.subr.bf16.mxu0 0
          %3514 = vmatpush1.bf16.msra.mxu0 0
          %3515 = vmatprep.subr.bf16.mxu0 0
          %3516 = vmatpush1.bf16.msra.mxu0 0
          %3517 = vmatprep.subr.bf16.mxu0 0
          %3518 = vmatpush1.bf16.msra.mxu0 0
          %3519 = vmatprep.subr.bf16.mxu0 0
          %3520 = vmatpush1.bf16.msra.mxu0 0
          %3521 = vmatprep.mubr.bf16.mxu0 0
          %3522 = vmatmul.mubr.bf16.gmra.mrb[0].mxu0 %v3407
          %v3523 = vpop.f32.mrb[0].mxu0
          %v3524 = vadd.f32 0.0, %v3523
          %v3525 = vpop.f32.mrb[0].mxu0
          %v3526 = vadd.f32 0.0, %v3525
          %v3527 = vpop.f32.mrb[0].mxu0
          %v3528 = vadd.f32 0.0, %v3527
          %v3529 = vpop.f32.mrb[0].mxu0
          %v3530 = vadd.f32 0.0, %v3529
          %3531 = vmatprep.mubr.bf16.mxu0 0
          %3532 = vmatmul.mubr.bf16.gmra.mrb[0].mxu0 %v3408
          %v3533 = vpop.f32.mrb[0].mxu0
          %v3534 = vadd.f32 0.0, %v3533
          %v3535 = vpop.f32.mrb[0].mxu0
          %v3536 = vadd.f32 0.0, %v3535
          %v3537 = vpop.f32.mrb[0].mxu0
          %v3538 = vadd.f32 0.0, %v3537
          %v3539 = vpop.f32.mrb[0].mxu0
          %v3540 = vadd.f32 0.0, %v3539
          %3541 = vdwg.mxu0
          %v3542 = vld [vmem:[%s2] sm:$0xff]
          %v3543 = vld [vmem:[%s2 + $0x8] sm:$0xff]
          %v3544 = vld [vmem:[%s2 + $0x10] sm:$0xff]
          %v3545 = vld [vmem:[%s2 + $0x18] sm:$0xff]
          %v3546 = vmax.f32 %v3524, %v3526
          %3547 = vmax.xlane.f32.xlu0 %v3546
          %v3548 = vpop.xlane.xlu0 %3547
          %v3549 = vmax.f32 %v3528, %v3530
          %3550 = vmax.xlane.f32.xlu0 %v3549
          %v3551 = vpop.xlane.xlu0 %3550
          %v3552 = vmax.f32 %v3534, %v3536
          %3553 = vmax.xlane.f32.xlu0 %v3552
          %v3554 = vpop.xlane.xlu0 %3553
          %v3555 = vmax.f32 %v3538, %v3540
          %3556 = vmax.xlane.f32.xlu0 %v3555
          %v3557 = vpop.xlane.xlu0 %3556
          %v3558 = vsub.f32 %v3524, %v3548
          %v3559 = vsub.f32 %v3526, %v3548
          %v3560 = vsub.f32 %v3528, %v3551
          %v3561 = vsub.f32 %v3530, %v3551
          %v3562 = vsub.f32 %v3534, %v3554
          %v3563 = vsub.f32 %v3536, %v3554
          %v3564 = vsub.f32 %v3538, %v3557
          %v3565 = vsub.f32 %v3540, %v3557
          %v3566 = vmul.f32 %v3558, 1.442695
          %v3567 = vpow.pop %v3566
          %v3568 = vmul.f32 %v3559, 1.442695
          %v3569 = vpow.pop %v3568
          %v3570 = vmul.f32 %v3560, 1.442695
          %v3571 = vpow.pop %v3570
          %v3572 = vmul.f32 %v3561, 1.442695
          %v3573 = vpow.pop %v3572
          %v3574 = vmul.f32 %v3562, 1.442695
          %v3575 = vpow.pop %v3574
          %v3576 = vmul.f32 %v3563, 1.442695
          %v3577 = vpow.pop %v3576
          %v3578 = vmul.f32 %v3564, 1.442695
          %v3579 = vpow.pop %v3578
          %v3580 = vmul.f32 %v3565, 1.442695
          %v3581 = vpow.pop %v3580
          %v3582 = vadd.f32 %v3567, %v3569
          %3583 = vadd.xlane.f32.xlu0 %v3582
          %v3584 = vpop.xlane.xlu0 %3583
          %v3585 = vadd.f32 %v3571, %v3573
          %3586 = vadd.xlane.f32.xlu0 %v3585
          %v3587 = vpop.xlane.xlu0 %3586
          %v3588 = vadd.f32 %v3575, %v3577
          %3589 = vadd.xlane.f32.xlu0 %v3588
          %v3590 = vpop.xlane.xlu0 %3589
          %v3591 = vadd.f32 %v3579, %v3581
          %3592 = vadd.xlane.f32.xlu0 %v3591
          %v3593 = vpop.xlane.xlu0 %3592
          %v3594 = vlog2.pop %v3584
          %v3595 = vmul.f32 %v3594, 0.6931472
          %v3596 = vlog2.pop %v3587
          %v3597 = vmul.f32 %v3596, 0.6931472
          %v3598 = vlog2.pop %v3590
          %v3599 = vmul.f32 %v3598, 0.6931472
          %v3600 = vlog2.pop %v3593
          %v3601 = vmul.f32 %v3600, 0.6931472
          %v3602 = vadd.f32 %v3595, %v3548
          %v3603 = vadd.f32 %v3597, %v3551
          %v3604 = vadd.f32 %v3599, %v3554
          %v3605 = vadd.f32 %v3601, %v3557
          %v3606 = vlaneseq
          %v3607 = vand.u32 %v3606, 127
          %v3608 = vadd.s32 %v3607, 128
          %3609 = vset.pattern.permute.xlu0 0
          %3610 = vperm.xlu0 %3609, %v3542
          %v3611 = vpop.permute.xlu0 %3610
          %3612 = vset.pattern.permute.xlu0 0
          %3613 = vperm.xlu0 %3612, %v3543
          %v3614 = vpop.permute.xlu0 %3613
          %3615 = vset.pattern.permute.xlu0 0
          %3616 = vperm.xlu0 %3615, %v3544
          %v3617 = vpop.permute.xlu0 %3616
          %3618 = vset.pattern.permute.xlu0 0
          %3619 = vperm.xlu0 %3618, %v3545
          %v3620 = vpop.permute.xlu0 %3619
          %vm3621 = vcmp.eq.s32.totalorder %v3607, %v3611
          %vm3622 = vcmp.eq.s32.totalorder %v3608, %v3611
          %vm3623 = vcmp.eq.s32.totalorder %v3607, %v3614
          %vm3624 = vcmp.eq.s32.totalorder %v3608, %v3614
          %vm3625 = vcmp.eq.s32.totalorder %v3607, %v3617
          %vm3626 = vcmp.eq.s32.totalorder %v3608, %v3617
          %vm3627 = vcmp.eq.s32.totalorder %v3607, %v3620
          %vm3628 = vcmp.eq.s32.totalorder %v3608, %v3620
          %v3629 = vsel %vm3621, %v3524, 0.0
          %v3630 = vsel %vm3622, %v3526, 0.0
          %v3631 = vsel %vm3623, %v3528, 0.0
          %v3632 = vsel %vm3624, %v3530, 0.0
          %v3633 = vsel %vm3625, %v3534, 0.0
          %v3634 = vsel %vm3626, %v3536, 0.0
          %v3635 = vsel %vm3627, %v3538, 0.0
          %v3636 = vsel %vm3628, %v3540, 0.0
          %v3637 = vadd.f32 %v3629, %v3630
          %3638 = vadd.xlane.f32.xlu0 %v3637
          %v3639 = vpop.xlane.xlu0 %3638
          %v3640 = vadd.f32 %v3631, %v3632
          %3641 = vadd.xlane.f32.xlu0 %v3640
          %v3642 = vpop.xlane.xlu0 %3641
          %v3643 = vadd.f32 %v3633, %v3634
          %3644 = vadd.xlane.f32.xlu0 %v3643
          %v3645 = vpop.xlane.xlu0 %3644
          %v3646 = vadd.f32 %v3635, %v3636
          %3647 = vadd.xlane.f32.xlu0 %v3646
          %v3648 = vpop.xlane.xlu0 %3647
          %vm3649 = vcmp.ne.s32.totalorder %v3542, 4294967196
          %vm3650 = vcmp.ne.s32.totalorder %v3543, 4294967196
          %vm3651 = vcmp.ne.s32.totalorder %v3544, 4294967196
          %vm3652 = vcmp.ne.s32.totalorder %v3545, 4294967196
          %v3653 = vsel %vm3649, 1, 0
          %v3654 = vsel %vm3650, 1, 0
          %v3655 = vsel %vm3651, 1, 0
          %v3656 = vsel %vm3652, 1, 0
          %v3657 = vcvt.s32.f32 %v3653
          %v3658 = vcvt.s32.f32 %v3654
          %v3659 = vcvt.s32.f32 %v3655
          %v3660 = vcvt.s32.f32 %v3656
          %v3661 = vsub.f32 %v3602, %v3639
          %v3662 = vsub.f32 %v3603, %v3642
          %v3663 = vsub.f32 %v3604, %v3645
          %v3664 = vsub.f32 %v3605, %v3648
          %v3665 = vmul.f32 %v3661, %v3657
          %v3666 = vmul.f32 %v3662, %v3658
          %v3667 = vmul.f32 %v3663, %v3659
          %v3668 = vmul.f32 %v3664, %v3660
          %vm3669 = vcmask 7168
          %v3670 = vsel %vm3669, %v3665, 0.0
          %v3671 = vsel %vm3669, %v3666, 0.0
          %v3672 = vadd.f32 %v3670, %v3671
          %v3673 = vsel %vm3669, %v3667, 0.0
          %v3674 = vadd.f32 %v3672, %v3673
          %v3675 = vsel %vm3669, %v3668, 0.0
          %v3676 = vadd.f32 %v3674, %v3675
          %v3677 = vrot.slane %v3676, 4
          %v3678 = vadd.f32 %v3676, %v3677
          %v3679 = vrot.slane %v3678, 2
          %v3680 = vadd.f32 %v3678, %v3679
          %v3681 = vrot.slane %v3680, 1
          %v3682 = vadd.f32 %v3680, %v3681
          %v3683 = vsel %vm3669, %v3657, 0.0
          %v3684 = vsel %vm3669, %v3658, 0.0
          %v3685 = vadd.f32 %v3683, %v3684
          %v3686 = vsel %vm3669, %v3659, 0.0
          %v3687 = vadd.f32 %v3685, %v3686
          %v3688 = vsel %vm3669, %v3660, 0.0
          %v3689 = vadd.f32 %v3687, %v3688
          %v3690 = vrot.slane %v3689, 4
          %v3691 = vadd.f32 %v3689, %v3690
          %v3692 = vrot.slane %v3691, 2
          %v3693 = vadd.f32 %v3691, %v3692
          %v3694 = vrot.slane %v3693, 1
          %v3695 = vadd.f32 %v3693, %v3694
          %v3696 = vmax.f32 %v3695, 1.0
          %v3697 = vrcp.pop %v3696
          %v3698 = vmul.f32 %v3682, %v3697
          %vm3699 = vcmask 0
          %3700 = vst.msk [vmem:[#allocation13] sm:$0x1] %vm3699, %v3698
        $region108: #{llama_causal_lm_loss.1} parent=75 // pred_fallthru
          _
        // Predicated region
        $region109: #{llama_causal_lm_loss.1} parent=75 // pred_check
          %p3701 = pneg %p365
        $region110: #{llama_causal_lm_loss.1} parent=75 // pred_check_branch
          %3703 = sbr.rel (%p3701) target = $region112
        $region111: #{llama_causal_lm_loss.1} parent=75 // pred_region
          %s3705 = ssub.s32 16, 16
          %3706 = vsyncadd [#allocation6], %s3705
          %s3708 = sshll.u32 [#allocation13], 4
          %s3709 = int_to_ptr.vmem [resolvable:$true] %s3708
          %3711 = dma.vmem_to_hbm [thread:$0]  %s3709, 16, %s14, [#allocation6]
        $region112: #{llama_causal_lm_loss.1} parent=75 // pred_fallthru
          _
        // Predicated region
        $region113: #{llama_causal_lm_loss.1} parent=75 // pred_check
          %p3712 = pneg %p365
        $region114: #{llama_causal_lm_loss.1} parent=75 // pred_check_branch
          %3714 = sbr.rel (%p3712) target = $region116
        $region115: #{llama_causal_lm_loss.1} parent=75 // pred_region
          %3715 = dma.done [#allocation6], 16
        $region116: #{llama_causal_lm_loss.1} parent=75 // pred_fallthru
          _
      $region76: #{llama_causal_lm_loss.1} parent=5 // pred_fallthru
        _
      %p3716 = scmp.le.s32.totalorder 2, %s23
      // Predicated region
      $region117: #{llama_causal_lm_loss.1} parent=5 // pred_check
        %p3717 = pneg %p3716
      $region118: #{llama_causal_lm_loss.1} parent=5 // pred_check_branch
        %3719 = sbr.rel (%p3717) target = $region120
      $region119: #{llama_causal_lm_loss.1} parent=5 // pred_region
        %s3720 = ssub.s32 %s23, 2
      $region120: #{llama_causal_lm_loss.1} parent=5 // pred_fallthru
        _
    $region6: #{llama_causal_lm_loss.1} parent=1 // loop_footer
      %s27 = sadd.s32 1, %s23
    $region7: #{llama_causal_lm_loss.1} parent=1 // loop_footer_branch
      %22 = sbr.rel target = $region3
    $region8: #{llama_causal_lm_loss.1} parent=1 // loop_exit
      _
    %3721 = vsyncpa [#allocation5], 1
    %s3722 = scalar_lea.sflag [#allocation5], 1
    %3723 = vsyncpa %s3722, 1
    %3724 = vsyncpa [#allocation8], 1
    %3725 = vsyncpa [#allocation6], 1
    %s3726 = scalar_lea.sflag [#allocation6], 1
    %3727 = vsyncpa %s3726, 1

</llo_original>
